<compile_context>
chip_gen: v6e
topology: v6e:2x2x1
jax: 0.10.0
libtpu: 0.0.40
codegen_flags: <defaults>
</compile_context>

<pallas_src>
import math

import jax
import jax.numpy as jnp
from jax import lax
from jax.experimental import pallas as pl
from jax.experimental.pallas import tpu as pltpu


def _round_up(x, m):
    return ((x + m - 1) // m) * m


# ----------------------------------------------------------------------------- kernels

def make_kernel(h, F_pad, Nc_pad, TE, fuse_scatter):
    """Fused GCellUp forward. Grid = edge blocks (reduction axis)."""
    N2 = 2 * Nc_pad          # combined node rows: [cc dst nodes ; s2c dst nodes]
    TE2 = 2 * TE             # combined edge rows per block: [cc edges ; s2c edges]
    NB = Nc_pad // 8         # 8-row node blocks per edge type

    def stable_sigmoid(x):
        # EUP tanh form; numerically stable vs 1/(1+exp(-x)).
        return 0.5 * (jnp.tanh(0.5 * x) + 1.0)

    def kernel(gc_x_ref, cc_ex_ref, s2c_ex_ref, dst_lane_ref, dst_sub_ref,
               has_ref, inv_ref,
               W1cc_ref, b1cc_ref, W2cc_ref, b2cc_ref,
               W1s_ref, b1s_ref, W2s_ref, b2s_ref,
               Wx_ref, Wsmcc_ref, Wmmcc_ref, Wsms_ref, Wmms_ref, bout_ref,
               out_fc_ref,
               lin_acc, ext_acc):
        f32 = jnp.float32
        bf16 = jnp.bfloat16
        BIG = jnp.float32(1e30)
        e = pl.program_id(0)

        @pl.when(e == 0)
        def _init():
            lin_acc[...] = jnp.zeros((N2, F_pad), f32)
            ext_acc[...] = jnp.full((N2, F_pad), -jnp.inf, f32)

        def dense(x, W_ref, b_ref):
            # bf16 operands, f32 accumulation.
            return jnp.dot(x.astype(bf16), W_ref[...],
                           preferred_element_type=f32) + b_ref[...]

        def gated_messages(ex, W1_ref, b1_ref, W2_ref, b2_ref):
            # MLP(in, 2h, 4h+1); 2nd layer output = [f1,f2,-f3,f4 (F_pad) | gate x F_pad]
            # (gate column replicated on the host -> no N=1 matmul, no cross-lane bcast;
            #  f3 lanes pre-negated on the host so one max reduce yields max and -min).
            h1 = jnp.maximum(dense(ex, W1_ref, b1_ref), 0.0)       # (TE, 2h)
            m = dense(h1, W2_ref, b2_ref)                          # (TE, 2*F_pad)
            return m[:, :F_pad] * stable_sigmoid(m[:, F_pad:])     # (TE, F_pad), f32

        gated_cc = gated_messages(cc_ex_ref[...], W1cc_ref, b1cc_ref, W2cc_ref, b2cc_ref)
        gated_s = gated_messages(s2c_ex_ref[...], W1s_ref, b1s_ref, W2s_ref, b2s_ref)

        dst_lane = dst_lane_ref[0]                                 # (1, TE2) int32
        dst_sub = dst_sub_ref[...]                                 # (TE2, 1) int32

        # ---- segment sum / mean numerator: one-hot MXU matmul(s), f32 accumulation ----
        if fuse_scatter:
            # block-diagonal fusion (s2c dst indices pre-offset by Nc_pad on the host)
            gated_all = jnp.concatenate([gated_cc, gated_s], axis=0).astype(bf16)
            node_iota = lax.broadcasted_iota(jnp.int32, (N2, TE2), 0)
            A = (node_iota == dst_lane).astype(bf16)               # (N2, TE2), exact in bf16
            lin_acc[...] += jnp.dot(A, gated_all, preferred_element_type=f32)
        else:
            iota = lax.broadcasted_iota(jnp.int32, (Nc_pad, TE), 0)
            A_cc = (iota == dst_lane[:, :TE]).astype(bf16)
            A_s = ((iota + Nc_pad) == dst_lane[:, TE:]).astype(bf16)
            lin_acc[0:Nc_pad, :] += jnp.dot(A_cc, gated_cc.astype(bf16),
                                            preferred_element_type=f32)
            lin_acc[Nc_pad:N2, :] += jnp.dot(A_s, gated_s.astype(bf16),
                                             preferred_element_type=f32)

        # ---- segment extrema: fori_loop over node blocks, additive-masked max reduce ----
        def ext_update(gated, dst_col, row_base):
            # gated: (TE, F_pad) f32; dst_col: (TE, 1) int32; row_base: static int
            def body(nb, carry):
                base = pl.multiple_of(row_base + nb * 8, 8)
                rows = []
                for r in range(8):                                 # short bounded unroll
                    sel = (dst_col == (base + r)).astype(jnp.float32)   # (TE, 1)
                    cand = gated + (sel - 1.0) * BIG                    # (TE, F_pad)
                    rows.append(jnp.max(cand, axis=0, keepdims=True))   # (1, F_pad)
                blk = jnp.concatenate(rows, axis=0)                     # (8, F_pad)
                ext_acc[pl.ds(base, 8), :] = jnp.maximum(ext_acc[pl.ds(base, 8), :], blk)
                return carry
            lax.fori_loop(0, NB, body, 0)

        ext_update(gated_cc, dst_sub[0:TE, :], 0)
        ext_update(gated_s, dst_sub[TE:TE2, :], Nc_pad)

        @pl.when(e == pl.num_programs(0) - 1)
        def _finalize():
            lane = lax.broadcasted_iota(jnp.int32, (Nc_pad, F_pad), 1)
            mean_lane = (lane >= 3 * h) & (lane < 4 * h)

            def scaled_sum(rows0):
                inv = inv_ref[rows0:rows0 + Nc_pad, :]             # (Nc_pad, 1)
                return lin_acc[rows0:rows0 + Nc_pad, :] * jnp.where(mean_lane, inv, 1.0)

            def masked_ext(rows0):
                has = has_ref[rows0:rows0 + Nc_pad, :] > 0.5       # DGL zero-fill
                return jnp.where(has, ext_acc[rows0:rows0 + Nc_pad, :], 0.0)

            # out_fc: sum of lane-dense matmuls (reduce MLPs pre-fused with lin_gc on host)
            acc = jnp.dot(gc_x_ref[...], Wx_ref[...], preferred_element_type=f32)
            acc += jnp.dot(scaled_sum(0), Wsmcc_ref[...], preferred_element_type=f32)
            acc += jnp.dot(masked_ext(0), Wmmcc_ref[...], preferred_element_type=f32)
            acc += jnp.dot(scaled_sum(Nc_pad), Wsms_ref[...], preferred_element_type=f32)
            acc += jnp.dot(masked_ext(Nc_pad), Wmms_ref[...], preferred_element_type=f32)
            out_fc_ref[...] = acc + bout_ref[...]

    return kernel


def gs_head_kernel(x_ref, W_ref, b_ref, o_ref):
    # independent 'gs' head: out_fs = gs_x @ Wgs + bgs (lane-padded to 128)
    o_ref[...] = (jnp.dot(x_ref[...], W_ref[...], preferred_element_type=jnp.float32)
                  + b_ref[...])


# ----------------------------------------------------------------------------- wrapper

def gcellup_forward(params, nf_gc, nf_gs0, nf_gs1,
                    cc_src, cc_dst, s2c_src, s2c_dst, n_hid,
                    edge_block=512, fuse_scatter=None):
    f32 = jnp.float32
    bf16 = jnp.bfloat16
    h = n_hid
    F_pad = _round_up(4 * h, 128)          # packed f1..f4 slab, lane-padded
    OUT = _round_up(h, 128)                # lane-dense output width

    def hdot(a, b):                        # one-time host-side weight fusions, full precision
        return jnp.dot(a, b, precision=lax.Precision.HIGHEST)

    gc_x = nf_gc.astype(f32)
    gs_x = jnp.concatenate([nf_gs0, nf_gs1], axis=1).astype(f32)
    Nc, Ns = gc_x.shape[0], gs_x.shape[0]
    Nc_pad, Ns_pad = _round_up(Nc, 8), _round_up(Ns, 8)
    N2 = 2 * Nc_pad
    if fuse_scatter is None:
        fuse_scatter = Nc_pad <= 128       # block-diag matmul only while it fits one MXU tile

    # graph glue: per-edge concatenated [src, dst] features (DGL apply_edges inputs)
    # TODO(synk): for very large E, gather src/dst node rows in-kernel (scalar-prefetched
    # index blocks) instead of materializing (E, 2h)/(E, 3h) in HBM here.
    cc_ex = jnp.concatenate([gc_x[cc_src], gc_x[cc_dst]], axis=1)      # (Ecc, 2h)
    s2c_ex = jnp.concatenate([gs_x[s2c_src], gc_x[s2c_dst]], axis=1)   # (Es, 3h)
    Ecc, Es = cc_ex.shape[0], s2c_ex.shape[0]
    Emax = max(Ecc, Es)
    if Emax <= edge_block:
        TE = _round_up(Emax, 8)            # single block: full-extent dims are legal
        E_pad = TE
    else:
        TE = _round_up(edge_block, 128)    # tiled sublane dim, bf16-friendly
        E_pad = _round_up(Emax, TE)
    n_eblk = E_pad // TE
    TE2 = 2 * TE

    def pad2(x, rows, cols):
        return jnp.pad(x, ((0, rows - x.shape[0]), (0, cols - x.shape[1])))

    cc_ex_p = pad2(cc_ex, E_pad, 2 * h).astype(bf16)
    s2c_ex_p = pad2(s2c_ex, E_pad, 3 * h).astype(bf16)
    gc_x_p = pad2(gc_x, Nc_pad, h)
    gs_x_p = pad2(gs_x, Ns_pad, 2 * h)

    # dst indices; padded edge slots point past all node rows so they never match
    def pad_dst(dst, E, offset):
        d = dst.astype(jnp.int32) + offset
        return jnp.pad(d, (0, E_pad - E), constant_values=N2)

    cc_dst_p = pad_dst(cc_dst, Ecc, 0)
    s2c_dst_p = pad_dst(s2c_dst, Es, Nc_pad)           # s2c node rows live at +Nc_pad
    dst_lane = jnp.concatenate([cc_dst_p.reshape(n_eblk, TE),
                                s2c_dst_p.reshape(n_eblk, TE)], axis=1)   # (n_eblk, TE2)
    dst_lane3 = dst_lane.reshape(n_eblk, 1, TE2)       # lane-oriented (one-hot matmul)
    dst_sub = dst_lane.reshape(n_eblk * TE2, 1)        # sublane-oriented (extrema masks)

    # per-node degree info: has-in-edges flag and 1/deg, combined [cc ; s2c] node rows
    def deg_info(dst):
        deg = jnp.zeros((Nc_pad,), f32).at[dst].add(1.0)
        return (deg > 0).astype(f32)[:, None], (1.0 / jnp.maximum(deg, 1.0))[:, None]

    has_cc, inv_cc = deg_info(cc_dst)
    has_s, inv_s = deg_info(s2c_dst)
    has_comb = jnp.concatenate([has_cc, has_s], axis=0)        # (N2, 1)
    inv_comb = jnp.concatenate([inv_cc, inv_s], axis=0)        # (N2, 1)

    # ---- weight repacking (one-time, host side) ----
    def pad_cols(W, width):
        return jnp.pad(W, ((0, 0), (0, width - W.shape[1])))

    def build_msg2(Wb):
        # 2nd message layer output: [f1, f2, -f3, f4 (padded to F_pad) | gate logit x F_pad]
        # f3 columns pre-negated so a single running max yields max(f2*k) and -min(f3*k).
        W, b = Wb
        Wk, Wf = W[:, :1], W[:, 1:]
        bk, bf = b[:, :1], b[:, 1:]
        sign = jnp.ones((4 * h,), f32).at[2 * h:3 * h].set(-1.0)
        Wf, bf = Wf * sign, bf * sign
        W2 = jnp.concatenate([pad_cols(Wf, F_pad), jnp.tile(Wk, (1, F_pad))], axis=1)
        b2 = jnp.concatenate([pad_cols(bf, F_pad), jnp.tile(bk, (1, F_pad))], axis=1)
        return W2.astype(bf16), b2

    W1cc_w, b1cc = params["msg_cc_l1"]
    W2cc, b2cc = build_msg2(params["msg_cc_l2"])
    W1s_w, b1s = params["msg_s2c_l1"]
    W2s, b2s = build_msg2(params["msg_s2c_l2"])
    W1cc, W1s = W1cc_w.astype(bf16), W1s_w.astype(bf16)

    Wgc, bgc = params["lin_gc"]
    Wgc_p, bgc_p = pad_cols(Wgc, OUT), pad_cols(bgc, OUT)
    Wgs, bgs = params["lin_gs"]
    Wgs_p, bgs_p = pad_cols(Wgs, OUT), pad_cols(bgs, OUT)

    def row_blocks(W):   # reduce-MLP input order: [x, sum, max, min, mean]
        return [W[i * h:(i + 1) * h, :] for i in range(5)]

    Wrcc, brcc = params["reduce_cc"]
    Wrs, brs = params["reduce_s2c"]
    rcc, rs = row_blocks(Wrcc), row_blocks(Wrs)

    def sm_weight(blocks):   # sum lanes 0:h, mean lanes 3h:4h   (pre-fused with lin_gc)
        W = jnp.zeros((F_pad, OUT), f32)
        W = W.at[0:h, :].set(hdot(blocks[1], Wgc_p))
        W = W.at[3 * h:4 * h, :].set(hdot(blocks[4], Wgc_p))
        return W

    def mm_weight(blocks):   # max lanes h:2h; lanes 2h:3h hold -min -> negate weights
        W = jnp.zeros((F_pad, OUT), f32)
        W = W.at[h:2 * h, :].set(hdot(blocks[2], Wgc_p))
        W = W.at[2 * h:3 * h, :].set(-hdot(blocks[3], Wgc_p))
        return W

    Wx_f = hdot(rcc[0] + rs[0], Wgc_p)
    Wsm_cc, Wmm_cc = sm_weight(rcc), mm_weight(rcc)
    Wsm_s, Wmm_s = sm_weight(rs), mm_weight(rs)
    b_out = hdot(brcc + brs, Wgc_p) + bgc_p

    inputs = (gc_x_p, cc_ex_p, s2c_ex_p, dst_lane3, dst_sub, has_comb, inv_comb,
              W1cc, b1cc, W2cc, b2cc, W1s, b1s, W2s, b2s,
              Wx_f, Wsm_cc, Wmm_cc, Wsm_s, Wmm_s, b_out)

    def full(x):   # whole-array block, constant index map
        return pl.BlockSpec(x.shape, lambda e, nd=x.ndim: (0,) * nd)

    in_specs = [
        full(gc_x_p),
        pl.BlockSpec((TE, 2 * h), lambda e: (e, 0)),        # cc edge features, tiled along E
        pl.BlockSpec((TE, 3 * h), lambda e: (e, 0)),        # s2c edge features, tiled along E
        pl.BlockSpec((1, 1, TE2), lambda e: (e, 0, 0)),     # dst indices (lane-oriented)
        pl.BlockSpec((TE2, 1), lambda e: (e, 0)),           # dst indices (sublane-oriented)
        full(has_comb), full(inv_comb),
        full(W1cc), full(b1cc), full(W2cc), full(b2cc),
        full(W1s), full(b1s), full(W2s), full(b2s),
        full(Wx_f), full(Wsm_cc), full(Wmm_cc), full(Wsm_s), full(Wmm_s), full(b_out),
    ]
    out_specs = pl.BlockSpec((Nc_pad, OUT), lambda e: (0, 0))

    # VMEM budget: actual resident footprint + double-buffered streamed blocks + headroom,
    # clamped to the chip's capacity when it can be queried.
    def nbytes(x):
        return int(x.size) * x.dtype.itemsize

    streamed = 2 * (TE * 2 * h * 2 + TE * 3 * h * 2 + TE2 * 4 + TE2 * 4)
    resident = sum(nbytes(x) for x in inputs if x is not cc_ex_p and x is not s2c_ex_p
                   and x is not dst_lane3 and x is not dst_sub)
    scratch = 2 * N2 * F_pad * 4
    est = streamed + resident + scratch + Nc_pad * OUT * 4 + (8 << 20)
    vmem_limit = max(32 << 20, min(est, 64 << 20))
    try:
        cap = int(pltpu.get_tpu_info().vmem_capacity_bytes)
        vmem_limit = min(vmem_limit, max(32 << 20, cap - (8 << 20)))
    except Exception:
        pass

    # TODO(synk): add a leading "parallel" grid axis (node-row halves / edge types) so
    # v7x's 2 TensorCores are both used; the single edge axis here is a reduction.
    out_fc_p = pl.pallas_call(
        make_kernel(h, F_pad, Nc_pad, TE, fuse_scatter),
        out_shape=jax.ShapeDtypeStruct((Nc_pad, OUT), f32),
        grid_spec=pltpu.PrefetchScalarGridSpec(
            num_scalar_prefetch=0,
            grid=(n_eblk,),
            in_specs=in_specs,
            out_specs=out_specs,
            scratch_shapes=[pltpu.VMEM((N2, F_pad), f32),     # segment sum / mean numerator
                            pltpu.VMEM((N2, F_pad), f32)]),   # segment extrema (max, -min)
        compiler_params=pltpu.CompilerParams(
            dimension_semantics=("arbitrary",),
            vmem_limit_bytes=int(vmem_limit)),
    )(*inputs)

    # independent gs head as its own tiny Pallas call (keeps the main grid's VMEM lean)
    gs_in = (gs_x_p, Wgs_p, bgs_p)
    out_fs_p = pl.pallas_call(
        gs_head_kernel,
        out_shape=jax.ShapeDtypeStruct((Ns_pad, OUT), f32),
        grid=(1,),
        in_specs=[pl.BlockSpec(x.shape, lambda i: (0, 0)) for x in gs_in],
        out_specs=pl.BlockSpec((Ns_pad, OUT), lambda i: (0, 0)),
    )(*gs_in)

    return out_fc_p[:Nc, :h], out_fs_p[:Ns, :h]


# ----------------------------------------------------------------------------- reference (pure JAX)

def reference_forward(params, nf_gc, nf_gs0, nf_gs1,
                      cc_src, cc_dst, s2c_src, s2c_dst, n_hid):
    P = lax.Precision.HIGHEST
    h = n_hid
    gc_x = nf_gc
    gs_x = jnp.concatenate([nf_gs0, nf_gs1], axis=1)
    num_gc = gc_x.shape[0]

    def dense(x, Wb):
        W, b = Wb
        return jnp.dot(x, W, precision=P) + b

    def msgs(ex, l1, l2):
        h1 = jnp.maximum(dense(ex, l1), 0.0)
        m = dense(h1, l2)
        k = jax.nn.sigmoid(m[:, :1])
        return m[:, 1:] * k

    def agg(f, dst):
        deg = jax.ops.segment_sum(jnp.ones((f.shape[0],), jnp.float32), dst,
                                  num_segments=num_gc)[:, None]
        has = deg > 0
        s = jax.ops.segment_sum(f[:, 0:h], dst, num_segments=num_gc)
        mx = jnp.where(has, jax.ops.segment_max(f[:, h:2 * h], dst, num_segments=num_gc), 0.0)
        mn = jnp.where(has, jax.ops.segment_min(f[:, 2 * h:3 * h], dst, num_segments=num_gc), 0.0)
        me = jax.ops.segment_sum(f[:, 3 * h:4 * h], dst,
                                 num_segments=num_gc) / jnp.maximum(deg, 1.0)
        return s, mx, mn, me

    cc_ex = jnp.concatenate([gc_x[cc_src], gc_x[cc_dst]], axis=1)
    s1, m2, m3, m4 = agg(msgs(cc_ex, params["msg_cc_l1"], params["msg_cc_l2"]), cc_dst)
    new_ccx = dense(jnp.concatenate([gc_x, s1, m2, m3, m4], axis=1), params["reduce_cc"])

    s2c_ex = jnp.concatenate([gs_x[s2c_src], gc_x[s2c_dst]], axis=1)
    t1, t2, t3, t4 = agg(msgs(s2c_ex, params["msg_s2c_l1"], params["msg_s2c_l2"]), s2c_dst)
    new_cx = dense(jnp.concatenate([gc_x, t1, t2, t3, t4], axis=1), params["reduce_s2c"])

    out_fc = dense(new_ccx + new_cx, params["lin_gc"])
    out_fs = dense(gs_x, params["lin_gs"])
    return out_fc, out_fs


# ----------------------------------------------------------------------------- params

def init_linear(key, fan_in, fan_out):
    kW, kb = jax.random.split(key)
    bound = 1.0 / math.sqrt(fan_in)
    W = jax.random.uniform(kW, (fan_in, fan_out), jnp.float32, -bound, bound)
    b = jax.random.uniform(kb, (1, fan_out), jnp.float32, -bound, bound)
    return W, b


def init_params(key, n_hid):
    h = n_hid
    ks = jax.random.split(key, 8)
    return {
        # MLP(in, 2h, 4h+1) == Linear -> ReLU -> Linear  (MLP class not given in source; assumed)
        "msg_cc_l1": init_linear(ks[0], 2 * h, 2 * h),
        "msg_cc_l2": init_linear(ks[1], 2 * h, 4 * h + 1),
        "msg_s2c_l1": init_linear(ks[2], 3 * h, 2 * h),
        "msg_s2c_l2": init_linear(ks[3], 2 * h, 4 * h + 1),
        # MLP(5h, h) == single Linear
        "reduce_cc": init_linear(ks[4], 5 * h, h),
        "reduce_s2c": init_linear(ks[5], 5 * h, h),
        "lin_gc": init_linear(ks[6], h, h),
        "lin_gs": init_linear(ks[7], 2 * h, h),
    }


# ----------------------------------------------------------------------------- main

if __name__ == "__main__":
    n_hid = 32
    num_gc, num_gs = 12, 80      # exercises node-block loop, padding, and a 2-step edge grid

    key = jax.random.PRNGKey(0)
    k_feat, k_par = jax.random.split(key)
    kf = jax.random.split(k_feat, 3)
    nf_gc = jax.random.normal(kf[0], (num_gc, n_hid), jnp.float32)
    nf_gs0 = jax.random.normal(kf[1], (num_gs, n_hid), jnp.float32)
    nf_gs1 = jax.random.normal(kf[2], (num_gs, n_hid), jnp.float32)

    # deterministic hetero-graph: every 'gc' node has in-edges of both edge types
    cidx = jnp.arange(num_gc, dtype=jnp.int32)
    cc_src = jnp.concatenate([cidx, cidx])
    cc_dst = jnp.concatenate([(cidx + 1) % num_gc, (cidx + 3) % num_gc])
    sidx = jnp.arange(num_gs, dtype=jnp.int32)
    s2c_src = jnp.concatenate([sidx, sidx])
    s2c_dst = jnp.concatenate([sidx % num_gc, (sidx + 2) % num_gc])

    params = init_params(k_par, n_hid)

    ref_fc, ref_fs = reference_forward(params, nf_gc, nf_gs0, nf_gs1,
                                       cc_src, cc_dst, s2c_src, s2c_dst, n_hid)

    # fused block-diagonal scatter path (small node count)
    out_fc, out_fs = gcellup_forward(params, nf_gc, nf_gs0, nf_gs1,
                                     cc_src, cc_dst, s2c_src, s2c_dst, n_hid,
                                     edge_block=128)
    jax.block_until_ready((out_fc, out_fs))
    assert out_fc.shape == (num_gc, n_hid)
    assert out_fs.shape == (num_gs, n_hid)
    # bf16 streamed operands -> slightly looser tolerance than pure-f32
    assert jnp.allclose(out_fc, ref_fc, atol=4e-2, rtol=4e-2)
    assert jnp.allclose(out_fs, ref_fs, atol=4e-2, rtol=4e-2)

    # split-scatter path (large-Nc code path), checked too
    out_fc2, out_fs2 = gcellup_forward(params, nf_gc, nf_gs0, nf_gs1,
                                       cc_src, cc_dst, s2c_src, s2c_dst, n_hid,
                                       edge_block=128, fuse_scatter=False)
    jax.block_until_ready((out_fc2, out_fs2))
    assert jnp.allclose(out_fc2, ref_fc, atol=4e-2, rtol=4e-2)
    assert jnp.allclose(out_fs2, ref_fs, atol=4e-2, rtol=4e-2)

    print("KERNEL_OK")
</pallas_src>

<mosaic_0001>
module attributes {stable_mosaic.version = 11 : i64} {
  func.func @kernel(%arg0: i32, %arg1: memref<16x32xf32, #tpu.memory_space<vmem>>, %arg2: memref<128x64xbf16, #tpu.memory_space<vmem>>, %arg3: memref<128x96xbf16, #tpu.memory_space<vmem>>, %arg4: memref<1x1x256xi32, #tpu.memory_space<vmem>>, %arg5: memref<256x1xi32, #tpu.memory_space<vmem>>, %arg6: memref<32x1xf32, #tpu.memory_space<vmem>>, %arg7: memref<32x1xf32, #tpu.memory_space<vmem>>, %arg8: memref<64x64xbf16, #tpu.memory_space<vmem>>, %arg9: memref<1x64xf32, #tpu.memory_space<vmem>>, %arg10: memref<64x256xbf16, #tpu.memory_space<vmem>>, %arg11: memref<1x256xf32, #tpu.memory_space<vmem>>, %arg12: memref<96x64xbf16, #tpu.memory_space<vmem>>, %arg13: memref<1x64xf32, #tpu.memory_space<vmem>>, %arg14: memref<64x256xbf16, #tpu.memory_space<vmem>>, %arg15: memref<1x256xf32, #tpu.memory_space<vmem>>, %arg16: memref<32x128xf32, #tpu.memory_space<vmem>>, %arg17: memref<128x128xf32, #tpu.memory_space<vmem>>, %arg18: memref<128x128xf32, #tpu.memory_space<vmem>>, %arg19: memref<128x128xf32, #tpu.memory_space<vmem>>, %arg20: memref<128x128xf32, #tpu.memory_space<vmem>>, %arg21: memref<1x128xf32, #tpu.memory_space<vmem>>, %arg22: memref<16x128xf32, #tpu.memory_space<vmem>>, %arg23: memref<32x128xf32, #tpu.memory_space<vmem>>, %arg24: memref<32x128xf32, #tpu.memory_space<vmem>>) attributes {dimension_semantics = [#tpu.dimension_semantics<arbitrary>], iteration_bounds = array<i64: 2>, scalar_prefetch = 0 : i64, scratch_operands = 2 : i64, tpu.core_type = #tpu.core_type<tc>, window_params = [{pipeline_mode = #tpu.pipeline_mode<synchronous>, transform_indices = @transform_0, window_bounds = array<i64: 16, 32>}, {transform_indices = @transform_1, window_bounds = array<i64: 128, 64>}, {transform_indices = @transform_2, window_bounds = array<i64: 128, 96>}, {transform_indices = @transform_3, window_bounds = array<i64: 1, 1, 256>}, {transform_indices = @transform_4, window_bounds = array<i64: 256, 1>}, {pipeline_mode = #tpu.pipeline_mode<synchronous>, transform_indices = @transform_5, window_bounds = array<i64: 32, 1>}, {pipeline_mode = #tpu.pipeline_mode<synchronous>, transform_indices = @transform_6, window_bounds = array<i64: 32, 1>}, {pipeline_mode = #tpu.pipeline_mode<synchronous>, transform_indices = @transform_7, window_bounds = array<i64: 64, 64>}, {pipeline_mode = #tpu.pipeline_mode<synchronous>, transform_indices = @transform_8, window_bounds = array<i64: 1, 64>}, {pipeline_mode = #tpu.pipeline_mode<synchronous>, transform_indices = @transform_9, window_bounds = array<i64: 64, 256>}, {pipeline_mode = #tpu.pipeline_mode<synchronous>, transform_indices = @transform_10, window_bounds = array<i64: 1, 256>}, {pipeline_mode = #tpu.pipeline_mode<synchronous>, transform_indices = @transform_11, window_bounds = array<i64: 96, 64>}, {pipeline_mode = #tpu.pipeline_mode<synchronous>, transform_indices = @transform_12, window_bounds = array<i64: 1, 64>}, {pipeline_mode = #tpu.pipeline_mode<synchronous>, transform_indices = @transform_13, window_bounds = array<i64: 64, 256>}, {pipeline_mode = #tpu.pipeline_mode<synchronous>, transform_indices = @transform_14, window_bounds = array<i64: 1, 256>}, {pipeline_mode = #tpu.pipeline_mode<synchronous>, transform_indices = @transform_15, window_bounds = array<i64: 32, 128>}, {pipeline_mode = #tpu.pipeline_mode<synchronous>, transform_indices = @transform_16, window_bounds = array<i64: 128, 128>}, {pipeline_mode = #tpu.pipeline_mode<synchronous>, transform_indices = @transform_17, window_bounds = array<i64: 128, 128>}, {pipeline_mode = #tpu.pipeline_mode<synchronous>, transform_indices = @transform_18, window_bounds = array<i64: 128, 128>}, {pipeline_mode = #tpu.pipeline_mode<synchronous>, transform_indices = @transform_19, window_bounds = array<i64: 128, 128>}, {pipeline_mode = #tpu.pipeline_mode<synchronous>, transform_indices = @transform_20, window_bounds = array<i64: 1, 128>}, {pipeline_mode = #tpu.pipeline_mode<synchronous>, transform_indices = @transform_21, window_bounds = array<i64: 16, 128>}]} {
    %c0_i32 = arith.constant 0 : i32
    %0 = arith.cmpi eq, %arg0, %c0_i32 : i32
    %1 = arith.extui %0 : i1 to i32
    %c0_i32_0 = arith.constant 0 : i32
    %2 = arith.cmpi ne, %1, %c0_i32_0 : i32
    scf.if %2 {
      %cst_51 = arith.constant 0.000000e+00 : f32
      %73 = vector.broadcast %cst_51 : f32 to vector<32x128xf32>
      %c0_52 = arith.constant 0 : index
      %c0_53 = arith.constant 0 : index
      %74 = vector.load %arg23[%c0_52, %c0_53] : memref<32x128xf32, #tpu.memory_space<vmem>>, vector<32x128xf32>
      tpu.vector_store %arg23[%c0_52, %c0_53], %73 {strides = array<i32>} : memref<32x128xf32, #tpu.memory_space<vmem>>, vector<32x128xf32>,
      %cst_54 = arith.constant 0xFF800000 : f32
      %75 = vector.broadcast %cst_54 : f32 to vector<32x128xf32>
      %c0_55 = arith.constant 0 : index
      %c0_56 = arith.constant 0 : index
      %76 = vector.load %arg24[%c0_55, %c0_56] : memref<32x128xf32, #tpu.memory_space<vmem>>, vector<32x128xf32>
      tpu.vector_store %arg24[%c0_55, %c0_56], %75 {strides = array<i32>} : memref<32x128xf32, #tpu.memory_space<vmem>>, vector<32x128xf32>,
    } else {
    }
    %c0 = arith.constant 0 : index
    %c0_1 = arith.constant 0 : index
    %3 = vector.load %arg2[%c0, %c0_1] : memref<128x64xbf16, #tpu.memory_space<vmem>>, vector<128x64xbf16>
    %c0_2 = arith.constant 0 : index
    %c0_3 = arith.constant 0 : index
    %4 = vector.load %arg8[%c0_2, %c0_3] : memref<64x64xbf16, #tpu.memory_space<vmem>>, vector<64x64xbf16>
    %cst = arith.constant dense<0.000000e+00> : vector<128x64xf32>
    %5 = tpu.matmul %3, %4, %cst {dimension_numbers = #tpu.dot_dimension_numbers<[1], [0], [0], [1], [0, 0, 1, 1], [], []>} : vector<128x64xbf16>, vector<64x64xbf16>, vector<128x64xf32> -> vector<128x64xf32>
    %c0_4 = arith.constant 0 : index
    %c0_5 = arith.constant 0 : index
    %6 = vector.load %arg9[%c0_4, %c0_5] : memref<1x64xf32, #tpu.memory_space<vmem>>, vector<1x64xf32>
    %7 = vector.broadcast %6 : vector<1x64xf32> to vector<128x64xf32>
    %8 = arith.addf %5, %7 : vector<128x64xf32>
    %cst_6 = arith.constant 0.000000e+00 : f32
    %9 = vector.broadcast %cst_6 : f32 to vector<128x64xf32>
    %10 = arith.maximumf %8, %9 : vector<128x64xf32>
    %11 = arith.truncf %10 : vector<128x64xf32> to vector<128x64xbf16>
    %c0_7 = arith.constant 0 : index
    %c0_8 = arith.constant 0 : index
    %12 = vector.load %arg10[%c0_7, %c0_8] : memref<64x256xbf16, #tpu.memory_space<vmem>>, vector<64x256xbf16>
    %cst_9 = arith.constant dense<0.000000e+00> : vector<128x256xf32>
    %13 = tpu.matmul %11, %12, %cst_9 {dimension_numbers = #tpu.dot_dimension_numbers<[1], [0], [0], [1], [0, 0, 1, 1], [], []>} : vector<128x64xbf16>, vector<64x256xbf16>, vector<128x256xf32> -> vector<128x256xf32>
    %c0_10 = arith.constant 0 : index
    %c0_11 = arith.constant 0 : index
    %14 = vector.load %arg11[%c0_10, %c0_11] : memref<1x256xf32, #tpu.memory_space<vmem>>, vector<1x256xf32>
    %15 = vector.broadcast %14 : vector<1x256xf32> to vector<128x256xf32>
    %16 = arith.addf %13, %15 : vector<128x256xf32>
    %17 = vector.extract_strided_slice %16 {offsets = [0, 0], sizes = [128, 128], strides = [1, 1]} : vector<128x256xf32> to vector<128x128xf32>
    %18 = vector.extract_strided_slice %16 {offsets = [0, 128], sizes = [128, 128], strides = [1, 1]} : vector<128x256xf32> to vector<128x128xf32>
    %cst_12 = arith.constant 5.000000e-01 : f32
    %19 = vector.broadcast %cst_12 : f32 to vector<128x128xf32>
    %20 = arith.mulf %19, %18 : vector<128x128xf32>
    %21 = math.tanh %20 : vector<128x128xf32>
    %cst_13 = arith.constant 1.000000e+00 : f32
    %22 = vector.broadcast %cst_13 : f32 to vector<128x128xf32>
    %23 = arith.addf %21, %22 : vector<128x128xf32>
    %cst_14 = arith.constant 5.000000e-01 : f32
    %24 = vector.broadcast %cst_14 : f32 to vector<128x128xf32>
    %25 = arith.mulf %24, %23 : vector<128x128xf32>
    %26 = arith.mulf %17, %25 : vector<128x128xf32>
    %c0_15 = arith.constant 0 : index
    %c0_16 = arith.constant 0 : index
    %27 = vector.load %arg3[%c0_15, %c0_16] : memref<128x96xbf16, #tpu.memory_space<vmem>>, vector<128x96xbf16>
    %c0_17 = arith.constant 0 : index
    %c0_18 = arith.constant 0 : index
    %28 = vector.load %arg12[%c0_17, %c0_18] : memref<96x64xbf16, #tpu.memory_space<vmem>>, vector<96x64xbf16>
    %cst_19 = arith.constant dense<0.000000e+00> : vector<128x64xf32>
    %29 = tpu.matmul %27, %28, %cst_19 {dimension_numbers = #tpu.dot_dimension_numbers<[1], [0], [0], [1], [0, 0, 1, 1], [], []>} : vector<128x96xbf16>, vector<96x64xbf16>, vector<128x64xf32> -> vector<128x64xf32>
    %c0_20 = arith.constant 0 : index
    %c0_21 = arith.constant 0 : index
    %30 = vector.load %arg13[%c0_20, %c0_21] : memref<1x64xf32, #tpu.memory_space<vmem>>, vector<1x64xf32>
    %31 = vector.broadcast %30 : vector<1x64xf32> to vector<128x64xf32>
    %32 = arith.addf %29, %31 : vector<128x64xf32>
    %cst_22 = arith.constant 0.000000e+00 : f32
    %33 = vector.broadcast %cst_22 : f32 to vector<128x64xf32>
    %34 = arith.maximumf %32, %33 : vector<128x64xf32>
    %35 = arith.truncf %34 : vector<128x64xf32> to vector<128x64xbf16>
    %c0_23 = arith.constant 0 : index
    %c0_24 = arith.constant 0 : index
    %36 = vector.load %arg14[%c0_23, %c0_24] : memref<64x256xbf16, #tpu.memory_space<vmem>>, vector<64x256xbf16>
    %cst_25 = arith.constant dense<0.000000e+00> : vector<128x256xf32>
    %37 = tpu.matmul %35, %36, %cst_25 {dimension_numbers = #tpu.dot_dimension_numbers<[1], [0], [0], [1], [0, 0, 1, 1], [], []>} : vector<128x64xbf16>, vector<64x256xbf16>, vector<128x256xf32> -> vector<128x256xf32>
    %c0_26 = arith.constant 0 : index
    %c0_27 = arith.constant 0 : index
    %38 = vector.load %arg15[%c0_26, %c0_27] : memref<1x256xf32, #tpu.memory_space<vmem>>, vector<1x256xf32>
    %39 = vector.broadcast %38 : vector<1x256xf32> to vector<128x256xf32>
    %40 = arith.addf %37, %39 : vector<128x256xf32>
    %41 = vector.extract_strided_slice %40 {offsets = [0, 0], sizes = [128, 128], strides = [1, 1]} : vector<128x256xf32> to vector<128x128xf32>
    %42 = vector.extract_strided_slice %40 {offsets = [0, 128], sizes = [128, 128], strides = [1, 1]} : vector<128x256xf32> to vector<128x128xf32>
    %cst_28 = arith.constant 5.000000e-01 : f32
    %43 = vector.broadcast %cst_28 : f32 to vector<128x128xf32>
    %44 = arith.mulf %43, %42 : vector<128x128xf32>
    %45 = math.tanh %44 : vector<128x128xf32>
    %cst_29 = arith.constant 1.000000e+00 : f32
    %46 = vector.broadcast %cst_29 : f32 to vector<128x128xf32>
    %47 = arith.addf %45, %46 : vector<128x128xf32>
    %cst_30 = arith.constant 5.000000e-01 : f32
    %48 = vector.broadcast %cst_30 : f32 to vector<128x128xf32>
    %49 = arith.mulf %48, %47 : vector<128x128xf32>
    %50 = arith.mulf %41, %49 : vector<128x128xf32>
    %c0_31 = arith.constant 0 : index
    %c0_32 = arith.constant 0 : index
    %c0_33 = arith.constant 0 : index
    %51 = vector.load %arg4[%c0_31, %c0_32, %c0_33] : memref<1x1x256xi32, #tpu.memory_space<vmem>>, vector<1x1x256xi32>
    %52 = vector.shape_cast %51 : vector<1x1x256xi32> to vector<1x256xi32>
    %c0_34 = arith.constant 0 : index
    %c0_35 = arith.constant 0 : index
    %53 = vector.load %arg5[%c0_34, %c0_35] : memref<256x1xi32, #tpu.memory_space<vmem>>, vector<256x1xi32>
    %54 = tpu.concatenate %26, %50 in 0 : vector<128x128xf32>, vector<128x128xf32> -> vector<256x128xf32>
    %55 = arith.truncf %54 : vector<256x128xf32> to vector<256x128xbf16>
    %56 = tpu.iota {dimensions = array<i32: 0>} : vector<32x256xi32>
    %57 = vector.broadcast %52 : vector<1x256xi32> to vector<32x256xi32>
    %58 = arith.cmpi eq, %56, %57 : vector<32x256xi32>
    %59 = arith.extui %58 : vector<32x256xi1> to vector<32x256xi32>
    %60 = arith.sitofp %59 : vector<32x256xi32> to vector<32x256xf32>
    %61 = arith.truncf %60 : vector<32x256xf32> to vector<32x256xbf16>
    %c0_36 = arith.constant 0 : index
    %c0_37 = arith.constant 0 : index
    %62 = vector.load %arg23[%c0_36, %c0_37] : memref<32x128xf32, #tpu.memory_space<vmem>>, vector<32x128xf32>
    %cst_38 = arith.constant dense<0.000000e+00> : vector<32x128xf32>
    %63 = tpu.matmul %61, %55, %cst_38 {dimension_numbers = #tpu.dot_dimension_numbers<[1], [0], [0], [1], [0, 0, 1, 1], [], []>} : vector<32x256xbf16>, vector<256x128xbf16>, vector<32x128xf32> -> vector<32x128xf32>
    %64 = arith.addf %62, %63 : vector<32x128xf32>
    %c0_39 = arith.constant 0 : index
    %c0_40 = arith.constant 0 : index
    %65 = vector.load %arg23[%c0_39, %c0_40] : memref<32x128xf32, #tpu.memory_space<vmem>>, vector<32x128xf32>
    tpu.vector_store %arg23[%c0_39, %c0_40], %64 {strides = array<i32>} : memref<32x128xf32, #tpu.memory_space<vmem>>, vector<32x128xf32>,
    %66 = vector.extract_strided_slice %53 {offsets = [0, 0], sizes = [128, 1], strides = [1, 1]} : vector<256x1xi32> to vector<128x1xi32>
    %cst_41 = arith.constant 1.000000e+30 : f32
    %c0_i32_42 = arith.constant 0 : i32
    %c2_i32 = arith.constant 2 : i32
    %67 = arith.addi %c0_i32_42, %c2_i32 : i32
    %c1_i32 = arith.constant 1 : i32
    scf.for %arg25 = %c0_i32_42 to %67 step %c1_i32  : i32 {
      %c8_i32 = arith.constant 8 : i32
      %73 = arith.muli %arg25, %c8_i32 : i32
      %c0_i32_51 = arith.constant 0 : i32
      %74 = arith.addi %c0_i32_51, %73 : i32
      %75 = tpu.assume_multiple %74, 8 : i32
      %c0_i32_52 = arith.constant 0 : i32
      %76 = arith.addi %75, %c0_i32_52 : i32
      %77 = vector.broadcast %76 : i32 to vector<128x1xi32>
      %78 = arith.cmpi eq, %66, %77 : vector<128x1xi32>
      %79 = arith.extui %78 : vector<128x1xi1> to vector<128x1xi32>
      %80 = arith.sitofp %79 : vector<128x1xi32> to vector<128x1xf32>
      %cst_53 = arith.constant 1.000000e+00 : f32
      %81 = vector.broadcast %cst_53 : f32 to vector<128x1xf32>
      %82 = arith.subf %80, %81 : vector<128x1xf32>
      %83 = vector.broadcast %cst_41 : f32 to vector<128x1xf32>
      %84 = arith.mulf %82, %83 : vector<128x1xf32>
      %85 = vector.broadcast %84 : vector<128x1xf32> to vector<128x128xf32>
      %86 = arith.addf %26, %85 : vector<128x128xf32>
      %cst_54 = arith.constant dense<0xFF800000> : vector<128xf32>
      %87 = vector.multi_reduction <maximumf>, %86, %cst_54 [0] : vector<128x128xf32> to vector<128xf32>
      %88 = vector.shape_cast %87 : vector<128xf32> to vector<1x128xf32>
      %c1_i32_55 = arith.constant 1 : i32
      %89 = arith.addi %75, %c1_i32_55 : i32
      %90 = vector.broadcast %89 : i32 to vector<128x1xi32>
      %91 = arith.cmpi eq, %66, %90 : vector<128x1xi32>
      %92 = arith.extui %91 : vector<128x1xi1> to vector<128x1xi32>
      %93 = arith.sitofp %92 : vector<128x1xi32> to vector<128x1xf32>
      %cst_56 = arith.constant 1.000000e+00 : f32
      %94 = vector.broadcast %cst_56 : f32 to vector<128x1xf32>
      %95 = arith.subf %93, %94 : vector<128x1xf32>
      %96 = vector.broadcast %cst_41 : f32 to vector<128x1xf32>
      %97 = arith.mulf %95, %96 : vector<128x1xf32>
      %98 = vector.broadcast %97 : vector<128x1xf32> to vector<128x128xf32>
      %99 = arith.addf %26, %98 : vector<128x128xf32>
      %cst_57 = arith.constant dense<0xFF800000> : vector<128xf32>
      %100 = vector.multi_reduction <maximumf>, %99, %cst_57 [0] : vector<128x128xf32> to vector<128xf32>
      %101 = vector.shape_cast %100 : vector<128xf32> to vector<1x128xf32>
      %c2_i32_58 = arith.constant 2 : i32
      %102 = arith.addi %75, %c2_i32_58 : i32
      %103 = vector.broadcast %102 : i32 to vector<128x1xi32>
      %104 = arith.cmpi eq, %66, %103 : vector<128x1xi32>
      %105 = arith.extui %104 : vector<128x1xi1> to vector<128x1xi32>
      %106 = arith.sitofp %105 : vector<128x1xi32> to vector<128x1xf32>
      %cst_59 = arith.constant 1.000000e+00 : f32
      %107 = vector.broadcast %cst_59 : f32 to vector<128x1xf32>
      %108 = arith.subf %106, %107 : vector<128x1xf32>
      %109 = vector.broadcast %cst_41 : f32 to vector<128x1xf32>
      %110 = arith.mulf %108, %109 : vector<128x1xf32>
      %111 = vector.broadcast %110 : vector<128x1xf32> to vector<128x128xf32>
      %112 = arith.addf %26, %111 : vector<128x128xf32>
      %cst_60 = arith.constant dense<0xFF800000> : vector<128xf32>
      %113 = vector.multi_reduction <maximumf>, %112, %cst_60 [0] : vector<128x128xf32> to vector<128xf32>
      %114 = vector.shape_cast %113 : vector<128xf32> to vector<1x128xf32>
      %c3_i32 = arith.constant 3 : i32
      %115 = arith.addi %75, %c3_i32 : i32
      %116 = vector.broadcast %115 : i32 to vector<128x1xi32>
      %117 = arith.cmpi eq, %66, %116 : vector<128x1xi32>
      %118 = arith.extui %117 : vector<128x1xi1> to vector<128x1xi32>
      %119 = arith.sitofp %118 : vector<128x1xi32> to vector<128x1xf32>
      %cst_61 = arith.constant 1.000000e+00 : f32
      %120 = vector.broadcast %cst_61 : f32 to vector<128x1xf32>
      %121 = arith.subf %119, %120 : vector<128x1xf32>
      %122 = vector.broadcast %cst_41 : f32 to vector<128x1xf32>
      %123 = arith.mulf %121, %122 : vector<128x1xf32>
      %124 = vector.broadcast %123 : vector<128x1xf32> to vector<128x128xf32>
      %125 = arith.addf %26, %124 : vector<128x128xf32>
      %cst_62 = arith.constant dense<0xFF800000> : vector<128xf32>
      %126 = vector.multi_reduction <maximumf>, %125, %cst_62 [0] : vector<128x128xf32> to vector<128xf32>
      %127 = vector.shape_cast %126 : vector<128xf32> to vector<1x128xf32>
      %c4_i32 = arith.constant 4 : i32
      %128 = arith.addi %75, %c4_i32 : i32
      %129 = vector.broadcast %128 : i32 to vector<128x1xi32>
      %130 = arith.cmpi eq, %66, %129 : vector<128x1xi32>
      %131 = arith.extui %130 : vector<128x1xi1> to vector<128x1xi32>
      %132 = arith.sitofp %131 : vector<128x1xi32> to vector<128x1xf32>
      %cst_63 = arith.constant 1.000000e+00 : f32
      %133 = vector.broadcast %cst_63 : f32 to vector<128x1xf32>
      %134 = arith.subf %132, %133 : vector<128x1xf32>
      %135 = vector.broadcast %cst_41 : f32 to vector<128x1xf32>
      %136 = arith.mulf %134, %135 : vector<128x1xf32>
      %137 = vector.broadcast %136 : vector<128x1xf32> to vector<128x128xf32>
      %138 = arith.addf %26, %137 : vector<128x128xf32>
      %cst_64 = arith.constant dense<0xFF800000> : vector<128xf32>
      %139 = vector.multi_reduction <maximumf>, %138, %cst_64 [0] : vector<128x128xf32> to vector<128xf32>
      %140 = vector.shape_cast %139 : vector<128xf32> to vector<1x128xf32>
      %c5_i32 = arith.constant 5 : i32
      %141 = arith.addi %75, %c5_i32 : i32
      %142 = vector.broadcast %141 : i32 to vector<128x1xi32>
      %143 = arith.cmpi eq, %66, %142 : vector<128x1xi32>
      %144 = arith.extui %143 : vector<128x1xi1> to vector<128x1xi32>
      %145 = arith.sitofp %144 : vector<128x1xi32> to vector<128x1xf32>
      %cst_65 = arith.constant 1.000000e+00 : f32
      %146 = vector.broadcast %cst_65 : f32 to vector<128x1xf32>
      %147 = arith.subf %145, %146 : vector<128x1xf32>
      %148 = vector.broadcast %cst_41 : f32 to vector<128x1xf32>
      %149 = arith.mulf %147, %148 : vector<128x1xf32>
      %150 = vector.broadcast %149 : vector<128x1xf32> to vector<128x128xf32>
      %151 = arith.addf %26, %150 : vector<128x128xf32>
      %cst_66 = arith.constant dense<0xFF800000> : vector<128xf32>
      %152 = vector.multi_reduction <maximumf>, %151, %cst_66 [0] : vector<128x128xf32> to vector<128xf32>
      %153 = vector.shape_cast %152 : vector<128xf32> to vector<1x128xf32>
      %c6_i32 = arith.constant 6 : i32
      %154 = arith.addi %75, %c6_i32 : i32
      %155 = vector.broadcast %154 : i32 to vector<128x1xi32>
      %156 = arith.cmpi eq, %66, %155 : vector<128x1xi32>
      %157 = arith.extui %156 : vector<128x1xi1> to vector<128x1xi32>
      %158 = arith.sitofp %157 : vector<128x1xi32> to vector<128x1xf32>
      %cst_67 = arith.constant 1.000000e+00 : f32
      %159 = vector.broadcast %cst_67 : f32 to vector<128x1xf32>
      %160 = arith.subf %158, %159 : vector<128x1xf32>
      %161 = vector.broadcast %cst_41 : f32 to vector<128x1xf32>
      %162 = arith.mulf %160, %161 : vector<128x1xf32>
      %163 = vector.broadcast %162 : vector<128x1xf32> to vector<128x128xf32>
      %164 = arith.addf %26, %163 : vector<128x128xf32>
      %cst_68 = arith.constant dense<0xFF800000> : vector<128xf32>
      %165 = vector.multi_reduction <maximumf>, %164, %cst_68 [0] : vector<128x128xf32> to vector<128xf32>
      %166 = vector.shape_cast %165 : vector<128xf32> to vector<1x128xf32>
      %c7_i32 = arith.constant 7 : i32
      %167 = arith.addi %75, %c7_i32 : i32
      %168 = vector.broadcast %167 : i32 to vector<128x1xi32>
      %169 = arith.cmpi eq, %66, %168 : vector<128x1xi32>
      %170 = arith.extui %169 : vector<128x1xi1> to vector<128x1xi32>
      %171 = arith.sitofp %170 : vector<128x1xi32> to vector<128x1xf32>
      %cst_69 = arith.constant 1.000000e+00 : f32
      %172 = vector.broadcast %cst_69 : f32 to vector<128x1xf32>
      %173 = arith.subf %171, %172 : vector<128x1xf32>
      %174 = vector.broadcast %cst_41 : f32 to vector<128x1xf32>
      %175 = arith.mulf %173, %174 : vector<128x1xf32>
      %176 = vector.broadcast %175 : vector<128x1xf32> to vector<128x128xf32>
      %177 = arith.addf %26, %176 : vector<128x128xf32>
      %cst_70 = arith.constant dense<0xFF800000> : vector<128xf32>
      %178 = vector.multi_reduction <maximumf>, %177, %cst_70 [0] : vector<128x128xf32> to vector<128xf32>
      %179 = vector.shape_cast %178 : vector<128xf32> to vector<1x128xf32>
      %180 = tpu.concatenate %88, %101, %114, %127, %140, %153, %166, %179 in 0 : vector<1x128xf32>, vector<1x128xf32>, vector<1x128xf32>, vector<1x128xf32>, vector<1x128xf32>, vector<1x128xf32>, vector<1x128xf32>, vector<1x128xf32> -> vector<8x128xf32>
      %181 = arith.index_cast %75 : i32 to index
      %c0_71 = arith.constant 0 : index
      %182 = vector.load %arg24[%181, %c0_71] : memref<32x128xf32, #tpu.memory_space<vmem>>, vector<8x128xf32>
      %183 = arith.maximumf %182, %180 : vector<8x128xf32>
      %184 = arith.index_cast %75 : i32 to index
      %c0_72 = arith.constant 0 : index
      %185 = vector.load %arg24[%184, %c0_72] : memref<32x128xf32, #tpu.memory_space<vmem>>, vector<8x128xf32>
      tpu.vector_store %arg24[%184, %c0_72], %183 {strides = array<i32>} : memref<32x128xf32, #tpu.memory_space<vmem>>, vector<8x128xf32>,
    }
    %c2_i32_43 = arith.constant 2 : i32
    %68 = vector.extract_strided_slice %53 {offsets = [128, 0], sizes = [128, 1], strides = [1, 1]} : vector<256x1xi32> to vector<128x1xi32>
    %cst_44 = arith.constant 1.000000e+30 : f32
    %c0_i32_45 = arith.constant 0 : i32
    %c2_i32_46 = arith.constant 2 : i32
    %69 = arith.addi %c0_i32_45, %c2_i32_46 : i32
    %c1_i32_47 = arith.constant 1 : i32
    scf.for %arg25 = %c0_i32_45 to %69 step %c1_i32_47  : i32 {
      %c8_i32 = arith.constant 8 : i32
      %73 = arith.muli %arg25, %c8_i32 : i32
      %c16_i32 = arith.constant 16 : i32
      %74 = arith.addi %c16_i32, %73 : i32
      %75 = tpu.assume_multiple %74, 8 : i32
      %c0_i32_51 = arith.constant 0 : i32
      %76 = arith.addi %75, %c0_i32_51 : i32
      %77 = vector.broadcast %76 : i32 to vector<128x1xi32>
      %78 = arith.cmpi eq, %68, %77 : vector<128x1xi32>
      %79 = arith.extui %78 : vector<128x1xi1> to vector<128x1xi32>
      %80 = arith.sitofp %79 : vector<128x1xi32> to vector<128x1xf32>
      %cst_52 = arith.constant 1.000000e+00 : f32
      %81 = vector.broadcast %cst_52 : f32 to vector<128x1xf32>
      %82 = arith.subf %80, %81 : vector<128x1xf32>
      %83 = vector.broadcast %cst_44 : f32 to vector<128x1xf32>
      %84 = arith.mulf %82, %83 : vector<128x1xf32>
      %85 = vector.broadcast %84 : vector<128x1xf32> to vector<128x128xf32>
      %86 = arith.addf %50, %85 : vector<128x128xf32>
      %cst_53 = arith.constant dense<0xFF800000> : vector<128xf32>
      %87 = vector.multi_reduction <maximumf>, %86, %cst_53 [0] : vector<128x128xf32> to vector<128xf32>
      %88 = vector.shape_cast %87 : vector<128xf32> to vector<1x128xf32>
      %c1_i32_54 = arith.constant 1 : i32
      %89 = arith.addi %75, %c1_i32_54 : i32
      %90 = vector.broadcast %89 : i32 to vector<128x1xi32>
      %91 = arith.cmpi eq, %68, %90 : vector<128x1xi32>
      %92 = arith.extui %91 : vector<128x1xi1> to vector<128x1xi32>
      %93 = arith.sitofp %92 : vector<128x1xi32> to vector<128x1xf32>
      %cst_55 = arith.constant 1.000000e+00 : f32
      %94 = vector.broadcast %cst_55 : f32 to vector<128x1xf32>
      %95 = arith.subf %93, %94 : vector<128x1xf32>
      %96 = vector.broadcast %cst_44 : f32 to vector<128x1xf32>
      %97 = arith.mulf %95, %96 : vector<128x1xf32>
      %98 = vector.broadcast %97 : vector<128x1xf32> to vector<128x128xf32>
      %99 = arith.addf %50, %98 : vector<128x128xf32>
      %cst_56 = arith.constant dense<0xFF800000> : vector<128xf32>
      %100 = vector.multi_reduction <maximumf>, %99, %cst_56 [0] : vector<128x128xf32> to vector<128xf32>
      %101 = vector.shape_cast %100 : vector<128xf32> to vector<1x128xf32>
      %c2_i32_57 = arith.constant 2 : i32
      %102 = arith.addi %75, %c2_i32_57 : i32
      %103 = vector.broadcast %102 : i32 to vector<128x1xi32>
      %104 = arith.cmpi eq, %68, %103 : vector<128x1xi32>
      %105 = arith.extui %104 : vector<128x1xi1> to vector<128x1xi32>
      %106 = arith.sitofp %105 : vector<128x1xi32> to vector<128x1xf32>
      %cst_58 = arith.constant 1.000000e+00 : f32
      %107 = vector.broadcast %cst_58 : f32 to vector<128x1xf32>
      %108 = arith.subf %106, %107 : vector<128x1xf32>
      %109 = vector.broadcast %cst_44 : f32 to vector<128x1xf32>
      %110 = arith.mulf %108, %109 : vector<128x1xf32>
      %111 = vector.broadcast %110 : vector<128x1xf32> to vector<128x128xf32>
      %112 = arith.addf %50, %111 : vector<128x128xf32>
      %cst_59 = arith.constant dense<0xFF800000> : vector<128xf32>
      %113 = vector.multi_reduction <maximumf>, %112, %cst_59 [0] : vector<128x128xf32> to vector<128xf32>
      %114 = vector.shape_cast %113 : vector<128xf32> to vector<1x128xf32>
      %c3_i32 = arith.constant 3 : i32
      %115 = arith.addi %75, %c3_i32 : i32
      %116 = vector.broadcast %115 : i32 to vector<128x1xi32>
      %117 = arith.cmpi eq, %68, %116 : vector<128x1xi32>
      %118 = arith.extui %117 : vector<128x1xi1> to vector<128x1xi32>
      %119 = arith.sitofp %118 : vector<128x1xi32> to vector<128x1xf32>
      %cst_60 = arith.constant 1.000000e+00 : f32
      %120 = vector.broadcast %cst_60 : f32 to vector<128x1xf32>
      %121 = arith.subf %119, %120 : vector<128x1xf32>
      %122 = vector.broadcast %cst_44 : f32 to vector<128x1xf32>
      %123 = arith.mulf %121, %122 : vector<128x1xf32>
      %124 = vector.broadcast %123 : vector<128x1xf32> to vector<128x128xf32>
      %125 = arith.addf %50, %124 : vector<128x128xf32>
      %cst_61 = arith.constant dense<0xFF800000> : vector<128xf32>
      %126 = vector.multi_reduction <maximumf>, %125, %cst_61 [0] : vector<128x128xf32> to vector<128xf32>
      %127 = vector.shape_cast %126 : vector<128xf32> to vector<1x128xf32>
      %c4_i32 = arith.constant 4 : i32
      %128 = arith.addi %75, %c4_i32 : i32
      %129 = vector.broadcast %128 : i32 to vector<128x1xi32>
      %130 = arith.cmpi eq, %68, %129 : vector<128x1xi32>
      %131 = arith.extui %130 : vector<128x1xi1> to vector<128x1xi32>
      %132 = arith.sitofp %131 : vector<128x1xi32> to vector<128x1xf32>
      %cst_62 = arith.constant 1.000000e+00 : f32
      %133 = vector.broadcast %cst_62 : f32 to vector<128x1xf32>
      %134 = arith.subf %132, %133 : vector<128x1xf32>
      %135 = vector.broadcast %cst_44 : f32 to vector<128x1xf32>
      %136 = arith.mulf %134, %135 : vector<128x1xf32>
      %137 = vector.broadcast %136 : vector<128x1xf32> to vector<128x128xf32>
      %138 = arith.addf %50, %137 : vector<128x128xf32>
      %cst_63 = arith.constant dense<0xFF800000> : vector<128xf32>
      %139 = vector.multi_reduction <maximumf>, %138, %cst_63 [0] : vector<128x128xf32> to vector<128xf32>
      %140 = vector.shape_cast %139 : vector<128xf32> to vector<1x128xf32>
      %c5_i32 = arith.constant 5 : i32
      %141 = arith.addi %75, %c5_i32 : i32
      %142 = vector.broadcast %141 : i32 to vector<128x1xi32>
      %143 = arith.cmpi eq, %68, %142 : vector<128x1xi32>
      %144 = arith.extui %143 : vector<128x1xi1> to vector<128x1xi32>
      %145 = arith.sitofp %144 : vector<128x1xi32> to vector<128x1xf32>
      %cst_64 = arith.constant 1.000000e+00 : f32
      %146 = vector.broadcast %cst_64 : f32 to vector<128x1xf32>
      %147 = arith.subf %145, %146 : vector<128x1xf32>
      %148 = vector.broadcast %cst_44 : f32 to vector<128x1xf32>
      %149 = arith.mulf %147, %148 : vector<128x1xf32>
      %150 = vector.broadcast %149 : vector<128x1xf32> to vector<128x128xf32>
      %151 = arith.addf %50, %150 : vector<128x128xf32>
      %cst_65 = arith.constant dense<0xFF800000> : vector<128xf32>
      %152 = vector.multi_reduction <maximumf>, %151, %cst_65 [0] : vector<128x128xf32> to vector<128xf32>
      %153 = vector.shape_cast %152 : vector<128xf32> to vector<1x128xf32>
      %c6_i32 = arith.constant 6 : i32
      %154 = arith.addi %75, %c6_i32 : i32
      %155 = vector.broadcast %154 : i32 to vector<128x1xi32>
      %156 = arith.cmpi eq, %68, %155 : vector<128x1xi32>
      %157 = arith.extui %156 : vector<128x1xi1> to vector<128x1xi32>
      %158 = arith.sitofp %157 : vector<128x1xi32> to vector<128x1xf32>
      %cst_66 = arith.constant 1.000000e+00 : f32
      %159 = vector.broadcast %cst_66 : f32 to vector<128x1xf32>
      %160 = arith.subf %158, %159 : vector<128x1xf32>
      %161 = vector.broadcast %cst_44 : f32 to vector<128x1xf32>
      %162 = arith.mulf %160, %161 : vector<128x1xf32>
      %163 = vector.broadcast %162 : vector<128x1xf32> to vector<128x128xf32>
      %164 = arith.addf %50, %163 : vector<128x128xf32>
      %cst_67 = arith.constant dense<0xFF800000> : vector<128xf32>
      %165 = vector.multi_reduction <maximumf>, %164, %cst_67 [0] : vector<128x128xf32> to vector<128xf32>
      %166 = vector.shape_cast %165 : vector<128xf32> to vector<1x128xf32>
      %c7_i32 = arith.constant 7 : i32
      %167 = arith.addi %75, %c7_i32 : i32
      %168 = vector.broadcast %167 : i32 to vector<128x1xi32>
      %169 = arith.cmpi eq, %68, %168 : vector<128x1xi32>
      %170 = arith.extui %169 : vector<128x1xi1> to vector<128x1xi32>
      %171 = arith.sitofp %170 : vector<128x1xi32> to vector<128x1xf32>
      %cst_68 = arith.constant 1.000000e+00 : f32
      %172 = vector.broadcast %cst_68 : f32 to vector<128x1xf32>
      %173 = arith.subf %171, %172 : vector<128x1xf32>
      %174 = vector.broadcast %cst_44 : f32 to vector<128x1xf32>
      %175 = arith.mulf %173, %174 : vector<128x1xf32>
      %176 = vector.broadcast %175 : vector<128x1xf32> to vector<128x128xf32>
      %177 = arith.addf %50, %176 : vector<128x128xf32>
      %cst_69 = arith.constant dense<0xFF800000> : vector<128xf32>
      %178 = vector.multi_reduction <maximumf>, %177, %cst_69 [0] : vector<128x128xf32> to vector<128xf32>
      %179 = vector.shape_cast %178 : vector<128xf32> to vector<1x128xf32>
      %180 = tpu.concatenate %88, %101, %114, %127, %140, %153, %166, %179 in 0 : vector<1x128xf32>, vector<1x128xf32>, vector<1x128xf32>, vector<1x128xf32>, vector<1x128xf32>, vector<1x128xf32>, vector<1x128xf32>, vector<1x128xf32> -> vector<8x128xf32>
      %181 = arith.index_cast %75 : i32 to index
      %c0_70 = arith.constant 0 : index
      %182 = vector.load %arg24[%181, %c0_70] : memref<32x128xf32, #tpu.memory_space<vmem>>, vector<8x128xf32>
      %183 = arith.maximumf %182, %180 : vector<8x128xf32>
      %184 = arith.index_cast %75 : i32 to index
      %c0_71 = arith.constant 0 : index
      %185 = vector.load %arg24[%184, %c0_71] : memref<32x128xf32, #tpu.memory_space<vmem>>, vector<8x128xf32>
      tpu.vector_store %arg24[%184, %c0_71], %183 {strides = array<i32>} : memref<32x128xf32, #tpu.memory_space<vmem>>, vector<8x128xf32>,
    }
    %c2_i32_48 = arith.constant 2 : i32
    %c1_i32_49 = arith.constant 1 : i32
    %70 = arith.cmpi eq, %arg0, %c1_i32_49 : i32
    %71 = arith.extui %70 : i1 to i32
    %c0_i32_50 = arith.constant 0 : i32
    %72 = arith.cmpi ne, %71, %c0_i32_50 : i32
    scf.if %72 {
      %73 = tpu.iota {dimensions = array<i32: 1>} : vector<16x128xi32>
      %c96_i32 = arith.constant 96 : i32
      %74 = vector.broadcast %c96_i32 : i32 to vector<16x128xi32>
      %75 = arith.cmpi sge, %73, %74 : vector<16x128xi32>
      %c128_i32 = arith.constant 128 : i32
      %76 = vector.broadcast %c128_i32 : i32 to vector<16x128xi32>
      %77 = arith.cmpi slt, %73, %76 : vector<16x128xi32>
      %78 = arith.andi %75, %77 : vector<16x128xi1>
      %c0_51 = arith.constant 0 : index
      %c0_52 = arith.constant 0 : index
      %79 = vector.load %arg1[%c0_51, %c0_52] : memref<16x32xf32, #tpu.memory_space<vmem>>, vector<16x32xf32>
      %c0_53 = arith.constant 0 : index
      %c0_54 = arith.constant 0 : index
      %80 = vector.load %arg16[%c0_53, %c0_54] : memref<32x128xf32, #tpu.memory_space<vmem>>, vector<32x128xf32>
      %cst_55 = arith.constant dense<0.000000e+00> : vector<16x128xf32>
      %81 = tpu.matmul %79, %80, %cst_55 {dimension_numbers = #tpu.dot_dimension_numbers<[1], [0], [0], [1], [0, 0, 1, 1], [], []>} : vector<16x32xf32>, vector<32x128xf32>, vector<16x128xf32> -> vector<16x128xf32>
      %c0_56 = arith.constant 0 : index
      %c0_57 = arith.constant 0 : index
      %82 = vector.load %arg7[%c0_56, %c0_57] : memref<32x1xf32, #tpu.memory_space<vmem>>, vector<16x1xf32>
      %c0_58 = arith.constant 0 : index
      %c0_59 = arith.constant 0 : index
      %83 = vector.load %arg23[%c0_58, %c0_59] : memref<32x128xf32, #tpu.memory_space<vmem>>, vector<16x128xf32>
      %cst_60 = arith.constant 1.000000e+00 : f32
      %84 = vector.shape_cast %82 : vector<16x1xf32> to vector<16x1xf32>
      %85 = vector.broadcast %84 : vector<16x1xf32> to vector<16x128xf32>
      %86 = vector.broadcast %cst_60 : f32 to vector<16x128xf32>
      %87 = arith.select %78, %85, %86 : vector<16x128xi1>, vector<16x128xf32>
      %88 = arith.mulf %83, %87 : vector<16x128xf32>
      %c0_61 = arith.constant 0 : index
      %c0_62 = arith.constant 0 : index
      %89 = vector.load %arg17[%c0_61, %c0_62] : memref<128x128xf32, #tpu.memory_space<vmem>>, vector<128x128xf32>
      %cst_63 = arith.constant dense<0.000000e+00> : vector<16x128xf32>
      %90 = tpu.matmul %88, %89, %cst_63 {dimension_numbers = #tpu.dot_dimension_numbers<[1], [0], [0], [1], [0, 0, 1, 1], [], []>} : vector<16x128xf32>, vector<128x128xf32>, vector<16x128xf32> -> vector<16x128xf32>
      %91 = arith.addf %81, %90 : vector<16x128xf32>
      %c0_64 = arith.constant 0 : index
      %c0_65 = arith.constant 0 : index
      %92 = vector.load %arg6[%c0_64, %c0_65] : memref<32x1xf32, #tpu.memory_space<vmem>>, vector<16x1xf32>
      %cst_66 = arith.constant 5.000000e-01 : f32
      %93 = vector.broadcast %cst_66 : f32 to vector<16x1xf32>
      %94 = arith.cmpf ogt, %92, %93 : vector<16x1xf32>
      %c0_67 = arith.constant 0 : index
      %c0_68 = arith.constant 0 : index
      %95 = vector.load %arg24[%c0_67, %c0_68] : memref<32x128xf32, #tpu.memory_space<vmem>>, vector<16x128xf32>
      %cst_69 = arith.constant 0.000000e+00 : f32
      %96 = vector.shape_cast %94 : vector<16x1xi1> to vector<16x1xi1>
      %97 = vector.broadcast %96 : vector<16x1xi1> to vector<16x128xi1>
      %98 = vector.broadcast %cst_69 : f32 to vector<16x128xf32>
      %99 = arith.select %97, %95, %98 : vector<16x128xi1>, vector<16x128xf32>
      %c0_70 = arith.constant 0 : index
      %c0_71 = arith.constant 0 : index
      %100 = vector.load %arg18[%c0_70, %c0_71] : memref<128x128xf32, #tpu.memory_space<vmem>>, vector<128x128xf32>
      %cst_72 = arith.constant dense<0.000000e+00> : vector<16x128xf32>
      %101 = tpu.matmul %99, %100, %cst_72 {dimension_numbers = #tpu.dot_dimension_numbers<[1], [0], [0], [1], [0, 0, 1, 1], [], []>} : vector<16x128xf32>, vector<128x128xf32>, vector<16x128xf32> -> vector<16x128xf32>
      %102 = arith.addf %91, %101 : vector<16x128xf32>
      %c16 = arith.constant 16 : index
      %c0_73 = arith.constant 0 : index
      %103 = vector.load %arg7[%c16, %c0_73] : memref<32x1xf32, #tpu.memory_space<vmem>>, vector<16x1xf32>
      %c16_74 = arith.constant 16 : index
      %c0_75 = arith.constant 0 : index
      %104 = vector.load %arg23[%c16_74, %c0_75] : memref<32x128xf32, #tpu.memory_space<vmem>>, vector<16x128xf32>
      %cst_76 = arith.constant 1.000000e+00 : f32
      %105 = vector.shape_cast %103 : vector<16x1xf32> to vector<16x1xf32>
      %106 = vector.broadcast %105 : vector<16x1xf32> to vector<16x128xf32>
      %107 = vector.broadcast %cst_76 : f32 to vector<16x128xf32>
      %108 = arith.select %78, %106, %107 : vector<16x128xi1>, vector<16x128xf32>
      %109 = arith.mulf %104, %108 : vector<16x128xf32>
      %c0_77 = arith.constant 0 : index
      %c0_78 = arith.constant 0 : index
      %110 = vector.load %arg19[%c0_77, %c0_78] : memref<128x128xf32, #tpu.memory_space<vmem>>, vector<128x128xf32>
      %cst_79 = arith.constant dense<0.000000e+00> : vector<16x128xf32>
      %111 = tpu.matmul %109, %110, %cst_79 {dimension_numbers = #tpu.dot_dimension_numbers<[1], [0], [0], [1], [0, 0, 1, 1], [], []>} : vector<16x128xf32>, vector<128x128xf32>, vector<16x128xf32> -> vector<16x128xf32>
      %112 = arith.addf %102, %111 : vector<16x128xf32>
      %c16_80 = arith.constant 16 : index
      %c0_81 = arith.constant 0 : index
      %113 = vector.load %arg6[%c16_80, %c0_81] : memref<32x1xf32, #tpu.memory_space<vmem>>, vector<16x1xf32>
      %cst_82 = arith.constant 5.000000e-01 : f32
      %114 = vector.broadcast %cst_82 : f32 to vector<16x1xf32>
      %115 = arith.cmpf ogt, %113, %114 : vector<16x1xf32>
      %c16_83 = arith.constant 16 : index
      %c0_84 = arith.constant 0 : index
      %116 = vector.load %arg24[%c16_83, %c0_84] : memref<32x128xf32, #tpu.memory_space<vmem>>, vector<16x128xf32>
      %cst_85 = arith.constant 0.000000e+00 : f32
      %117 = vector.shape_cast %115 : vector<16x1xi1> to vector<16x1xi1>
      %118 = vector.broadcast %117 : vector<16x1xi1> to vector<16x128xi1>
      %119 = vector.broadcast %cst_85 : f32 to vector<16x128xf32>
      %120 = arith.select %118, %116, %119 : vector<16x128xi1>, vector<16x128xf32>
      %c0_86 = arith.constant 0 : index
      %c0_87 = arith.constant 0 : index
      %121 = vector.load %arg20[%c0_86, %c0_87] : memref<128x128xf32, #tpu.memory_space<vmem>>, vector<128x128xf32>
      %cst_88 = arith.constant dense<0.000000e+00> : vector<16x128xf32>
      %122 = tpu.matmul %120, %121, %cst_88 {dimension_numbers = #tpu.dot_dimension_numbers<[1], [0], [0], [1], [0, 0, 1, 1], [], []>} : vector<16x128xf32>, vector<128x128xf32>, vector<16x128xf32> -> vector<16x128xf32>
      %123 = arith.addf %112, %122 : vector<16x128xf32>
      %c0_89 = arith.constant 0 : index
      %c0_90 = arith.constant 0 : index
      %124 = vector.load %arg21[%c0_89, %c0_90] : memref<1x128xf32, #tpu.memory_space<vmem>>, vector<1x128xf32>
      %125 = vector.broadcast %124 : vector<1x128xf32> to vector<16x128xf32>
      %126 = arith.addf %123, %125 : vector<16x128xf32>
      %c0_91 = arith.constant 0 : index
      %c0_92 = arith.constant 0 : index
      %127 = vector.load %arg22[%c0_91, %c0_92] : memref<16x128xf32, #tpu.memory_space<vmem>>, vector<16x128xf32>
      tpu.vector_store %arg22[%c0_91, %c0_92], %126 {strides = array<i32>} : memref<16x128xf32, #tpu.memory_space<vmem>>, vector<16x128xf32>,
    } else {
    }
    return
  }
  func.func @transform_0(%arg0: i32) -> (i32, i32) {
    %c0_i32 = arith.constant 0 : i32
    %c0_i32_0 = arith.constant 0 : i32
    %c0_i32_1 = arith.constant 0 : i32
    return %c0_i32, %c0_i32_0 : i32, i32
  }
  func.func @transform_1(%arg0: i32) -> (i32, i32) {
    %c0_i32 = arith.constant 0 : i32
    %c0_i32_0 = arith.constant 0 : i32
    return %arg0, %c0_i32 : i32, i32
  }
  func.func @transform_2(%arg0: i32) -> (i32, i32) {
    %c0_i32 = arith.constant 0 : i32
    %c0_i32_0 = arith.constant 0 : i32
    return %arg0, %c0_i32 : i32, i32
  }
  func.func @transform_3(%arg0: i32) -> (i32, i32, i32) {
    %c0_i32 = arith.constant 0 : i32
    %c0_i32_0 = arith.constant 0 : i32
    %c0_i32_1 = arith.constant 0 : i32
    return %arg0, %c0_i32, %c0_i32_0 : i32, i32, i32
  }
  func.func @transform_4(%arg0: i32) -> (i32, i32) {
    %c0_i32 = arith.constant 0 : i32
    %c0_i32_0 = arith.constant 0 : i32
    return %arg0, %c0_i32 : i32, i32
  }
  func.func @transform_5(%arg0: i32) -> (i32, i32) {
    %c0_i32 = arith.constant 0 : i32
    %c0_i32_0 = arith.constant 0 : i32
    %c0_i32_1 = arith.constant 0 : i32
    return %c0_i32, %c0_i32_0 : i32, i32
  }
  func.func @transform_6(%arg0: i32) -> (i32, i32) {
    %c0_i32 = arith.constant 0 : i32
    %c0_i32_0 = arith.constant 0 : i32
    %c0_i32_1 = arith.constant 0 : i32
    return %c0_i32, %c0_i32_0 : i32, i32
  }
  func.func @transform_7(%arg0: i32) -> (i32, i32) {
    %c0_i32 = arith.constant 0 : i32
    %c0_i32_0 = arith.constant 0 : i32
    %c0_i32_1 = arith.constant 0 : i32
    return %c0_i32, %c0_i32_0 : i32, i32
  }
  func.func @transform_8(%arg0: i32) -> (i32, i32) {
    %c0_i32 = arith.constant 0 : i32
    %c0_i32_0 = arith.constant 0 : i32
    %c0_i32_1 = arith.constant 0 : i32
    return %c0_i32, %c0_i32_0 : i32, i32
  }
  func.func @transform_9(%arg0: i32) -> (i32, i32) {
    %c0_i32 = arith.constant 0 : i32
    %c0_i32_0 = arith.constant 0 : i32
    %c0_i32_1 = arith.constant 0 : i32
    return %c0_i32, %c0_i32_0 : i32, i32
  }
  func.func @transform_10(%arg0: i32) -> (i32, i32) {
    %c0_i32 = arith.constant 0 : i32
    %c0_i32_0 = arith.constant 0 : i32
    %c0_i32_1 = arith.constant 0 : i32
    return %c0_i32, %c0_i32_0 : i32, i32
  }
  func.func @transform_11(%arg0: i32) -> (i32, i32) {
    %c0_i32 = arith.constant 0 : i32
    %c0_i32_0 = arith.constant 0 : i32
    %c0_i32_1 = arith.constant 0 : i32
    return %c0_i32, %c0_i32_0 : i32, i32
  }
  func.func @transform_12(%arg0: i32) -> (i32, i32) {
    %c0_i32 = arith.constant 0 : i32
    %c0_i32_0 = arith.constant 0 : i32
    %c0_i32_1 = arith.constant 0 : i32
    return %c0_i32, %c0_i32_0 : i32, i32
  }
  func.func @transform_13(%arg0: i32) -> (i32, i32) {
    %c0_i32 = arith.constant 0 : i32
    %c0_i32_0 = arith.constant 0 : i32
    %c0_i32_1 = arith.constant 0 : i32
    return %c0_i32, %c0_i32_0 : i32, i32
  }
  func.func @transform_14(%arg0: i32) -> (i32, i32) {
    %c0_i32 = arith.constant 0 : i32
    %c0_i32_0 = arith.constant 0 : i32
    %c0_i32_1 = arith.constant 0 : i32
    return %c0_i32, %c0_i32_0 : i32, i32
  }
  func.func @transform_15(%arg0: i32) -> (i32, i32) {
    %c0_i32 = arith.constant 0 : i32
    %c0_i32_0 = arith.constant 0 : i32
    %c0_i32_1 = arith.constant 0 : i32
    return %c0_i32, %c0_i32_0 : i32, i32
  }
  func.func @transform_16(%arg0: i32) -> (i32, i32) {
    %c0_i32 = arith.constant 0 : i32
    %c0_i32_0 = arith.constant 0 : i32
    %c0_i32_1 = arith.constant 0 : i32
    return %c0_i32, %c0_i32_0 : i32, i32
  }
  func.func @transform_17(%arg0: i32) -> (i32, i32) {
    %c0_i32 = arith.constant 0 : i32
    %c0_i32_0 = arith.constant 0 : i32
    %c0_i32_1 = arith.constant 0 : i32
    return %c0_i32, %c0_i32_0 : i32, i32
  }
  func.func @transform_18(%arg0: i32) -> (i32, i32) {
    %c0_i32 = arith.constant 0 : i32
    %c0_i32_0 = arith.constant 0 : i32
    %c0_i32_1 = arith.constant 0 : i32
    return %c0_i32, %c0_i32_0 : i32, i32
  }
  func.func @transform_19(%arg0: i32) -> (i32, i32) {
    %c0_i32 = arith.constant 0 : i32
    %c0_i32_0 = arith.constant 0 : i32
    %c0_i32_1 = arith.constant 0 : i32
    return %c0_i32, %c0_i32_0 : i32, i32
  }
  func.func @transform_20(%arg0: i32) -> (i32, i32) {
    %c0_i32 = arith.constant 0 : i32
    %c0_i32_0 = arith.constant 0 : i32
    %c0_i32_1 = arith.constant 0 : i32
    return %c0_i32, %c0_i32_0 : i32, i32
  }
  func.func @transform_21(%arg0: i32) -> (i32, i32) {
    %c0_i32 = arith.constant 0 : i32
    %c0_i32_0 = arith.constant 0 : i32
    %c0_i32_1 = arith.constant 0 : i32
    return %c0_i32, %c0_i32_0 : i32, i32
  }
}

</mosaic_0001>

<llo_original>
// kernel: tpu_custom_call.1
$region0: #{tpu_custom_call.1}
  #allocation0 [shape = 'u32[]', space=smem, size = 0x4, offset = 0x4, fixed_abs, tag = 'smem constant byte address 0x4 - core index']
  #allocation1 [shape = 'u32[144,128]{1,0:T(1,128)}', space=vmem, size = 0x12000, scoped, tag = 'internal scratch']
  #allocation2 [shape = 'f32[32,128]{1,0:T(8,128)}', space=vmem, size = 0x4000, scoped, tag = 'scratch operand']
  #allocation3 [shape = 'f32[32,128]{1,0:T(8,128)}', space=vmem, size = 0x4000, scoped, tag = 'scratch operand']
  %s0 = inlined_call_operand.vmem [shape: f32[16,32], index: 0, kind: input, shape index: {}]
  %s1 = inlined_call_operand.vmem [shape: bf16[256,64], index: 1, kind: input, shape index: {}]
  %s2 = inlined_call_operand.vmem [shape: bf16[256,96], index: 2, kind: input, shape index: {}]
  %s3 = inlined_call_operand.vmem [shape: s32[2,1,256], index: 3, kind: input, shape index: {}]
  %s4 = inlined_call_operand.vmem [shape: s32[512,1], index: 4, kind: input, shape index: {}]
  %s5 = inlined_call_operand.vmem [shape: f32[32,1], index: 5, kind: input, shape index: {}]
  %s6 = inlined_call_operand.vmem [shape: f32[32,1], index: 6, kind: input, shape index: {}]
  %s7 = inlined_call_operand.vmem [shape: bf16[64,64], index: 7, kind: input, shape index: {}]
  %s8 = inlined_call_operand.vmem [shape: f32[1,64], index: 8, kind: input, shape index: {}]
  %s9 = inlined_call_operand.vmem [shape: bf16[64,256], index: 9, kind: input, shape index: {}]
  %s10 = inlined_call_operand.vmem [shape: f32[1,256], index: 10, kind: input, shape index: {}]
  %s11 = inlined_call_operand.vmem [shape: bf16[96,64], index: 11, kind: input, shape index: {}]
  %s12 = inlined_call_operand.vmem [shape: f32[1,64], index: 12, kind: input, shape index: {}]
  %s13 = inlined_call_operand.vmem [shape: bf16[64,256], index: 13, kind: input, shape index: {}]
  %s14 = inlined_call_operand.vmem [shape: f32[1,256], index: 14, kind: input, shape index: {}]
  %s15 = inlined_call_operand.vmem [shape: f32[32,128], index: 15, kind: input, shape index: {}]
  %s16 = inlined_call_operand.vmem [shape: f32[128,128], index: 16, kind: input, shape index: {}]
  %s17 = inlined_call_operand.vmem [shape: f32[128,128], index: 17, kind: input, shape index: {}]
  %s18 = inlined_call_operand.vmem [shape: f32[128,128], index: 18, kind: input, shape index: {}]
  %s19 = inlined_call_operand.vmem [shape: f32[128,128], index: 19, kind: input, shape index: {}]
  %s20 = inlined_call_operand.vmem [shape: f32[1,128], index: 20, kind: input, shape index: {}]
  %s21 = inlined_call_operand.hbm [shape: f32[16,128], index: 21, kind: output, shape index: {}]
  %s22 = sld [smem:[#allocation0]]
  $region139: #{tpu_custom_call.1} parent=0
    _
  %s24 = ssub.s32 1, %s22
  %s25 = scalar_select 0, %s24, %s22
  $region1: #{tpu_custom_call.1} parent=0
    #allocation4 [shape = 'u8[8192]{0}', space=vmem, size = 0x2000, scoped, tag = 'output window, operand 0, single buffered']
    #allocation5 [shape = 's32[2]{0}', space=sflag, size = 0x8, scoped, tag = 'scoped memory for tpu_custom_call.1']
    %26 = vsyncpa [#allocation5], 0
    loop: start=0, step=1, limit=4
    $region2: #{tpu_custom_call.1} parent=1 // loop_pre_header
      _
    $region3: #{tpu_custom_call.1} parent=1 // loop_header
      %s28 = sphi 0, %s32
      %p29 = scmp.ge.s32.totalorder %s28, 4
      %s36 = sphi 0, %s36
      %s38 = sphi 0, %s36
      %s39 = sphi 0, %s38
      %s53 = sphi 0, %s39
      %s59 = sphi 0, %s61
      %s62 = sphi 0, %s59
      %s63 = sphi 0, %s62
      %s79 = sphi 0, %s63
      %s85 = sphi 0, %s87
      %s88 = sphi 0, %s85
      %s89 = sphi 0, %s88
      %s105 = sphi 0, %s89
      %s111 = sphi 0, %s113
      %s114 = sphi 0, %s111
      %s115 = sphi 0, %s114
      %s131 = sphi 0, %s115
      %s137 = sphi 0, %s139
      %s140 = sphi 0, %s137
      %s141 = sphi 0, %s140
      %s157 = sphi 0, %s141
      %s161 = sphi 0, %s161
      %s163 = sphi 0, %s161
      %s164 = sphi 0, %s163
      %s178 = sphi 0, %s164
      %s182 = sphi 0, %s182
      %s184 = sphi 0, %s182
      %s185 = sphi 0, %s184
      %s199 = sphi 0, %s185
      %s203 = sphi 0, %s203
      %s205 = sphi 0, %s203
      %s206 = sphi 0, %s205
      %s220 = sphi 0, %s206
      %s224 = sphi 0, %s224
      %s226 = sphi 0, %s224
      %s227 = sphi 0, %s226
      %s241 = sphi 0, %s227
      %s245 = sphi 0, %s245
      %s247 = sphi 0, %s245
      %s248 = sphi 0, %s247
      %s262 = sphi 0, %s248
      %s266 = sphi 0, %s266
      %s268 = sphi 0, %s266
      %s269 = sphi 0, %s268
      %s283 = sphi 0, %s269
      %s287 = sphi 0, %s287
      %s289 = sphi 0, %s287
      %s290 = sphi 0, %s289
      %s304 = sphi 0, %s290
      %s308 = sphi 0, %s308
      %s310 = sphi 0, %s308
      %s311 = sphi 0, %s310
      %s325 = sphi 0, %s311
      %s329 = sphi 0, %s329
      %s331 = sphi 0, %s329
      %s332 = sphi 0, %s331
      %s346 = sphi 0, %s332
      %s350 = sphi 0, %s350
      %s352 = sphi 0, %s350
      %s353 = sphi 0, %s352
      %s367 = sphi 0, %s353
      %s371 = sphi 0, %s371
      %s373 = sphi 0, %s371
      %s374 = sphi 0, %s373
      %s388 = sphi 0, %s374
      %s392 = sphi 0, %s392
      %s394 = sphi 0, %s392
      %s395 = sphi 0, %s394
      %s409 = sphi 0, %s395
      %s413 = sphi 0, %s413
      %s415 = sphi 0, %s413
      %s416 = sphi 0, %s415
      %s430 = sphi 0, %s416
      %s434 = sphi 0, %s434
      %s436 = sphi 0, %s434
      %s437 = sphi 0, %s436
      %s451 = sphi 0, %s437
      %s455 = sphi 0, %s455
      %s457 = sphi 0, %s455
      %s458 = sphi 0, %s457
      %s472 = sphi 0, %s458
      %s476 = sphi 0, %s476
      %s478 = sphi 0, %s476
      %s479 = sphi 0, %s478
      %s493 = sphi 0, %s479
      %s497 = sphi 0, %s497
      %s499 = sphi 0, %s497
      %s500 = sphi 0, %s499
      %s514 = sphi 0, %s500
    $region4: #{tpu_custom_call.1} parent=1 // loop_header_branch
      %31 = sbr.rel (%p29) target = $region8
    $region5: #{tpu_custom_call.1} parent=1 // loop_body
      %s33 = ssub.s32 %s28, 1
      %s34 = ssub.s32 %s28, 2
      %s35 = sadd.s32 %s28, 1
      %s37 = sadd.s32 %s36, 1
      %p40 = scmp.eq.s32.totalorder %s28, 1
      %p41 = scmp.ne.s32.totalorder %s36, %s38
      %p42 = scmp.eq.s32.totalorder %s28, 0
      %p43 = por %p41, %p42
      %p44 = scmp.ne.s32.totalorder %s36, %s38
      %p45 = scmp.eq.s32.totalorder %s33, 1
      %p46 = por %p44, %p45
      %p47 = scmp.ne.s32.totalorder %s38, %s39
      %p48 = scmp.eq.s32.totalorder %s33, 0
      %p49 = por %p47, %p48
      %p50 = scmp.ne.s32.totalorder %s38, %s39
      %p51 = scmp.eq.s32.totalorder %s34, 1
      %p52 = por %p50, %p51
      %p54 = scmp.ne.s32.totalorder %s39, %s53
      %p55 = scmp.eq.s32.totalorder %s34, 0
      %p56 = por %p54, %p55
      %s57 = ssub.s32 %s28, %s35
      %p58 = scmp.eq.s32.totalorder %s57, 0
      %s60 = sadd.s32 %s59, 1
      %s61 = scalar_select %p58, %s59, %s60
      %p64 = pneg %p58
      %p65 = scmp.eq.s32.totalorder %s28, 1
      %p66 = por %p64, %p65
      %p67 = scmp.ne.s32.totalorder %s59, %s62
      %p68 = scmp.eq.s32.totalorder %s28, 0
      %p69 = por %p67, %p68
      %p70 = scmp.ne.s32.totalorder %s59, %s62
      %p71 = scmp.eq.s32.totalorder %s33, 1
      %p72 = por %p70, %p71
      %p73 = scmp.ne.s32.totalorder %s62, %s63
      %p74 = scmp.eq.s32.totalorder %s33, 0
      %p75 = por %p73, %p74
      %p76 = scmp.ne.s32.totalorder %s62, %s63
      %p77 = scmp.eq.s32.totalorder %s34, 1
      %p78 = por %p76, %p77
      %p80 = scmp.ne.s32.totalorder %s63, %s79
      %p81 = scmp.eq.s32.totalorder %s34, 0
      %p82 = por %p80, %p81
      %s83 = ssub.s32 %s28, %s35
      %p84 = scmp.eq.s32.totalorder %s83, 0
      %s86 = sadd.s32 %s85, 1
      %s87 = scalar_select %p84, %s85, %s86
      %p90 = pneg %p84
      %p91 = scmp.eq.s32.totalorder %s28, 1
      %p92 = por %p90, %p91
      %p93 = scmp.ne.s32.totalorder %s85, %s88
      %p94 = scmp.eq.s32.totalorder %s28, 0
      %p95 = por %p93, %p94
      %p96 = scmp.ne.s32.totalorder %s85, %s88
      %p97 = scmp.eq.s32.totalorder %s33, 1
      %p98 = por %p96, %p97
      %p99 = scmp.ne.s32.totalorder %s88, %s89
      %p100 = scmp.eq.s32.totalorder %s33, 0
      %p101 = por %p99, %p100
      %p102 = scmp.ne.s32.totalorder %s88, %s89
      %p103 = scmp.eq.s32.totalorder %s34, 1
      %p104 = por %p102, %p103
      %p106 = scmp.ne.s32.totalorder %s89, %s105
      %p107 = scmp.eq.s32.totalorder %s34, 0
      %p108 = por %p106, %p107
      %s109 = ssub.s32 %s28, %s35
      %p110 = scmp.eq.s32.totalorder %s109, 0
      %s112 = sadd.s32 %s111, 1
      %s113 = scalar_select %p110, %s111, %s112
      %p116 = pneg %p110
      %p117 = scmp.eq.s32.totalorder %s28, 1
      %p118 = por %p116, %p117
      %p119 = scmp.ne.s32.totalorder %s111, %s114
      %p120 = scmp.eq.s32.totalorder %s28, 0
      %p121 = por %p119, %p120
      %p122 = scmp.ne.s32.totalorder %s111, %s114
      %p123 = scmp.eq.s32.totalorder %s33, 1
      %p124 = por %p122, %p123
      %p125 = scmp.ne.s32.totalorder %s114, %s115
      %p126 = scmp.eq.s32.totalorder %s33, 0
      %p127 = por %p125, %p126
      %p128 = scmp.ne.s32.totalorder %s114, %s115
      %p129 = scmp.eq.s32.totalorder %s34, 1
      %p130 = por %p128, %p129
      %p132 = scmp.ne.s32.totalorder %s115, %s131
      %p133 = scmp.eq.s32.totalorder %s34, 0
      %p134 = por %p132, %p133
      %s135 = ssub.s32 %s28, %s35
      %p136 = scmp.eq.s32.totalorder %s135, 0
      %s138 = sadd.s32 %s137, 1
      %s139 = scalar_select %p136, %s137, %s138
      %p142 = pneg %p136
      %p143 = scmp.eq.s32.totalorder %s28, 1
      %p144 = por %p142, %p143
      %p145 = scmp.ne.s32.totalorder %s137, %s140
      %p146 = scmp.eq.s32.totalorder %s28, 0
      %p147 = por %p145, %p146
      %p148 = scmp.ne.s32.totalorder %s137, %s140
      %p149 = scmp.eq.s32.totalorder %s33, 1
      %p150 = por %p148, %p149
      %p151 = scmp.ne.s32.totalorder %s140, %s141
      %p152 = scmp.eq.s32.totalorder %s33, 0
      %p153 = por %p151, %p152
      %p154 = scmp.ne.s32.totalorder %s140, %s141
      %p155 = scmp.eq.s32.totalorder %s34, 1
      %p156 = por %p154, %p155
      %p158 = scmp.ne.s32.totalorder %s141, %s157
      %p159 = scmp.eq.s32.totalorder %s34, 0
      %p160 = por %p158, %p159
      %s162 = sadd.s32 %s161, 1
      %p165 = scmp.eq.s32.totalorder %s28, 1
      %p166 = scmp.ne.s32.totalorder %s161, %s163
      %p167 = scmp.eq.s32.totalorder %s28, 0
      %p168 = por %p166, %p167
      %p169 = scmp.ne.s32.totalorder %s161, %s163
      %p170 = scmp.eq.s32.totalorder %s33, 1
      %p171 = por %p169, %p170
      %p172 = scmp.ne.s32.totalorder %s163, %s164
      %p173 = scmp.eq.s32.totalorder %s33, 0
      %p174 = por %p172, %p173
      %p175 = scmp.ne.s32.totalorder %s163, %s164
      %p176 = scmp.eq.s32.totalorder %s34, 1
      %p177 = por %p175, %p176
      %p179 = scmp.ne.s32.totalorder %s164, %s178
      %p180 = scmp.eq.s32.totalorder %s34, 0
      %p181 = por %p179, %p180
      %s183 = sadd.s32 %s182, 1
      %p186 = scmp.eq.s32.totalorder %s28, 1
      %p187 = scmp.ne.s32.totalorder %s182, %s184
      %p188 = scmp.eq.s32.totalorder %s28, 0
      %p189 = por %p187, %p188
      %p190 = scmp.ne.s32.totalorder %s182, %s184
      %p191 = scmp.eq.s32.totalorder %s33, 1
      %p192 = por %p190, %p191
      %p193 = scmp.ne.s32.totalorder %s184, %s185
      %p194 = scmp.eq.s32.totalorder %s33, 0
      %p195 = por %p193, %p194
      %p196 = scmp.ne.s32.totalorder %s184, %s185
      %p197 = scmp.eq.s32.totalorder %s34, 1
      %p198 = por %p196, %p197
      %p200 = scmp.ne.s32.totalorder %s185, %s199
      %p201 = scmp.eq.s32.totalorder %s34, 0
      %p202 = por %p200, %p201
      %s204 = sadd.s32 %s203, 1
      %p207 = scmp.eq.s32.totalorder %s28, 1
      %p208 = scmp.ne.s32.totalorder %s203, %s205
      %p209 = scmp.eq.s32.totalorder %s28, 0
      %p210 = por %p208, %p209
      %p211 = scmp.ne.s32.totalorder %s203, %s205
      %p212 = scmp.eq.s32.totalorder %s33, 1
      %p213 = por %p211, %p212
      %p214 = scmp.ne.s32.totalorder %s205, %s206
      %p215 = scmp.eq.s32.totalorder %s33, 0
      %p216 = por %p214, %p215
      %p217 = scmp.ne.s32.totalorder %s205, %s206
      %p218 = scmp.eq.s32.totalorder %s34, 1
      %p219 = por %p217, %p218
      %p221 = scmp.ne.s32.totalorder %s206, %s220
      %p222 = scmp.eq.s32.totalorder %s34, 0
      %p223 = por %p221, %p222
      %s225 = sadd.s32 %s224, 1
      %p228 = scmp.eq.s32.totalorder %s28, 1
      %p229 = scmp.ne.s32.totalorder %s224, %s226
      %p230 = scmp.eq.s32.totalorder %s28, 0
      %p231 = por %p229, %p230
      %p232 = scmp.ne.s32.totalorder %s224, %s226
      %p233 = scmp.eq.s32.totalorder %s33, 1
      %p234 = por %p232, %p233
      %p235 = scmp.ne.s32.totalorder %s226, %s227
      %p236 = scmp.eq.s32.totalorder %s33, 0
      %p237 = por %p235, %p236
      %p238 = scmp.ne.s32.totalorder %s226, %s227
      %p239 = scmp.eq.s32.totalorder %s34, 1
      %p240 = por %p238, %p239
      %p242 = scmp.ne.s32.totalorder %s227, %s241
      %p243 = scmp.eq.s32.totalorder %s34, 0
      %p244 = por %p242, %p243
      %s246 = sadd.s32 %s245, 1
      %p249 = scmp.eq.s32.totalorder %s28, 1
      %p250 = scmp.ne.s32.totalorder %s245, %s247
      %p251 = scmp.eq.s32.totalorder %s28, 0
      %p252 = por %p250, %p251
      %p253 = scmp.ne.s32.totalorder %s245, %s247
      %p254 = scmp.eq.s32.totalorder %s33, 1
      %p255 = por %p253, %p254
      %p256 = scmp.ne.s32.totalorder %s247, %s248
      %p257 = scmp.eq.s32.totalorder %s33, 0
      %p258 = por %p256, %p257
      %p259 = scmp.ne.s32.totalorder %s247, %s248
      %p260 = scmp.eq.s32.totalorder %s34, 1
      %p261 = por %p259, %p260
      %p263 = scmp.ne.s32.totalorder %s248, %s262
      %p264 = scmp.eq.s32.totalorder %s34, 0
      %p265 = por %p263, %p264
      %s267 = sadd.s32 %s266, 1
      %p270 = scmp.eq.s32.totalorder %s28, 1
      %p271 = scmp.ne.s32.totalorder %s266, %s268
      %p272 = scmp.eq.s32.totalorder %s28, 0
      %p273 = por %p271, %p272
      %p274 = scmp.ne.s32.totalorder %s266, %s268
      %p275 = scmp.eq.s32.totalorder %s33, 1
      %p276 = por %p274, %p275
      %p277 = scmp.ne.s32.totalorder %s268, %s269
      %p278 = scmp.eq.s32.totalorder %s33, 0
      %p279 = por %p277, %p278
      %p280 = scmp.ne.s32.totalorder %s268, %s269
      %p281 = scmp.eq.s32.totalorder %s34, 1
      %p282 = por %p280, %p281
      %p284 = scmp.ne.s32.totalorder %s269, %s283
      %p285 = scmp.eq.s32.totalorder %s34, 0
      %p286 = por %p284, %p285
      %s288 = sadd.s32 %s287, 1
      %p291 = scmp.eq.s32.totalorder %s28, 1
      %p292 = scmp.ne.s32.totalorder %s287, %s289
      %p293 = scmp.eq.s32.totalorder %s28, 0
      %p294 = por %p292, %p293
      %p295 = scmp.ne.s32.totalorder %s287, %s289
      %p296 = scmp.eq.s32.totalorder %s33, 1
      %p297 = por %p295, %p296
      %p298 = scmp.ne.s32.totalorder %s289, %s290
      %p299 = scmp.eq.s32.totalorder %s33, 0
      %p300 = por %p298, %p299
      %p301 = scmp.ne.s32.totalorder %s289, %s290
      %p302 = scmp.eq.s32.totalorder %s34, 1
      %p303 = por %p301, %p302
      %p305 = scmp.ne.s32.totalorder %s290, %s304
      %p306 = scmp.eq.s32.totalorder %s34, 0
      %p307 = por %p305, %p306
      %s309 = sadd.s32 %s308, 1
      %p312 = scmp.eq.s32.totalorder %s28, 1
      %p313 = scmp.ne.s32.totalorder %s308, %s310
      %p314 = scmp.eq.s32.totalorder %s28, 0
      %p315 = por %p313, %p314
      %p316 = scmp.ne.s32.totalorder %s308, %s310
      %p317 = scmp.eq.s32.totalorder %s33, 1
      %p318 = por %p316, %p317
      %p319 = scmp.ne.s32.totalorder %s310, %s311
      %p320 = scmp.eq.s32.totalorder %s33, 0
      %p321 = por %p319, %p320
      %p322 = scmp.ne.s32.totalorder %s310, %s311
      %p323 = scmp.eq.s32.totalorder %s34, 1
      %p324 = por %p322, %p323
      %p326 = scmp.ne.s32.totalorder %s311, %s325
      %p327 = scmp.eq.s32.totalorder %s34, 0
      %p328 = por %p326, %p327
      %s330 = sadd.s32 %s329, 1
      %p333 = scmp.eq.s32.totalorder %s28, 1
      %p334 = scmp.ne.s32.totalorder %s329, %s331
      %p335 = scmp.eq.s32.totalorder %s28, 0
      %p336 = por %p334, %p335
      %p337 = scmp.ne.s32.totalorder %s329, %s331
      %p338 = scmp.eq.s32.totalorder %s33, 1
      %p339 = por %p337, %p338
      %p340 = scmp.ne.s32.totalorder %s331, %s332
      %p341 = scmp.eq.s32.totalorder %s33, 0
      %p342 = por %p340, %p341
      %p343 = scmp.ne.s32.totalorder %s331, %s332
      %p344 = scmp.eq.s32.totalorder %s34, 1
      %p345 = por %p343, %p344
      %p347 = scmp.ne.s32.totalorder %s332, %s346
      %p348 = scmp.eq.s32.totalorder %s34, 0
      %p349 = por %p347, %p348
      %s351 = sadd.s32 %s350, 1
      %p354 = scmp.eq.s32.totalorder %s28, 1
      %p355 = scmp.ne.s32.totalorder %s350, %s352
      %p356 = scmp.eq.s32.totalorder %s28, 0
      %p357 = por %p355, %p356
      %p358 = scmp.ne.s32.totalorder %s350, %s352
      %p359 = scmp.eq.s32.totalorder %s33, 1
      %p360 = por %p358, %p359
      %p361 = scmp.ne.s32.totalorder %s352, %s353
      %p362 = scmp.eq.s32.totalorder %s33, 0
      %p363 = por %p361, %p362
      %p364 = scmp.ne.s32.totalorder %s352, %s353
      %p365 = scmp.eq.s32.totalorder %s34, 1
      %p366 = por %p364, %p365
      %p368 = scmp.ne.s32.totalorder %s353, %s367
      %p369 = scmp.eq.s32.totalorder %s34, 0
      %p370 = por %p368, %p369
      %s372 = sadd.s32 %s371, 1
      %p375 = scmp.eq.s32.totalorder %s28, 1
      %p376 = scmp.ne.s32.totalorder %s371, %s373
      %p377 = scmp.eq.s32.totalorder %s28, 0
      %p378 = por %p376, %p377
      %p379 = scmp.ne.s32.totalorder %s371, %s373
      %p380 = scmp.eq.s32.totalorder %s33, 1
      %p381 = por %p379, %p380
      %p382 = scmp.ne.s32.totalorder %s373, %s374
      %p383 = scmp.eq.s32.totalorder %s33, 0
      %p384 = por %p382, %p383
      %p385 = scmp.ne.s32.totalorder %s373, %s374
      %p386 = scmp.eq.s32.totalorder %s34, 1
      %p387 = por %p385, %p386
      %p389 = scmp.ne.s32.totalorder %s374, %s388
      %p390 = scmp.eq.s32.totalorder %s34, 0
      %p391 = por %p389, %p390
      %s393 = sadd.s32 %s392, 1
      %p396 = scmp.eq.s32.totalorder %s28, 1
      %p397 = scmp.ne.s32.totalorder %s392, %s394
      %p398 = scmp.eq.s32.totalorder %s28, 0
      %p399 = por %p397, %p398
      %p400 = scmp.ne.s32.totalorder %s392, %s394
      %p401 = scmp.eq.s32.totalorder %s33, 1
      %p402 = por %p400, %p401
      %p403 = scmp.ne.s32.totalorder %s394, %s395
      %p404 = scmp.eq.s32.totalorder %s33, 0
      %p405 = por %p403, %p404
      %p406 = scmp.ne.s32.totalorder %s394, %s395
      %p407 = scmp.eq.s32.totalorder %s34, 1
      %p408 = por %p406, %p407
      %p410 = scmp.ne.s32.totalorder %s395, %s409
      %p411 = scmp.eq.s32.totalorder %s34, 0
      %p412 = por %p410, %p411
      %s414 = sadd.s32 %s413, 1
      %p417 = scmp.eq.s32.totalorder %s28, 1
      %p418 = scmp.ne.s32.totalorder %s413, %s415
      %p419 = scmp.eq.s32.totalorder %s28, 0
      %p420 = por %p418, %p419
      %p421 = scmp.ne.s32.totalorder %s413, %s415
      %p422 = scmp.eq.s32.totalorder %s33, 1
      %p423 = por %p421, %p422
      %p424 = scmp.ne.s32.totalorder %s415, %s416
      %p425 = scmp.eq.s32.totalorder %s33, 0
      %p426 = por %p424, %p425
      %p427 = scmp.ne.s32.totalorder %s415, %s416
      %p428 = scmp.eq.s32.totalorder %s34, 1
      %p429 = por %p427, %p428
      %p431 = scmp.ne.s32.totalorder %s416, %s430
      %p432 = scmp.eq.s32.totalorder %s34, 0
      %p433 = por %p431, %p432
      %s435 = sadd.s32 %s434, 1
      %p438 = scmp.eq.s32.totalorder %s28, 1
      %p439 = scmp.ne.s32.totalorder %s434, %s436
      %p440 = scmp.eq.s32.totalorder %s28, 0
      %p441 = por %p439, %p440
      %p442 = scmp.ne.s32.totalorder %s434, %s436
      %p443 = scmp.eq.s32.totalorder %s33, 1
      %p444 = por %p442, %p443
      %p445 = scmp.ne.s32.totalorder %s436, %s437
      %p446 = scmp.eq.s32.totalorder %s33, 0
      %p447 = por %p445, %p446
      %p448 = scmp.ne.s32.totalorder %s436, %s437
      %p449 = scmp.eq.s32.totalorder %s34, 1
      %p450 = por %p448, %p449
      %p452 = scmp.ne.s32.totalorder %s437, %s451
      %p453 = scmp.eq.s32.totalorder %s34, 0
      %p454 = por %p452, %p453
      %s456 = sadd.s32 %s455, 1
      %p459 = scmp.eq.s32.totalorder %s28, 1
      %p460 = scmp.ne.s32.totalorder %s455, %s457
      %p461 = scmp.eq.s32.totalorder %s28, 0
      %p462 = por %p460, %p461
      %p463 = scmp.ne.s32.totalorder %s455, %s457
      %p464 = scmp.eq.s32.totalorder %s33, 1
      %p465 = por %p463, %p464
      %p466 = scmp.ne.s32.totalorder %s457, %s458
      %p467 = scmp.eq.s32.totalorder %s33, 0
      %p468 = por %p466, %p467
      %p469 = scmp.ne.s32.totalorder %s457, %s458
      %p470 = scmp.eq.s32.totalorder %s34, 1
      %p471 = por %p469, %p470
      %p473 = scmp.ne.s32.totalorder %s458, %s472
      %p474 = scmp.eq.s32.totalorder %s34, 0
      %p475 = por %p473, %p474
      %s477 = sadd.s32 %s476, 1
      %p480 = scmp.eq.s32.totalorder %s28, 1
      %p481 = scmp.ne.s32.totalorder %s476, %s478
      %p482 = scmp.eq.s32.totalorder %s28, 0
      %p483 = por %p481, %p482
      %p484 = scmp.ne.s32.totalorder %s476, %s478
      %p485 = scmp.eq.s32.totalorder %s33, 1
      %p486 = por %p484, %p485
      %p487 = scmp.ne.s32.totalorder %s478, %s479
      %p488 = scmp.eq.s32.totalorder %s33, 0
      %p489 = por %p487, %p488
      %p490 = scmp.ne.s32.totalorder %s478, %s479
      %p491 = scmp.eq.s32.totalorder %s34, 1
      %p492 = por %p490, %p491
      %p494 = scmp.ne.s32.totalorder %s479, %s493
      %p495 = scmp.eq.s32.totalorder %s34, 0
      %p496 = por %p494, %p495
      %s498 = sadd.s32 %s497, 1
      %p501 = scmp.eq.s32.totalorder %s28, 1
      %p502 = scmp.ne.s32.totalorder %s497, %s499
      %p503 = scmp.eq.s32.totalorder %s28, 0
      %p504 = por %p502, %p503
      %p505 = scmp.ne.s32.totalorder %s497, %s499
      %p506 = scmp.eq.s32.totalorder %s33, 1
      %p507 = por %p505, %p506
      %p508 = scmp.ne.s32.totalorder %s499, %s500
      %p509 = scmp.eq.s32.totalorder %s33, 0
      %p510 = por %p508, %p509
      %p511 = scmp.ne.s32.totalorder %s499, %s500
      %p512 = scmp.eq.s32.totalorder %s34, 1
      %p513 = por %p511, %p512
      %p515 = scmp.ne.s32.totalorder %s500, %s514
      %p516 = scmp.eq.s32.totalorder %s34, 0
      %p517 = por %p515, %p516
      %p518 = scmp.le.s32.totalorder 1, %s28
      %p519 = scmp.lt.s32.totalorder %s28, 3
      %p520 = pnand %p518, %p519
      %p521 = pneg %p520
      // Predicated region
      $region9: #{tpu_custom_call.1} parent=5 // pred_check
        _
      $region10: #{tpu_custom_call.1} parent=5 // pred_check_branch
        %523 = sbr.rel (%p520) target = $region12
      $region11: #{tpu_custom_call.1} parent=5 // pred_region
        %s524 = ssub.s32 %s28, 1
        // Predicated region
        $region13: #{tpu_custom_call.1} parent=11 // pred_check
          %p525 = pneg %p49
        $region14: #{tpu_custom_call.1} parent=11 // pred_check_branch
          %527 = sbr.rel (%p525) target = $region16
        $region15: #{tpu_custom_call.1} parent=11 // pred_region
          _
        $region16: #{tpu_custom_call.1} parent=11 // pred_fallthru
          _
        // Predicated region
        $region17: #{tpu_custom_call.1} parent=11 // pred_check
          %p528 = pneg %p174
        $region18: #{tpu_custom_call.1} parent=11 // pred_check_branch
          %530 = sbr.rel (%p528) target = $region20
        $region19: #{tpu_custom_call.1} parent=11 // pred_region
          _
        $region20: #{tpu_custom_call.1} parent=11 // pred_fallthru
          _
        // Predicated region
        $region21: #{tpu_custom_call.1} parent=11 // pred_check
          %p531 = pneg %p195
        $region22: #{tpu_custom_call.1} parent=11 // pred_check_branch
          %533 = sbr.rel (%p531) target = $region24
        $region23: #{tpu_custom_call.1} parent=11 // pred_region
          _
        $region24: #{tpu_custom_call.1} parent=11 // pred_fallthru
          _
        // Predicated region
        $region25: #{tpu_custom_call.1} parent=11 // pred_check
          %p534 = pneg %p216
        $region26: #{tpu_custom_call.1} parent=11 // pred_check_branch
          %536 = sbr.rel (%p534) target = $region28
        $region27: #{tpu_custom_call.1} parent=11 // pred_region
          _
        $region28: #{tpu_custom_call.1} parent=11 // pred_fallthru
          _
        // Predicated region
        $region29: #{tpu_custom_call.1} parent=11 // pred_check
          %p537 = pneg %p237
        $region30: #{tpu_custom_call.1} parent=11 // pred_check_branch
          %539 = sbr.rel (%p537) target = $region32
        $region31: #{tpu_custom_call.1} parent=11 // pred_region
          _
        $region32: #{tpu_custom_call.1} parent=11 // pred_fallthru
          _
        // Predicated region
        $region33: #{tpu_custom_call.1} parent=11 // pred_check
          %p540 = pneg %p258
        $region34: #{tpu_custom_call.1} parent=11 // pred_check_branch
          %542 = sbr.rel (%p540) target = $region36
        $region35: #{tpu_custom_call.1} parent=11 // pred_region
          _
        $region36: #{tpu_custom_call.1} parent=11 // pred_fallthru
          _
        // Predicated region
        $region37: #{tpu_custom_call.1} parent=11 // pred_check
          %p543 = pneg %p279
        $region38: #{tpu_custom_call.1} parent=11 // pred_check_branch
          %545 = sbr.rel (%p543) target = $region40
        $region39: #{tpu_custom_call.1} parent=11 // pred_region
          _
        $region40: #{tpu_custom_call.1} parent=11 // pred_fallthru
          _
        // Predicated region
        $region41: #{tpu_custom_call.1} parent=11 // pred_check
          %p546 = pneg %p300
        $region42: #{tpu_custom_call.1} parent=11 // pred_check_branch
          %548 = sbr.rel (%p546) target = $region44
        $region43: #{tpu_custom_call.1} parent=11 // pred_region
          _
        $region44: #{tpu_custom_call.1} parent=11 // pred_fallthru
          _
        // Predicated region
        $region45: #{tpu_custom_call.1} parent=11 // pred_check
          %p549 = pneg %p321
        $region46: #{tpu_custom_call.1} parent=11 // pred_check_branch
          %551 = sbr.rel (%p549) target = $region48
        $region47: #{tpu_custom_call.1} parent=11 // pred_region
          _
        $region48: #{tpu_custom_call.1} parent=11 // pred_fallthru
          _
        // Predicated region
        $region49: #{tpu_custom_call.1} parent=11 // pred_check
          %p552 = pneg %p342
        $region50: #{tpu_custom_call.1} parent=11 // pred_check_branch
          %554 = sbr.rel (%p552) target = $region52
        $region51: #{tpu_custom_call.1} parent=11 // pred_region
          _
        $region52: #{tpu_custom_call.1} parent=11 // pred_fallthru
          _
        // Predicated region
        $region53: #{tpu_custom_call.1} parent=11 // pred_check
          %p555 = pneg %p363
        $region54: #{tpu_custom_call.1} parent=11 // pred_check_branch
          %557 = sbr.rel (%p555) target = $region56
        $region55: #{tpu_custom_call.1} parent=11 // pred_region
          _
        $region56: #{tpu_custom_call.1} parent=11 // pred_fallthru
          _
        // Predicated region
        $region57: #{tpu_custom_call.1} parent=11 // pred_check
          %p558 = pneg %p384
        $region58: #{tpu_custom_call.1} parent=11 // pred_check_branch
          %560 = sbr.rel (%p558) target = $region60
        $region59: #{tpu_custom_call.1} parent=11 // pred_region
          _
        $region60: #{tpu_custom_call.1} parent=11 // pred_fallthru
          _
        // Predicated region
        $region61: #{tpu_custom_call.1} parent=11 // pred_check
          %p561 = pneg %p405
        $region62: #{tpu_custom_call.1} parent=11 // pred_check_branch
          %563 = sbr.rel (%p561) target = $region64
        $region63: #{tpu_custom_call.1} parent=11 // pred_region
          _
        $region64: #{tpu_custom_call.1} parent=11 // pred_fallthru
          _
        // Predicated region
        $region65: #{tpu_custom_call.1} parent=11 // pred_check
          %p564 = pneg %p426
        $region66: #{tpu_custom_call.1} parent=11 // pred_check_branch
          %566 = sbr.rel (%p564) target = $region68
        $region67: #{tpu_custom_call.1} parent=11 // pred_region
          _
        $region68: #{tpu_custom_call.1} parent=11 // pred_fallthru
          _
        // Predicated region
        $region69: #{tpu_custom_call.1} parent=11 // pred_check
          %p567 = pneg %p447
        $region70: #{tpu_custom_call.1} parent=11 // pred_check_branch
          %569 = sbr.rel (%p567) target = $region72
        $region71: #{tpu_custom_call.1} parent=11 // pred_region
          _
        $region72: #{tpu_custom_call.1} parent=11 // pred_fallthru
          _
        // Predicated region
        $region73: #{tpu_custom_call.1} parent=11 // pred_check
          %p570 = pneg %p468
        $region74: #{tpu_custom_call.1} parent=11 // pred_check_branch
          %572 = sbr.rel (%p570) target = $region76
        $region75: #{tpu_custom_call.1} parent=11 // pred_region
          _
        $region76: #{tpu_custom_call.1} parent=11 // pred_fallthru
          _
        // Predicated region
        $region77: #{tpu_custom_call.1} parent=11 // pred_check
          %p573 = pneg %p489
        $region78: #{tpu_custom_call.1} parent=11 // pred_check_branch
          %575 = sbr.rel (%p573) target = $region80
        $region79: #{tpu_custom_call.1} parent=11 // pred_region
          _
        $region80: #{tpu_custom_call.1} parent=11 // pred_fallthru
          _
      $region12: #{tpu_custom_call.1} parent=5 // pred_fallthru
        _
      %p576 = scmp.lt.s32.totalorder %s28, 2
      // Predicated region
      $region81: #{tpu_custom_call.1} parent=5 // pred_check
        %p577 = pneg %p576
      $region82: #{tpu_custom_call.1} parent=5 // pred_check_branch
        %579 = sbr.rel (%p577) target = $region84
      $region83: #{tpu_custom_call.1} parent=5 // pred_region
        // Predicated region
        $region85: #{tpu_custom_call.1} parent=83 // pred_check
          %p580 = pneg %p69
        $region86: #{tpu_custom_call.1} parent=83 // pred_check_branch
          %582 = sbr.rel (%p580) target = $region88
        $region87: #{tpu_custom_call.1} parent=83 // pred_region
          %s583 = smul.u32 16, %s28
          %p584 = scmp.lt.s32.totalorder %s583, 31
          %s585 = scalar_select %p584, %s583, 31
          %s586 = smul.addr %s585, 4
          %s587 = scalar_lea.vmem %s1, %s586
          %s588 = smul.u32 16, %s28
        $region88: #{tpu_custom_call.1} parent=83 // pred_fallthru
          _
        // Predicated region
        $region89: #{tpu_custom_call.1} parent=83 // pred_check
          %p589 = pneg %p95
        $region90: #{tpu_custom_call.1} parent=83 // pred_check_branch
          %591 = sbr.rel (%p589) target = $region92
        $region91: #{tpu_custom_call.1} parent=83 // pred_region
          %s592 = smul.u32 16, %s28
          %p593 = scmp.lt.s32.totalorder %s592, 31
          %s594 = scalar_select %p593, %s592, 31
          %s595 = smul.addr %s594, 4
          %s596 = scalar_lea.vmem %s2, %s595
          %s597 = smul.u32 16, %s28
        $region92: #{tpu_custom_call.1} parent=83 // pred_fallthru
          _
        // Predicated region
        $region93: #{tpu_custom_call.1} parent=83 // pred_check
          %p598 = pneg %p121
        $region94: #{tpu_custom_call.1} parent=83 // pred_check_branch
          %600 = sbr.rel (%p598) target = $region96
        $region95: #{tpu_custom_call.1} parent=83 // pred_region
          %p601 = scmp.lt.s32.totalorder %s28, 1
          %s602 = scalar_select %p601, %s28, 1
          %s603 = smul.addr %s602, 2
          %s604 = scalar_lea.vmem %s3, %s603
        $region96: #{tpu_custom_call.1} parent=83 // pred_fallthru
          _
        // Predicated region
        $region97: #{tpu_custom_call.1} parent=83 // pred_check
          %p605 = pneg %p147
        $region98: #{tpu_custom_call.1} parent=83 // pred_check_branch
          %607 = sbr.rel (%p605) target = $region100
        $region99: #{tpu_custom_call.1} parent=83 // pred_region
          %s608 = smul.u32 32, %s28
          %p609 = scmp.lt.s32.totalorder %s608, 63
          %s610 = scalar_select %p609, %s608, 63
          %s611 = smul.addr %s610, 8
          %s612 = scalar_lea.vmem %s4, %s611
          %s613 = smul.u32 32, %s28
        $region100: #{tpu_custom_call.1} parent=83 // pred_fallthru
          _
      $region84: #{tpu_custom_call.1} parent=5 // pred_fallthru
        _
      %p614 = scmp.le.s32.totalorder 1, %s28
      %p615 = scmp.lt.s32.totalorder %s28, 3
      %p616 = pnand %p614, %p615
      %p617 = pneg %p616
      // Predicated region
      $region101: #{tpu_custom_call.1} parent=5 // pred_check
        _
      $region102: #{tpu_custom_call.1} parent=5 // pred_check_branch
        %619 = sbr.rel (%p616) target = $region104
      $region103: #{tpu_custom_call.1} parent=5 // pred_region
        %s620 = ssub.s32 %s28, 1
        %p621 = pneg %p49
        %p622 = pneg %p46
        %s623 = smul.u32 16, %s33
        %p624 = scmp.lt.s32.totalorder %s623, 31
        %s625 = scalar_select %p624, %s623, 31
        %s626 = smul.addr %s625, 4
        %s627 = scalar_lea.vmem %s1, %s626
        %p628 = pneg %p75
        %p629 = pneg %p72
        %s630 = smul.u32 16, %s33
        %p631 = scmp.lt.s32.totalorder %s630, 31
        %s632 = scalar_select %p631, %s630, 31
        %s633 = smul.addr %s632, 4
        %s634 = scalar_lea.vmem %s2, %s633
        %p635 = pneg %p101
        %p636 = pneg %p98
        %p637 = scmp.lt.s32.totalorder %s33, 1
        %s638 = scalar_select %p637, %s33, 1
        %s639 = smul.addr %s638, 2
        %s640 = scalar_lea.vmem %s3, %s639
        %p641 = pneg %p127
        %p642 = pneg %p124
        %s643 = smul.u32 32, %s33
        %p644 = scmp.lt.s32.totalorder %s643, 63
        %s645 = scalar_select %p644, %s643, 63
        %s646 = smul.addr %s645, 8
        %s647 = scalar_lea.vmem %s4, %s646
        %p648 = pneg %p153
        %p649 = pneg %p150
        %p650 = pneg %p174
        %p651 = pneg %p171
        %p652 = pneg %p195
        %p653 = pneg %p192
        %p654 = pneg %p216
        %p655 = pneg %p213
        %p656 = pneg %p237
        %p657 = pneg %p234
        %p658 = pneg %p258
        %p659 = pneg %p255
        %p660 = pneg %p279
        %p661 = pneg %p276
        %p662 = pneg %p300
        %p663 = pneg %p297
        %p664 = pneg %p321
        %p665 = pneg %p318
        %p666 = pneg %p342
        %p667 = pneg %p339
        %p668 = pneg %p363
        %p669 = pneg %p360
        %p670 = pneg %p384
        %p671 = pneg %p381
        %p672 = pneg %p405
        %p673 = pneg %p402
        %p674 = pneg %p426
        %p675 = pneg %p423
        %p676 = pneg %p447
        %p677 = pneg %p444
        %p678 = pneg %p468
        %p679 = pneg %p465
        %p680 = pneg %p489
        %p681 = pneg %p486
        %p682 = pneg %p510
        %p683 = pneg %p507
        %s684 = smul.u32 16, %s33
        %p685 = scmp.lt.s32.totalorder %s684, 31
        %s686 = scalar_select %p685, %s684, 31
        %s687 = smul.addr %s686, 4
        %s688 = scalar_lea.vmem %s1, %s687
        %s689 = smul.u32 16, %s33
        %s690 = smul.u32 16, %s33
        %p691 = scmp.lt.s32.totalorder %s690, 31
        %s692 = scalar_select %p691, %s690, 31
        %s693 = smul.addr %s692, 4
        %s694 = scalar_lea.vmem %s2, %s693
        %s695 = smul.u32 16, %s33
        %p696 = scmp.lt.s32.totalorder %s33, 1
        %s697 = scalar_select %p696, %s33, 1
        %s698 = smul.addr %s697, 2
        %s699 = scalar_lea.vmem %s3, %s698
        %s700 = smul.u32 32, %s33
        %p701 = scmp.lt.s32.totalorder %s700, 63
        %s702 = scalar_select %p701, %s700, 63
        %s703 = smul.addr %s702, 8
        %s704 = scalar_lea.vmem %s4, %s703
        %s705 = smul.u32 32, %s33
        %p707 = scmp.eq.s32.totalorder %s33, 0
        // Predicated region
        $region105: #{tpu_custom_call.1} parent=103 // pred_check
          %p708 = pneg %p707
        $region106: #{tpu_custom_call.1} parent=103 // pred_check_branch
          %710 = sbr.rel (%p708) target = $region108
        $region107: #{tpu_custom_call.1} parent=103 // pred_region
          %711 = vst [vmem:[#allocation2] sm:$0xff] 0.0
          %712 = vst [vmem:[#allocation2 + $0x8] sm:$0xff] 0.0
          %713 = vst [vmem:[#allocation2 + $0x10] sm:$0xff] 0.0
          %714 = vst [vmem:[#allocation2 + $0x18] sm:$0xff] 0.0
          %715 = vst [vmem:[#allocation3] sm:$0xff] -inf
          %716 = vst [vmem:[#allocation3 + $0x8] sm:$0xff] -inf
          %717 = vst [vmem:[#allocation3 + $0x10] sm:$0xff] -inf
          %718 = vst [vmem:[#allocation3 + $0x18] sm:$0xff] -inf
        $region108: #{tpu_custom_call.1} parent=103 // pred_fallthru
          _
        %v719 = vld [vmem:[%s688] sm:$0xf]
        %v720 = vld [vmem:[%s688 + $0x4] sm:$0xf]
        %v721 = vld [vmem:[%s688 + $0x8] sm:$0xf]
        %v722 = vld [vmem:[%s688 + $0xc] sm:$0xf]
        %v723 = vld [vmem:[%s688 + $0x10] sm:$0xf]
        %v724 = vld [vmem:[%s688 + $0x14] sm:$0xf]
        %v725 = vld [vmem:[%s688 + $0x18] sm:$0xf]
        %v726 = vld [vmem:[%s688 + $0x1c] sm:$0xf]
        %v727 = vld [vmem:[%s688 + $0x20] sm:$0xf]
        %v728 = vld [vmem:[%s688 + $0x24] sm:$0xf]
        %v729 = vld [vmem:[%s688 + $0x28] sm:$0xf]
        %v730 = vld [vmem:[%s688 + $0x2c] sm:$0xf]
        %v731 = vld [vmem:[%s688 + $0x30] sm:$0xf]
        %v732 = vld [vmem:[%s688 + $0x34] sm:$0xf]
        %v733 = vld [vmem:[%s688 + $0x38] sm:$0xf]
        %v734 = vld [vmem:[%s688 + $0x3c] sm:$0xf]
        %v735 = vld [vmem:[%s7] sm:$0xf]
        %v736 = vld [vmem:[%s7 + $0x4] sm:$0xf]
        %v737 = vld [vmem:[%s7 + $0x8] sm:$0xf]
        %v738 = vld [vmem:[%s7 + $0xc] sm:$0xf]
        %v739 = vld [vmem:[%s7 + $0x10] sm:$0xf]
        %v740 = vld [vmem:[%s7 + $0x14] sm:$0xf]
        %v741 = vld [vmem:[%s7 + $0x18] sm:$0xf]
        %v742 = vld [vmem:[%s7 + $0x1c] sm:$0xf]
        %v743 = vld [vmem:[%s8] sm:$0x1]
        %v745 = vlaneseq
        %v746 = vshrl.u32 %v745, 7
        %v747 = vsub.s32 0, %v746
        %v748 = vrot.slane %v743, %v747
        %v766 = vunpack.c.l.b16 %v719
        %v767 = vunpack.c.l.b16 %v720
        %v768 = vunpack.c.l.b16 %v721
        %v769 = vunpack.c.l.b16 %v722
        %v770 = vunpack.c.l.b16 %v723
        %v771 = vunpack.c.l.b16 %v724
        %v772 = vunpack.c.l.b16 %v725
        %v773 = vunpack.c.l.b16 %v726
        %v774 = vunpack.c.l.b16 %v727
        %v775 = vunpack.c.l.b16 %v728
        %v776 = vunpack.c.l.b16 %v729
        %v777 = vunpack.c.l.b16 %v730
        %v778 = vunpack.c.l.b16 %v731
        %v779 = vunpack.c.l.b16 %v732
        %v780 = vunpack.c.l.b16 %v733
        %v781 = vunpack.c.l.b16 %v734
        %v782 = vpack.c.b16 %v767, %v766
        %v783 = vpack.c.b16 %v769, %v768
        %v784 = vpack.c.b16 %v771, %v770
        %v785 = vpack.c.b16 %v773, %v772
        %v786 = vpack.c.b16 %v775, %v774
        %v787 = vpack.c.b16 %v777, %v776
        %v788 = vpack.c.b16 %v779, %v778
        %v789 = vpack.c.b16 %v781, %v780
        %v798 = vunpack.c.l.b16 %v735
        %v799 = vunpack.c.l.b16 %v736
        %v800 = vunpack.c.l.b16 %v737
        %v801 = vunpack.c.l.b16 %v738
        %v802 = vunpack.c.l.b16 %v739
        %v803 = vunpack.c.l.b16 %v740
        %v804 = vunpack.c.l.b16 %v741
        %v805 = vunpack.c.l.b16 %v742
        %v806 = vpack.c.b16 %v799, %v798
        %v807 = vpack.c.b16 %v801, %v800
        %v808 = vpack.c.b16 %v803, %v802
        %v809 = vpack.c.b16 %v805, %v804
        %vm814 = vcmask 523264
        %v816 = vsel %vm814, %v782, 0
        %v819 = vsel %vm814, %v783, 0
        %v822 = vsel %vm814, %v784, 0
        %v825 = vsel %vm814, %v785, 0
        %v828 = vsel %vm814, %v786, 0
        %v831 = vsel %vm814, %v787, 0
        %v834 = vsel %vm814, %v788, 0
        %v837 = vsel %vm814, %v789, 0
        %839 = vmatprep.subr.bf16.mxu0 0
        %840 = vmatpush1.bf16.msra.mxu0 0
        %841 = vmatprep.subr.bf16.mxu0 0
        %842 = vmatpush1.bf16.msra.mxu0 0
        %843 = vmatprep.subr.bf16.mxu0 0
        %844 = vmatpush1.bf16.msra.mxu0 0
        %845 = vmatprep.subr.bf16.mxu0 0
        %846 = vmatpush1.bf16.msra.mxu0 0
        %847 = vmatprep.subr.bf16.mxu0 0
        %848 = vmatpush1.bf16.msra.mxu0 %v809
        %849 = vmatprep.subr.bf16.mxu0 0
        %850 = vmatpush1.bf16.msra.mxu0 %v808
        %851 = vmatprep.subr.bf16.mxu0 0
        %852 = vmatpush1.bf16.msra.mxu0 %v807
        %853 = vmatprep.subr.bf16.mxu0 0
        %854 = vmatpush1.bf16.msra.mxu0 %v806
        %855 = vmatprep.subr.bf16.mxu0 0
        %856 = vmatpush2.bf16.msra.mxu0 0
        %857 = vmatprep.subr.bf16.mxu0 0
        %858 = vmatpush2.bf16.msra.mxu0 0
        %859 = vmatprep.subr.bf16.mxu0 0
        %860 = vmatpush2.bf16.msra.mxu0 0
        %861 = vmatprep.subr.bf16.mxu0 0
        %862 = vmatpush2.bf16.msra.mxu0 0
        %863 = vmatprep.subr.bf16.mxu0 0
        %864 = vmatpush2.bf16.msra.mxu0 0
        %865 = vmatprep.subr.bf16.mxu0 0
        %866 = vmatpush2.bf16.msra.mxu0 0
        %867 = vmatprep.subr.bf16.mxu0 0
        %868 = vmatpush2.bf16.msra.mxu0 0
        %869 = vmatprep.subr.bf16.mxu0 0
        %870 = vmatpush2.bf16.msra.mxu0 0
        %871 = vmatprep.mubr.bf16.mxu0 0
        %872 = vmatmul.mubr.bf16.gmra.mxu0 %v816
        %v873 = vpop.f32.mrf.mxu0
        %v874 = vadd.f32 %v748, %v873
        %v875 = vpop.f32.mrf.mxu0
        %v876 = vpop.f32.mrf.mxu0
        %v877 = vadd.f32 %v748, %v876
        %v878 = vpop.f32.mrf.mxu0
        %879 = vmatprep.mubr.bf16.mxu0 0
        %880 = vmatmul.mubr.bf16.gmra.mxu0 %v819
        %v881 = vpop.f32.mrf.mxu0
        %v882 = vadd.f32 %v748, %v881
        %v883 = vpop.f32.mrf.mxu0
        %v884 = vpop.f32.mrf.mxu0
        %v885 = vadd.f32 %v748, %v884
        %v886 = vpop.f32.mrf.mxu0
        %887 = vmatprep.mubr.bf16.mxu0 0
        %888 = vmatmul.mubr.bf16.gmra.mxu0 %v822
        %v889 = vpop.f32.mrf.mxu0
        %v890 = vadd.f32 %v748, %v889
        %v891 = vpop.f32.mrf.mxu0
        %v892 = vpop.f32.mrf.mxu0
        %v893 = vadd.f32 %v748, %v892
        %v894 = vpop.f32.mrf.mxu0
        %895 = vmatprep.mubr.bf16.mxu0 0
        %896 = vmatmul.mubr.bf16.gmra.mxu0 %v825
        %v897 = vpop.f32.mrf.mxu0
        %v898 = vadd.f32 %v748, %v897
        %v899 = vpop.f32.mrf.mxu0
        %v900 = vpop.f32.mrf.mxu0
        %v901 = vadd.f32 %v748, %v900
        %v902 = vpop.f32.mrf.mxu0
        %903 = vmatprep.mubr.bf16.mxu0 0
        %904 = vmatmul.mubr.bf16.gmra.mxu0 %v828
        %v905 = vpop.f32.mrf.mxu0
        %v906 = vadd.f32 %v748, %v905
        %v907 = vpop.f32.mrf.mxu0
        %v908 = vpop.f32.mrf.mxu0
        %v909 = vadd.f32 %v748, %v908
        %v910 = vpop.f32.mrf.mxu0
        %911 = vmatprep.mubr.bf16.mxu0 0
        %912 = vmatmul.mubr.bf16.gmra.mxu0 %v831
        %v913 = vpop.f32.mrf.mxu0
        %v914 = vadd.f32 %v748, %v913
        %v915 = vpop.f32.mrf.mxu0
        %v916 = vpop.f32.mrf.mxu0
        %v917 = vadd.f32 %v748, %v916
        %v918 = vpop.f32.mrf.mxu0
        %919 = vmatprep.mubr.bf16.mxu0 0
        %920 = vmatmul.mubr.bf16.gmra.mxu0 %v834
        %v921 = vpop.f32.mrf.mxu0
        %v922 = vadd.f32 %v748, %v921
        %v923 = vpop.f32.mrf.mxu0
        %v924 = vpop.f32.mrf.mxu0
        %v925 = vadd.f32 %v748, %v924
        %v926 = vpop.f32.mrf.mxu0
        %927 = vmatprep.mubr.bf16.mxu0 0
        %928 = vmatmul.mubr.bf16.gmra.mxu0 %v837
        %v929 = vpop.f32.mrf.mxu0
        %v930 = vadd.f32 %v748, %v929
        %v931 = vpop.f32.mrf.mxu0
        %v932 = vpop.f32.mrf.mxu0
        %v933 = vadd.f32 %v748, %v932
        %v934 = vpop.f32.mrf.mxu0
        %935 = vdwg.mxu0
        %v936 = vmax.f32 %v874, 0.0
        %v937 = vmax.f32 %v877, 0.0
        %v938 = vmax.f32 %v882, 0.0
        %v939 = vmax.f32 %v885, 0.0
        %v940 = vmax.f32 %v890, 0.0
        %v941 = vmax.f32 %v893, 0.0
        %v942 = vmax.f32 %v898, 0.0
        %v943 = vmax.f32 %v901, 0.0
        %v944 = vmax.f32 %v906, 0.0
        %v945 = vmax.f32 %v909, 0.0
        %v946 = vmax.f32 %v914, 0.0
        %v947 = vmax.f32 %v917, 0.0
        %v948 = vmax.f32 %v922, 0.0
        %v949 = vmax.f32 %v925, 0.0
        %v950 = vmax.f32 %v930, 0.0
        %v951 = vmax.f32 %v933, 0.0
        %v952 = vpack.c.bf16 %v937, %v936
        %v953 = vpack.c.bf16 %v939, %v938
        %v954 = vpack.c.bf16 %v941, %v940
        %v955 = vpack.c.bf16 %v943, %v942
        %v956 = vpack.c.bf16 %v945, %v944
        %v957 = vpack.c.bf16 %v947, %v946
        %v958 = vpack.c.bf16 %v949, %v948
        %v959 = vpack.c.bf16 %v951, %v950
        %v960 = vld [vmem:[%s9] sm:$0xff]
        %v961 = vld [vmem:[%s9 + $0x8] sm:$0xff]
        %v962 = vld [vmem:[%s9 + $0x10] sm:$0xff]
        %v963 = vld [vmem:[%s9 + $0x18] sm:$0xff]
        %v964 = vld [vmem:[%s9 + $0x20] sm:$0xff]
        %v965 = vld [vmem:[%s9 + $0x28] sm:$0xff]
        %v966 = vld [vmem:[%s9 + $0x30] sm:$0xff]
        %v967 = vld [vmem:[%s9 + $0x38] sm:$0xff]
        %v968 = vld [vmem:[%s10] sm:$0x3]
        %v970 = vlaneseq
        %v971 = vshrl.u32 %v970, 7
        %v972 = vsub.s32 0, %v971
        %v973 = vrot.slane %v968, %v972
        %v974 = vlaneseq
        %v975 = vshrl.u32 %v974, 7
        %v976 = vsub.s32 1, %v975
        %v977 = vrot.slane %v968, %v976
        %v988 = vunpack.c.l.b16 %v960
        %v989 = vunpack.c.h.b16 %v960
        %v990 = vunpack.c.l.b16 %v961
        %v991 = vunpack.c.h.b16 %v961
        %v992 = vunpack.c.l.b16 %v962
        %v993 = vunpack.c.h.b16 %v962
        %v994 = vunpack.c.l.b16 %v963
        %v995 = vunpack.c.h.b16 %v963
        %v996 = vunpack.c.l.b16 %v964
        %v997 = vunpack.c.h.b16 %v964
        %v998 = vunpack.c.l.b16 %v965
        %v999 = vunpack.c.h.b16 %v965
        %v1000 = vunpack.c.l.b16 %v966
        %v1001 = vunpack.c.h.b16 %v966
        %v1002 = vunpack.c.l.b16 %v967
        %v1003 = vunpack.c.h.b16 %v967
        %v1004 = vpack.c.b16 %v990, %v988
        %v1005 = vpack.c.b16 %v991, %v989
        %v1006 = vpack.c.b16 %v994, %v992
        %v1007 = vpack.c.b16 %v995, %v993
        %v1008 = vpack.c.b16 %v998, %v996
        %v1009 = vpack.c.b16 %v999, %v997
        %v1010 = vpack.c.b16 %v1002, %v1000
        %v1011 = vpack.c.b16 %v1003, %v1001
        %v1021 = vsel %vm814, %v952, 0
        %v1024 = vsel %vm814, %v953, 0
        %v1027 = vsel %vm814, %v954, 0
        %v1030 = vsel %vm814, %v955, 0
        %v1033 = vsel %vm814, %v956, 0
        %v1036 = vsel %vm814, %v957, 0
        %v1039 = vsel %vm814, %v958, 0
        %v1042 = vsel %vm814, %v959, 0
        %1044 = vmatprep.subr.bf16.mxu0 0
        %1045 = vmatpush1.bf16.msra.mxu0 0
        %1046 = vmatprep.subr.bf16.mxu0 0
        %1047 = vmatpush1.bf16.msra.mxu0 0
        %1048 = vmatprep.subr.bf16.mxu0 0
        %1049 = vmatpush1.bf16.msra.mxu0 0
        %1050 = vmatprep.subr.bf16.mxu0 0
        %1051 = vmatpush1.bf16.msra.mxu0 0
        %1052 = vmatprep.subr.bf16.mxu0 %v1011
        %1053 = vmatpush1.bf16.msra.mxu0 %v1010
        %1054 = vmatprep.subr.bf16.mxu0 %v1009
        %1055 = vmatpush1.bf16.msra.mxu0 %v1008
        %1056 = vmatprep.subr.bf16.mxu0 %v1007
        %1057 = vmatpush1.bf16.msra.mxu0 %v1006
        %1058 = vmatprep.subr.bf16.mxu0 %v1005
        %1059 = vmatpush1.bf16.msra.mxu0 %v1004
        %1060 = vmatprep.subr.bf16.mxu0 0
        %1061 = vmatpush2.bf16.msra.mxu0 0
        %1062 = vmatprep.subr.bf16.mxu0 0
        %1063 = vmatpush2.bf16.msra.mxu0 0
        %1064 = vmatprep.subr.bf16.mxu0 0
        %1065 = vmatpush2.bf16.msra.mxu0 0
        %1066 = vmatprep.subr.bf16.mxu0 0
        %1067 = vmatpush2.bf16.msra.mxu0 0
        %1068 = vmatprep.subr.bf16.mxu0 0
        %1069 = vmatpush2.bf16.msra.mxu0 0
        %1070 = vmatprep.subr.bf16.mxu0 0
        %1071 = vmatpush2.bf16.msra.mxu0 0
        %1072 = vmatprep.subr.bf16.mxu0 0
        %1073 = vmatpush2.bf16.msra.mxu0 0
        %1074 = vmatprep.subr.bf16.mxu0 0
        %1075 = vmatpush2.bf16.msra.mxu0 0
        %1076 = vmatprep.mubr.bf16.mxu0 0
        %1077 = vmatmul.mubr.bf16.gmra.mxu0 %v1021
        %v1078 = vpop.f32.mrf.mxu0
        %v1079 = vadd.f32 %v973, %v1078
        %v1080 = vpop.f32.mrf.mxu0
        %v1081 = vadd.f32 %v977, %v1080
        %v1082 = vpop.f32.mrf.mxu0
        %v1083 = vadd.f32 %v973, %v1082
        %v1084 = vpop.f32.mrf.mxu0
        %v1085 = vadd.f32 %v977, %v1084
        %1086 = vmatprep.mubr.bf16.mxu0 0
        %1087 = vmatmul.mubr.bf16.gmra.mxu0 %v1024
        %v1088 = vpop.f32.mrf.mxu0
        %v1089 = vadd.f32 %v973, %v1088
        %v1090 = vpop.f32.mrf.mxu0
        %v1091 = vadd.f32 %v977, %v1090
        %v1092 = vpop.f32.mrf.mxu0
        %v1093 = vadd.f32 %v973, %v1092
        %v1094 = vpop.f32.mrf.mxu0
        %v1095 = vadd.f32 %v977, %v1094
        %1096 = vmatprep.mubr.bf16.mxu0 0
        %1097 = vmatmul.mubr.bf16.gmra.mxu0 %v1027
        %v1098 = vpop.f32.mrf.mxu0
        %v1099 = vadd.f32 %v973, %v1098
        %v1100 = vpop.f32.mrf.mxu0
        %v1101 = vadd.f32 %v977, %v1100
        %v1102 = vpop.f32.mrf.mxu0
        %v1103 = vadd.f32 %v973, %v1102
        %v1104 = vpop.f32.mrf.mxu0
        %v1105 = vadd.f32 %v977, %v1104
        %1106 = vmatprep.mubr.bf16.mxu0 0
        %1107 = vmatmul.mubr.bf16.gmra.mxu0 %v1030
        %v1108 = vpop.f32.mrf.mxu0
        %v1109 = vadd.f32 %v973, %v1108
        %v1110 = vpop.f32.mrf.mxu0
        %v1111 = vadd.f32 %v977, %v1110
        %v1112 = vpop.f32.mrf.mxu0
        %v1113 = vadd.f32 %v973, %v1112
        %v1114 = vpop.f32.mrf.mxu0
        %v1115 = vadd.f32 %v977, %v1114
        %1116 = vmatprep.mubr.bf16.mxu0 0
        %1117 = vmatmul.mubr.bf16.gmra.mxu0 %v1033
        %v1118 = vpop.f32.mrf.mxu0
        %v1119 = vadd.f32 %v973, %v1118
        %v1120 = vpop.f32.mrf.mxu0
        %v1121 = vadd.f32 %v977, %v1120
        %v1122 = vpop.f32.mrf.mxu0
        %v1123 = vadd.f32 %v973, %v1122
        %v1124 = vpop.f32.mrf.mxu0
        %v1125 = vadd.f32 %v977, %v1124
        %1126 = vmatprep.mubr.bf16.mxu0 0
        %1127 = vmatmul.mubr.bf16.gmra.mxu0 %v1036
        %v1128 = vpop.f32.mrf.mxu0
        %v1129 = vadd.f32 %v973, %v1128
        %v1130 = vpop.f32.mrf.mxu0
        %v1131 = vadd.f32 %v977, %v1130
        %v1132 = vpop.f32.mrf.mxu0
        %v1133 = vadd.f32 %v973, %v1132
        %v1134 = vpop.f32.mrf.mxu0
        %v1135 = vadd.f32 %v977, %v1134
        %1136 = vmatprep.mubr.bf16.mxu0 0
        %1137 = vmatmul.mubr.bf16.gmra.mxu0 %v1039
        %v1138 = vpop.f32.mrf.mxu0
        %v1139 = vadd.f32 %v973, %v1138
        %v1140 = vpop.f32.mrf.mxu0
        %v1141 = vadd.f32 %v977, %v1140
        %v1142 = vpop.f32.mrf.mxu0
        %v1143 = vadd.f32 %v973, %v1142
        %v1144 = vpop.f32.mrf.mxu0
        %v1145 = vadd.f32 %v977, %v1144
        %1146 = vmatprep.mubr.bf16.mxu0 0
        %1147 = vmatmul.mubr.bf16.gmra.mxu0 %v1042
        %v1148 = vpop.f32.mrf.mxu0
        %v1149 = vadd.f32 %v973, %v1148
        %v1150 = vpop.f32.mrf.mxu0
        %v1151 = vadd.f32 %v977, %v1150
        %v1152 = vpop.f32.mrf.mxu0
        %v1153 = vadd.f32 %v973, %v1152
        %v1154 = vpop.f32.mrf.mxu0
        %v1155 = vadd.f32 %v977, %v1154
        %1156 = vdwg.mxu0
        %v1157 = vmul.f32 %v1081, 0.5
        %v1158 = vmul.f32 %v1085, 0.5
        %v1159 = vmul.f32 %v1091, 0.5
        %v1160 = vmul.f32 %v1095, 0.5
        %v1161 = vmul.f32 %v1101, 0.5
        %v1162 = vmul.f32 %v1105, 0.5
        %v1163 = vmul.f32 %v1111, 0.5
        %v1164 = vmul.f32 %v1115, 0.5
        %v1165 = vmul.f32 %v1121, 0.5
        %v1166 = vmul.f32 %v1125, 0.5
        %v1167 = vmul.f32 %v1131, 0.5
        %v1168 = vmul.f32 %v1135, 0.5
        %v1169 = vmul.f32 %v1141, 0.5
        %v1170 = vmul.f32 %v1145, 0.5
        %v1171 = vmul.f32 %v1151, 0.5
        %v1172 = vmul.f32 %v1155, 0.5
        %v1173 = vtanh.pop %v1157
        %v1174 = vtanh.pop %v1158
        %v1175 = vtanh.pop %v1159
        %v1176 = vtanh.pop %v1160
        %v1177 = vtanh.pop %v1161
        %v1178 = vtanh.pop %v1162
        %v1179 = vtanh.pop %v1163
        %v1180 = vtanh.pop %v1164
        %v1181 = vtanh.pop %v1165
        %v1182 = vtanh.pop %v1166
        %v1183 = vtanh.pop %v1167
        %v1184 = vtanh.pop %v1168
        %v1185 = vtanh.pop %v1169
        %v1186 = vtanh.pop %v1170
        %v1187 = vtanh.pop %v1171
        %v1188 = vtanh.pop %v1172
        %v1189 = vadd.f32 %v1173, 1.0
        %v1190 = vadd.f32 %v1174, 1.0
        %v1191 = vadd.f32 %v1175, 1.0
        %v1192 = vadd.f32 %v1176, 1.0
        %v1193 = vadd.f32 %v1177, 1.0
        %v1194 = vadd.f32 %v1178, 1.0
        %v1195 = vadd.f32 %v1179, 1.0
        %v1196 = vadd.f32 %v1180, 1.0
        %v1197 = vadd.f32 %v1181, 1.0
        %v1198 = vadd.f32 %v1182, 1.0
        %v1199 = vadd.f32 %v1183, 1.0
        %v1200 = vadd.f32 %v1184, 1.0
        %v1201 = vadd.f32 %v1185, 1.0
        %v1202 = vadd.f32 %v1186, 1.0
        %v1203 = vadd.f32 %v1187, 1.0
        %v1204 = vadd.f32 %v1188, 1.0
        %v1205 = vmul.f32 %v1189, 0.5
        %v1206 = vmul.f32 %v1190, 0.5
        %v1207 = vmul.f32 %v1191, 0.5
        %v1208 = vmul.f32 %v1192, 0.5
        %v1209 = vmul.f32 %v1193, 0.5
        %v1210 = vmul.f32 %v1194, 0.5
        %v1211 = vmul.f32 %v1195, 0.5
        %v1212 = vmul.f32 %v1196, 0.5
        %v1213 = vmul.f32 %v1197, 0.5
        %v1214 = vmul.f32 %v1198, 0.5
        %v1215 = vmul.f32 %v1199, 0.5
        %v1216 = vmul.f32 %v1200, 0.5
        %v1217 = vmul.f32 %v1201, 0.5
        %v1218 = vmul.f32 %v1202, 0.5
        %v1219 = vmul.f32 %v1203, 0.5
        %v1220 = vmul.f32 %v1204, 0.5
        %v1221 = vmul.f32 %v1079, %v1205
        %v1222 = vmul.f32 %v1083, %v1206
        %v1223 = vmul.f32 %v1089, %v1207
        %v1224 = vmul.f32 %v1093, %v1208
        %v1225 = vmul.f32 %v1099, %v1209
        %v1226 = vmul.f32 %v1103, %v1210
        %v1227 = vmul.f32 %v1109, %v1211
        %v1228 = vmul.f32 %v1113, %v1212
        %v1229 = vmul.f32 %v1119, %v1213
        %v1230 = vmul.f32 %v1123, %v1214
        %v1231 = vmul.f32 %v1129, %v1215
        %v1232 = vmul.f32 %v1133, %v1216
        %v1233 = vmul.f32 %v1139, %v1217
        %v1234 = vmul.f32 %v1143, %v1218
        %v1235 = vmul.f32 %v1149, %v1219
        %v1236 = vmul.f32 %v1153, %v1220
        %v1237 = vld [vmem:[%s694] sm:$0xf]
        %v1238 = vld [vmem:[%s694 + $0x4] sm:$0xf]
        %v1239 = vld [vmem:[%s694 + $0x8] sm:$0xf]
        %v1240 = vld [vmem:[%s694 + $0xc] sm:$0xf]
        %v1241 = vld [vmem:[%s694 + $0x10] sm:$0xf]
        %v1242 = vld [vmem:[%s694 + $0x14] sm:$0xf]
        %v1243 = vld [vmem:[%s694 + $0x18] sm:$0xf]
        %v1244 = vld [vmem:[%s694 + $0x1c] sm:$0xf]
        %v1245 = vld [vmem:[%s694 + $0x20] sm:$0xf]
        %v1246 = vld [vmem:[%s694 + $0x24] sm:$0xf]
        %v1247 = vld [vmem:[%s694 + $0x28] sm:$0xf]
        %v1248 = vld [vmem:[%s694 + $0x2c] sm:$0xf]
        %v1249 = vld [vmem:[%s694 + $0x30] sm:$0xf]
        %v1250 = vld [vmem:[%s694 + $0x34] sm:$0xf]
        %v1251 = vld [vmem:[%s694 + $0x38] sm:$0xf]
        %v1252 = vld [vmem:[%s694 + $0x3c] sm:$0xf]
        %v1253 = vld [vmem:[%s11] sm:$0xf]
        %v1254 = vld [vmem:[%s11 + $0x4] sm:$0xf]
        %v1255 = vld [vmem:[%s11 + $0x8] sm:$0xf]
        %v1256 = vld [vmem:[%s11 + $0xc] sm:$0xf]
        %v1257 = vld [vmem:[%s11 + $0x10] sm:$0xf]
        %v1258 = vld [vmem:[%s11 + $0x14] sm:$0xf]
        %v1259 = vld [vmem:[%s11 + $0x18] sm:$0xf]
        %v1260 = vld [vmem:[%s11 + $0x1c] sm:$0xf]
        %v1261 = vld [vmem:[%s11 + $0x20] sm:$0xf]
        %v1262 = vld [vmem:[%s11 + $0x24] sm:$0xf]
        %v1263 = vld [vmem:[%s11 + $0x28] sm:$0xf]
        %v1264 = vld [vmem:[%s11 + $0x2c] sm:$0xf]
        %v1265 = vld [vmem:[%s12] sm:$0x1]
        %v1267 = vlaneseq
        %v1268 = vshrl.u32 %v1267, 7
        %v1269 = vsub.s32 0, %v1268
        %v1270 = vrot.slane %v1265, %v1269
        %v1288 = vunpack.c.l.b16 %v1237
        %v1289 = vunpack.c.l.b16 %v1238
        %v1290 = vunpack.c.l.b16 %v1239
        %v1291 = vunpack.c.l.b16 %v1240
        %v1292 = vunpack.c.l.b16 %v1241
        %v1293 = vunpack.c.l.b16 %v1242
        %v1294 = vunpack.c.l.b16 %v1243
        %v1295 = vunpack.c.l.b16 %v1244
        %v1296 = vunpack.c.l.b16 %v1245
        %v1297 = vunpack.c.l.b16 %v1246
        %v1298 = vunpack.c.l.b16 %v1247
        %v1299 = vunpack.c.l.b16 %v1248
        %v1300 = vunpack.c.l.b16 %v1249
        %v1301 = vunpack.c.l.b16 %v1250
        %v1302 = vunpack.c.l.b16 %v1251
        %v1303 = vunpack.c.l.b16 %v1252
        %v1304 = vpack.c.b16 %v1289, %v1288
        %v1305 = vpack.c.b16 %v1291, %v1290
        %v1306 = vpack.c.b16 %v1293, %v1292
        %v1307 = vpack.c.b16 %v1295, %v1294
        %v1308 = vpack.c.b16 %v1297, %v1296
        %v1309 = vpack.c.b16 %v1299, %v1298
        %v1310 = vpack.c.b16 %v1301, %v1300
        %v1311 = vpack.c.b16 %v1303, %v1302
        %v1324 = vunpack.c.l.b16 %v1253
        %v1325 = vunpack.c.l.b16 %v1254
        %v1326 = vunpack.c.l.b16 %v1255
        %v1327 = vunpack.c.l.b16 %v1256
        %v1328 = vunpack.c.l.b16 %v1257
        %v1329 = vunpack.c.l.b16 %v1258
        %v1330 = vunpack.c.l.b16 %v1259
        %v1331 = vunpack.c.l.b16 %v1260
        %v1332 = vunpack.c.l.b16 %v1261
        %v1333 = vunpack.c.l.b16 %v1262
        %v1334 = vunpack.c.l.b16 %v1263
        %v1335 = vunpack.c.l.b16 %v1264
        %v1336 = vpack.c.b16 %v1325, %v1324
        %v1337 = vpack.c.b16 %v1327, %v1326
        %v1338 = vpack.c.b16 %v1329, %v1328
        %v1339 = vpack.c.b16 %v1331, %v1330
        %v1340 = vpack.c.b16 %v1333, %v1332
        %v1341 = vpack.c.b16 %v1335, %v1334
        %vm1348 = vcmask 785408
        %v1350 = vsel %vm1348, %v1304, 0
        %v1353 = vsel %vm1348, %v1305, 0
        %v1356 = vsel %vm1348, %v1306, 0
        %v1359 = vsel %vm1348, %v1307, 0
        %v1362 = vsel %vm1348, %v1308, 0
        %v1365 = vsel %vm1348, %v1309, 0
        %v1368 = vsel %vm1348, %v1310, 0
        %v1371 = vsel %vm1348, %v1311, 0
        %1373 = vmatprep.subr.bf16.mxu0 0
        %1374 = vmatpush1.bf16.msra.mxu0 0
        %1375 = vmatprep.subr.bf16.mxu0 0
        %1376 = vmatpush1.bf16.msra.mxu0 0
        %1377 = vmatprep.subr.bf16.mxu0 0
        %1378 = vmatpush1.bf16.msra.mxu0 %v1341
        %1379 = vmatprep.subr.bf16.mxu0 0
        %1380 = vmatpush1.bf16.msra.mxu0 %v1340
        %1381 = vmatprep.subr.bf16.mxu0 0
        %1382 = vmatpush1.bf16.msra.mxu0 %v1339
        %1383 = vmatprep.subr.bf16.mxu0 0
        %1384 = vmatpush1.bf16.msra.mxu0 %v1338
        %1385 = vmatprep.subr.bf16.mxu0 0
        %1386 = vmatpush1.bf16.msra.mxu0 %v1337
        %1387 = vmatprep.subr.bf16.mxu0 0
        %1388 = vmatpush1.bf16.msra.mxu0 %v1336
        %1389 = vmatprep.subr.bf16.mxu0 0
        %1390 = vmatpush2.bf16.msra.mxu0 0
        %1391 = vmatprep.subr.bf16.mxu0 0
        %1392 = vmatpush2.bf16.msra.mxu0 0
        %1393 = vmatprep.subr.bf16.mxu0 0
        %1394 = vmatpush2.bf16.msra.mxu0 0
        %1395 = vmatprep.subr.bf16.mxu0 0
        %1396 = vmatpush2.bf16.msra.mxu0 0
        %1397 = vmatprep.subr.bf16.mxu0 0
        %1398 = vmatpush2.bf16.msra.mxu0 0
        %1399 = vmatprep.subr.bf16.mxu0 0
        %1400 = vmatpush2.bf16.msra.mxu0 0
        %1401 = vmatprep.subr.bf16.mxu0 0
        %1402 = vmatpush2.bf16.msra.mxu0 0
        %1403 = vmatprep.subr.bf16.mxu0 0
        %1404 = vmatpush2.bf16.msra.mxu0 0
        %1405 = vmatprep.mubr.bf16.mxu0 0
        %1406 = vmatmul.mubr.bf16.gmra.mxu0 %v1350
        %v1407 = vpop.f32.mrf.mxu0
        %v1408 = vadd.f32 %v1270, %v1407
        %v1409 = vpop.f32.mrf.mxu0
        %v1410 = vpop.f32.mrf.mxu0
        %v1411 = vadd.f32 %v1270, %v1410
        %v1412 = vpop.f32.mrf.mxu0
        %1413 = vmatprep.mubr.bf16.mxu0 0
        %1414 = vmatmul.mubr.bf16.gmra.mxu0 %v1353
        %v1415 = vpop.f32.mrf.mxu0
        %v1416 = vadd.f32 %v1270, %v1415
        %v1417 = vpop.f32.mrf.mxu0
        %v1418 = vpop.f32.mrf.mxu0
        %v1419 = vadd.f32 %v1270, %v1418
        %v1420 = vpop.f32.mrf.mxu0
        %1421 = vmatprep.mubr.bf16.mxu0 0
        %1422 = vmatmul.mubr.bf16.gmra.mxu0 %v1356
        %v1423 = vpop.f32.mrf.mxu0
        %v1424 = vadd.f32 %v1270, %v1423
        %v1425 = vpop.f32.mrf.mxu0
        %v1426 = vpop.f32.mrf.mxu0
        %v1427 = vadd.f32 %v1270, %v1426
        %v1428 = vpop.f32.mrf.mxu0
        %1429 = vmatprep.mubr.bf16.mxu0 0
        %1430 = vmatmul.mubr.bf16.gmra.mxu0 %v1359
        %v1431 = vpop.f32.mrf.mxu0
        %v1432 = vadd.f32 %v1270, %v1431
        %v1433 = vpop.f32.mrf.mxu0
        %v1434 = vpop.f32.mrf.mxu0
        %v1435 = vadd.f32 %v1270, %v1434
        %v1436 = vpop.f32.mrf.mxu0
        %1437 = vmatprep.mubr.bf16.mxu0 0
        %1438 = vmatmul.mubr.bf16.gmra.mxu0 %v1362
        %v1439 = vpop.f32.mrf.mxu0
        %v1440 = vadd.f32 %v1270, %v1439
        %v1441 = vpop.f32.mrf.mxu0
        %v1442 = vpop.f32.mrf.mxu0
        %v1443 = vadd.f32 %v1270, %v1442
        %v1444 = vpop.f32.mrf.mxu0
        %1445 = vmatprep.mubr.bf16.mxu0 0
        %1446 = vmatmul.mubr.bf16.gmra.mxu0 %v1365
        %v1447 = vpop.f32.mrf.mxu0
        %v1448 = vadd.f32 %v1270, %v1447
        %v1449 = vpop.f32.mrf.mxu0
        %v1450 = vpop.f32.mrf.mxu0
        %v1451 = vadd.f32 %v1270, %v1450
        %v1452 = vpop.f32.mrf.mxu0
        %1453 = vmatprep.mubr.bf16.mxu0 0
        %1454 = vmatmul.mubr.bf16.gmra.mxu0 %v1368
        %v1455 = vpop.f32.mrf.mxu0
        %v1456 = vadd.f32 %v1270, %v1455
        %v1457 = vpop.f32.mrf.mxu0
        %v1458 = vpop.f32.mrf.mxu0
        %v1459 = vadd.f32 %v1270, %v1458
        %v1460 = vpop.f32.mrf.mxu0
        %1461 = vmatprep.mubr.bf16.mxu0 0
        %1462 = vmatmul.mubr.bf16.gmra.mxu0 %v1371
        %v1463 = vpop.f32.mrf.mxu0
        %v1464 = vadd.f32 %v1270, %v1463
        %v1465 = vpop.f32.mrf.mxu0
        %v1466 = vpop.f32.mrf.mxu0
        %v1467 = vadd.f32 %v1270, %v1466
        %v1468 = vpop.f32.mrf.mxu0
        %1469 = vdwg.mxu0
        %v1470 = vmax.f32 %v1408, 0.0
        %v1471 = vmax.f32 %v1411, 0.0
        %v1472 = vmax.f32 %v1416, 0.0
        %v1473 = vmax.f32 %v1419, 0.0
        %v1474 = vmax.f32 %v1424, 0.0
        %v1475 = vmax.f32 %v1427, 0.0
        %v1476 = vmax.f32 %v1432, 0.0
        %v1477 = vmax.f32 %v1435, 0.0
        %v1478 = vmax.f32 %v1440, 0.0
        %v1479 = vmax.f32 %v1443, 0.0
        %v1480 = vmax.f32 %v1448, 0.0
        %v1481 = vmax.f32 %v1451, 0.0
        %v1482 = vmax.f32 %v1456, 0.0
        %v1483 = vmax.f32 %v1459, 0.0
        %v1484 = vmax.f32 %v1464, 0.0
        %v1485 = vmax.f32 %v1467, 0.0
        %v1486 = vpack.c.bf16 %v1471, %v1470
        %v1487 = vpack.c.bf16 %v1473, %v1472
        %v1488 = vpack.c.bf16 %v1475, %v1474
        %v1489 = vpack.c.bf16 %v1477, %v1476
        %v1490 = vpack.c.bf16 %v1479, %v1478
        %v1491 = vpack.c.bf16 %v1481, %v1480
        %v1492 = vpack.c.bf16 %v1483, %v1482
        %v1493 = vpack.c.bf16 %v1485, %v1484
        %v1494 = vld [vmem:[%s13] sm:$0xff]
        %v1495 = vld [vmem:[%s13 + $0x8] sm:$0xff]
        %v1496 = vld [vmem:[%s13 + $0x10] sm:$0xff]
        %v1497 = vld [vmem:[%s13 + $0x18] sm:$0xff]
        %v1498 = vld [vmem:[%s13 + $0x20] sm:$0xff]
        %v1499 = vld [vmem:[%s13 + $0x28] sm:$0xff]
        %v1500 = vld [vmem:[%s13 + $0x30] sm:$0xff]
        %v1501 = vld [vmem:[%s13 + $0x38] sm:$0xff]
        %v1502 = vld [vmem:[%s14] sm:$0x3]
        %v1504 = vlaneseq
        %v1505 = vshrl.u32 %v1504, 7
        %v1506 = vsub.s32 0, %v1505
        %v1507 = vrot.slane %v1502, %v1506
        %v1508 = vlaneseq
        %v1509 = vshrl.u32 %v1508, 7
        %v1510 = vsub.s32 1, %v1509
        %v1511 = vrot.slane %v1502, %v1510
        %v1522 = vunpack.c.l.b16 %v1494
        %v1523 = vunpack.c.h.b16 %v1494
        %v1524 = vunpack.c.l.b16 %v1495
        %v1525 = vunpack.c.h.b16 %v1495
        %v1526 = vunpack.c.l.b16 %v1496
        %v1527 = vunpack.c.h.b16 %v1496
        %v1528 = vunpack.c.l.b16 %v1497
        %v1529 = vunpack.c.h.b16 %v1497
        %v1530 = vunpack.c.l.b16 %v1498
        %v1531 = vunpack.c.h.b16 %v1498
        %v1532 = vunpack.c.l.b16 %v1499
        %v1533 = vunpack.c.h.b16 %v1499
        %v1534 = vunpack.c.l.b16 %v1500
        %v1535 = vunpack.c.h.b16 %v1500
        %v1536 = vunpack.c.l.b16 %v1501
        %v1537 = vunpack.c.h.b16 %v1501
        %v1538 = vpack.c.b16 %v1524, %v1522
        %v1539 = vpack.c.b16 %v1525, %v1523
        %v1540 = vpack.c.b16 %v1528, %v1526
        %v1541 = vpack.c.b16 %v1529, %v1527
        %v1542 = vpack.c.b16 %v1532, %v1530
        %v1543 = vpack.c.b16 %v1533, %v1531
        %v1544 = vpack.c.b16 %v1536, %v1534
        %v1545 = vpack.c.b16 %v1537, %v1535
        %v1555 = vsel %vm814, %v1486, 0
        %v1558 = vsel %vm814, %v1487, 0
        %v1561 = vsel %vm814, %v1488, 0
        %v1564 = vsel %vm814, %v1489, 0
        %v1567 = vsel %vm814, %v1490, 0
        %v1570 = vsel %vm814, %v1491, 0
        %v1573 = vsel %vm814, %v1492, 0
        %v1576 = vsel %vm814, %v1493, 0
        %1578 = vmatprep.subr.bf16.mxu0 0
        %1579 = vmatpush1.bf16.msra.mxu0 0
        %1580 = vmatprep.subr.bf16.mxu0 0
        %1581 = vmatpush1.bf16.msra.mxu0 0
        %1582 = vmatprep.subr.bf16.mxu0 0
        %1583 = vmatpush1.bf16.msra.mxu0 0
        %1584 = vmatprep.subr.bf16.mxu0 0
        %1585 = vmatpush1.bf16.msra.mxu0 0
        %1586 = vmatprep.subr.bf16.mxu0 %v1545
        %1587 = vmatpush1.bf16.msra.mxu0 %v1544
        %1588 = vmatprep.subr.bf16.mxu0 %v1543
        %1589 = vmatpush1.bf16.msra.mxu0 %v1542
        %1590 = vmatprep.subr.bf16.mxu0 %v1541
        %1591 = vmatpush1.bf16.msra.mxu0 %v1540
        %1592 = vmatprep.subr.bf16.mxu0 %v1539
        %1593 = vmatpush1.bf16.msra.mxu0 %v1538
        %1594 = vmatprep.subr.bf16.mxu0 0
        %1595 = vmatpush2.bf16.msra.mxu0 0
        %1596 = vmatprep.subr.bf16.mxu0 0
        %1597 = vmatpush2.bf16.msra.mxu0 0
        %1598 = vmatprep.subr.bf16.mxu0 0
        %1599 = vmatpush2.bf16.msra.mxu0 0
        %1600 = vmatprep.subr.bf16.mxu0 0
        %1601 = vmatpush2.bf16.msra.mxu0 0
        %1602 = vmatprep.subr.bf16.mxu0 0
        %1603 = vmatpush2.bf16.msra.mxu0 0
        %1604 = vmatprep.subr.bf16.mxu0 0
        %1605 = vmatpush2.bf16.msra.mxu0 0
        %1606 = vmatprep.subr.bf16.mxu0 0
        %1607 = vmatpush2.bf16.msra.mxu0 0
        %1608 = vmatprep.subr.bf16.mxu0 0
        %1609 = vmatpush2.bf16.msra.mxu0 0
        %1610 = vmatprep.mubr.bf16.mxu0 0
        %1611 = vmatmul.mubr.bf16.gmra.mxu0 %v1555
        %v1612 = vpop.f32.mrf.mxu0
        %v1613 = vadd.f32 %v1507, %v1612
        %v1614 = vpop.f32.mrf.mxu0
        %v1615 = vadd.f32 %v1511, %v1614
        %v1616 = vpop.f32.mrf.mxu0
        %v1617 = vadd.f32 %v1507, %v1616
        %v1618 = vpop.f32.mrf.mxu0
        %v1619 = vadd.f32 %v1511, %v1618
        %1620 = vmatprep.mubr.bf16.mxu0 0
        %1621 = vmatmul.mubr.bf16.gmra.mxu0 %v1558
        %v1622 = vpop.f32.mrf.mxu0
        %v1623 = vadd.f32 %v1507, %v1622
        %v1624 = vpop.f32.mrf.mxu0
        %v1625 = vadd.f32 %v1511, %v1624
        %v1626 = vpop.f32.mrf.mxu0
        %v1627 = vadd.f32 %v1507, %v1626
        %v1628 = vpop.f32.mrf.mxu0
        %v1629 = vadd.f32 %v1511, %v1628
        %1630 = vmatprep.mubr.bf16.mxu0 0
        %1631 = vmatmul.mubr.bf16.gmra.mxu0 %v1561
        %v1632 = vpop.f32.mrf.mxu0
        %v1633 = vadd.f32 %v1507, %v1632
        %v1634 = vpop.f32.mrf.mxu0
        %v1635 = vadd.f32 %v1511, %v1634
        %v1636 = vpop.f32.mrf.mxu0
        %v1637 = vadd.f32 %v1507, %v1636
        %v1638 = vpop.f32.mrf.mxu0
        %v1639 = vadd.f32 %v1511, %v1638
        %1640 = vmatprep.mubr.bf16.mxu0 0
        %1641 = vmatmul.mubr.bf16.gmra.mxu0 %v1564
        %v1642 = vpop.f32.mrf.mxu0
        %v1643 = vadd.f32 %v1507, %v1642
        %v1644 = vpop.f32.mrf.mxu0
        %v1645 = vadd.f32 %v1511, %v1644
        %v1646 = vpop.f32.mrf.mxu0
        %v1647 = vadd.f32 %v1507, %v1646
        %v1648 = vpop.f32.mrf.mxu0
        %v1649 = vadd.f32 %v1511, %v1648
        %1650 = vmatprep.mubr.bf16.mxu0 0
        %1651 = vmatmul.mubr.bf16.gmra.mxu0 %v1567
        %v1652 = vpop.f32.mrf.mxu0
        %v1653 = vadd.f32 %v1507, %v1652
        %v1654 = vpop.f32.mrf.mxu0
        %v1655 = vadd.f32 %v1511, %v1654
        %v1656 = vpop.f32.mrf.mxu0
        %v1657 = vadd.f32 %v1507, %v1656
        %v1658 = vpop.f32.mrf.mxu0
        %v1659 = vadd.f32 %v1511, %v1658
        %1660 = vmatprep.mubr.bf16.mxu0 0
        %1661 = vmatmul.mubr.bf16.gmra.mxu0 %v1570
        %v1662 = vpop.f32.mrf.mxu0
        %v1663 = vadd.f32 %v1507, %v1662
        %v1664 = vpop.f32.mrf.mxu0
        %v1665 = vadd.f32 %v1511, %v1664
        %v1666 = vpop.f32.mrf.mxu0
        %v1667 = vadd.f32 %v1507, %v1666
        %v1668 = vpop.f32.mrf.mxu0
        %v1669 = vadd.f32 %v1511, %v1668
        %1670 = vmatprep.mubr.bf16.mxu0 0
        %1671 = vmatmul.mubr.bf16.gmra.mxu0 %v1573
        %v1672 = vpop.f32.mrf.mxu0
        %v1673 = vadd.f32 %v1507, %v1672
        %v1674 = vpop.f32.mrf.mxu0
        %v1675 = vadd.f32 %v1511, %v1674
        %v1676 = vpop.f32.mrf.mxu0
        %v1677 = vadd.f32 %v1507, %v1676
        %v1678 = vpop.f32.mrf.mxu0
        %v1679 = vadd.f32 %v1511, %v1678
        %1680 = vmatprep.mubr.bf16.mxu0 0
        %1681 = vmatmul.mubr.bf16.gmra.mxu0 %v1576
        %v1682 = vpop.f32.mrf.mxu0
        %v1683 = vadd.f32 %v1507, %v1682
        %v1684 = vpop.f32.mrf.mxu0
        %v1685 = vadd.f32 %v1511, %v1684
        %v1686 = vpop.f32.mrf.mxu0
        %v1687 = vadd.f32 %v1507, %v1686
        %v1688 = vpop.f32.mrf.mxu0
        %v1689 = vadd.f32 %v1511, %v1688
        %1690 = vdwg.mxu0
        %v1691 = vmul.f32 %v1615, 0.5
        %v1692 = vmul.f32 %v1619, 0.5
        %v1693 = vmul.f32 %v1625, 0.5
        %v1694 = vmul.f32 %v1629, 0.5
        %v1695 = vmul.f32 %v1635, 0.5
        %v1696 = vmul.f32 %v1639, 0.5
        %v1697 = vmul.f32 %v1645, 0.5
        %v1698 = vmul.f32 %v1649, 0.5
        %v1699 = vmul.f32 %v1655, 0.5
        %v1700 = vmul.f32 %v1659, 0.5
        %v1701 = vmul.f32 %v1665, 0.5
        %v1702 = vmul.f32 %v1669, 0.5
        %v1703 = vmul.f32 %v1675, 0.5
        %v1704 = vmul.f32 %v1679, 0.5
        %v1705 = vmul.f32 %v1685, 0.5
        %v1706 = vmul.f32 %v1689, 0.5
        %v1707 = vtanh.pop %v1691
        %v1708 = vtanh.pop %v1692
        %v1709 = vtanh.pop %v1693
        %v1710 = vtanh.pop %v1694
        %v1711 = vtanh.pop %v1695
        %v1712 = vtanh.pop %v1696
        %v1713 = vtanh.pop %v1697
        %v1714 = vtanh.pop %v1698
        %v1715 = vtanh.pop %v1699
        %v1716 = vtanh.pop %v1700
        %v1717 = vtanh.pop %v1701
        %v1718 = vtanh.pop %v1702
        %v1719 = vtanh.pop %v1703
        %v1720 = vtanh.pop %v1704
        %v1721 = vtanh.pop %v1705
        %v1722 = vtanh.pop %v1706
        %v1723 = vadd.f32 %v1707, 1.0
        %v1724 = vadd.f32 %v1708, 1.0
        %v1725 = vadd.f32 %v1709, 1.0
        %v1726 = vadd.f32 %v1710, 1.0
        %v1727 = vadd.f32 %v1711, 1.0
        %v1728 = vadd.f32 %v1712, 1.0
        %v1729 = vadd.f32 %v1713, 1.0
        %v1730 = vadd.f32 %v1714, 1.0
        %v1731 = vadd.f32 %v1715, 1.0
        %v1732 = vadd.f32 %v1716, 1.0
        %v1733 = vadd.f32 %v1717, 1.0
        %v1734 = vadd.f32 %v1718, 1.0
        %v1735 = vadd.f32 %v1719, 1.0
        %v1736 = vadd.f32 %v1720, 1.0
        %v1737 = vadd.f32 %v1721, 1.0
        %v1738 = vadd.f32 %v1722, 1.0
        %v1739 = vmul.f32 %v1723, 0.5
        %v1740 = vmul.f32 %v1724, 0.5
        %v1741 = vmul.f32 %v1725, 0.5
        %v1742 = vmul.f32 %v1726, 0.5
        %v1743 = vmul.f32 %v1727, 0.5
        %v1744 = vmul.f32 %v1728, 0.5
        %v1745 = vmul.f32 %v1729, 0.5
        %v1746 = vmul.f32 %v1730, 0.5
        %v1747 = vmul.f32 %v1731, 0.5
        %v1748 = vmul.f32 %v1732, 0.5
        %v1749 = vmul.f32 %v1733, 0.5
        %v1750 = vmul.f32 %v1734, 0.5
        %v1751 = vmul.f32 %v1735, 0.5
        %v1752 = vmul.f32 %v1736, 0.5
        %v1753 = vmul.f32 %v1737, 0.5
        %v1754 = vmul.f32 %v1738, 0.5
        %v1755 = vmul.f32 %v1613, %v1739
        %v1756 = vmul.f32 %v1617, %v1740
        %v1757 = vmul.f32 %v1623, %v1741
        %v1758 = vmul.f32 %v1627, %v1742
        %v1759 = vmul.f32 %v1633, %v1743
        %v1760 = vmul.f32 %v1637, %v1744
        %v1761 = vmul.f32 %v1643, %v1745
        %v1762 = vmul.f32 %v1647, %v1746
        %v1763 = vmul.f32 %v1653, %v1747
        %v1764 = vmul.f32 %v1657, %v1748
        %v1765 = vmul.f32 %v1663, %v1749
        %v1766 = vmul.f32 %v1667, %v1750
        %v1767 = vmul.f32 %v1673, %v1751
        %v1768 = vmul.f32 %v1677, %v1752
        %v1769 = vmul.f32 %v1683, %v1753
        %v1770 = vmul.f32 %v1687, %v1754
        %v1771 = vld [vmem:[%s699] sm:$0x3]
        %v1772 = vld [vmem:[%s704] sm:$0xff]
        %v1773 = vld [vmem:[%s704 + $0x8] sm:$0xff]
        %v1774 = vld [vmem:[%s704 + $0x10] sm:$0xff]
        %v1775 = vld [vmem:[%s704 + $0x18] sm:$0xff]
        %v1776 = vld [vmem:[%s704 + $0x20] sm:$0xff]
        %v1777 = vld [vmem:[%s704 + $0x28] sm:$0xff]
        %v1778 = vld [vmem:[%s704 + $0x30] sm:$0xff]
        %v1779 = vld [vmem:[%s704 + $0x38] sm:$0xff]
        %v1780 = vld [vmem:[%s704 + $0x40] sm:$0xff]
        %v1781 = vld [vmem:[%s704 + $0x48] sm:$0xff]
        %v1782 = vld [vmem:[%s704 + $0x50] sm:$0xff]
        %v1783 = vld [vmem:[%s704 + $0x58] sm:$0xff]
        %v1784 = vld [vmem:[%s704 + $0x60] sm:$0xff]
        %v1785 = vld [vmem:[%s704 + $0x68] sm:$0xff]
        %v1786 = vld [vmem:[%s704 + $0x70] sm:$0xff]
        %v1787 = vld [vmem:[%s704 + $0x78] sm:$0xff]
        %v1788 = vld [vmem:[%s704 + $0x80] sm:$0xff]
        %v1789 = vld [vmem:[%s704 + $0x88] sm:$0xff]
        %v1790 = vld [vmem:[%s704 + $0x90] sm:$0xff]
        %v1791 = vld [vmem:[%s704 + $0x98] sm:$0xff]
        %v1792 = vld [vmem:[%s704 + $0xa0] sm:$0xff]
        %v1793 = vld [vmem:[%s704 + $0xa8] sm:$0xff]
        %v1794 = vld [vmem:[%s704 + $0xb0] sm:$0xff]
        %v1795 = vld [vmem:[%s704 + $0xb8] sm:$0xff]
        %v1796 = vld [vmem:[%s704 + $0xc0] sm:$0xff]
        %v1797 = vld [vmem:[%s704 + $0xc8] sm:$0xff]
        %v1798 = vld [vmem:[%s704 + $0xd0] sm:$0xff]
        %v1799 = vld [vmem:[%s704 + $0xd8] sm:$0xff]
        %v1800 = vld [vmem:[%s704 + $0xe0] sm:$0xff]
        %v1801 = vld [vmem:[%s704 + $0xe8] sm:$0xff]
        %v1802 = vld [vmem:[%s704 + $0xf0] sm:$0xff]
        %v1803 = vld [vmem:[%s704 + $0xf8] sm:$0xff]
        %v1804 = vpack.c.bf16 %v1222, %v1221
        %v1805 = vpack.c.bf16 %v1224, %v1223
        %v1806 = vpack.c.bf16 %v1226, %v1225
        %v1807 = vpack.c.bf16 %v1228, %v1227
        %v1808 = vpack.c.bf16 %v1230, %v1229
        %v1809 = vpack.c.bf16 %v1232, %v1231
        %v1810 = vpack.c.bf16 %v1234, %v1233
        %v1811 = vpack.c.bf16 %v1236, %v1235
        %v1812 = vpack.c.bf16 %v1756, %v1755
        %v1813 = vpack.c.bf16 %v1758, %v1757
        %v1814 = vpack.c.bf16 %v1760, %v1759
        %v1815 = vpack.c.bf16 %v1762, %v1761
        %v1816 = vpack.c.bf16 %v1764, %v1763
        %v1817 = vpack.c.bf16 %v1766, %v1765
        %v1818 = vpack.c.bf16 %v1768, %v1767
        %v1819 = vpack.c.bf16 %v1770, %v1769
        %v1820 = vlaneseq
        %v1821 = vshrl.u32 %v1820, 7
        %v1822 = vadd.s32 %v1821, 8
        %v1823 = vadd.s32 %v1821, 16
        %v1824 = vadd.s32 %v1821, 24
        %v1825 = vlaneseq
        %v1826 = vshrl.u32 %v1825, 7
        %v1827 = vsub.s32 0, %v1826
        %v1828 = vrot.slane %v1771, %v1827
        %v1829 = vlaneseq
        %v1830 = vshrl.u32 %v1829, 7
        %v1831 = vsub.s32 1, %v1830
        %v1832 = vrot.slane %v1771, %v1831
        %vm1833 = vcmp.eq.s32.totalorder %v1821, %v1828
        %vm1834 = vcmp.eq.s32.totalorder %v1821, %v1832
        %vm1835 = vcmp.eq.s32.totalorder %v1822, %v1828
        %vm1836 = vcmp.eq.s32.totalorder %v1822, %v1832
        %vm1837 = vcmp.eq.s32.totalorder %v1823, %v1828
        %vm1838 = vcmp.eq.s32.totalorder %v1823, %v1832
        %vm1839 = vcmp.eq.s32.totalorder %v1824, %v1828
        %vm1840 = vcmp.eq.s32.totalorder %v1824, %v1832
        %v1841 = vsel %vm1833, 1, 0
        %v1842 = vsel %vm1834, 1, 0
        %v1843 = vsel %vm1835, 1, 0
        %v1844 = vsel %vm1836, 1, 0
        %v1845 = vsel %vm1837, 1, 0
        %v1846 = vsel %vm1838, 1, 0
        %v1847 = vsel %vm1839, 1, 0
        %v1848 = vsel %vm1840, 1, 0
        %v1849 = vcvt.s32.f32 %v1841
        %v1850 = vcvt.s32.f32 %v1842
        %v1851 = vcvt.s32.f32 %v1843
        %v1852 = vcvt.s32.f32 %v1844
        %v1853 = vcvt.s32.f32 %v1845
        %v1854 = vcvt.s32.f32 %v1846
        %v1855 = vcvt.s32.f32 %v1847
        %v1856 = vcvt.s32.f32 %v1848
        %v1857 = vpack.c.bf16 %v1851, %v1849
        %v1858 = vpack.c.bf16 %v1852, %v1850
        %v1859 = vpack.c.bf16 %v1855, %v1853
        %v1860 = vpack.c.bf16 %v1856, %v1854
        %v1861 = vld [vmem:[#allocation2] sm:$0xff]
        %v1862 = vld [vmem:[#allocation2 + $0x8] sm:$0xff]
        %v1863 = vld [vmem:[#allocation2 + $0x10] sm:$0xff]
        %v1864 = vld [vmem:[#allocation2 + $0x18] sm:$0xff]
        %1865 = vmatprep.subr.bf16.mxu0 0
        %1866 = vmatpush1.bf16.msra.mxu0 %v1811
        %1867 = vmatprep.subr.bf16.mxu0 0
        %1868 = vmatpush1.bf16.msra.mxu0 %v1810
        %1869 = vmatprep.subr.bf16.mxu0 0
        %1870 = vmatpush1.bf16.msra.mxu0 %v1809
        %1871 = vmatprep.subr.bf16.mxu0 0
        %1872 = vmatpush1.bf16.msra.mxu0 %v1808
        %1873 = vmatprep.subr.bf16.mxu0 0
        %1874 = vmatpush1.bf16.msra.mxu0 %v1807
        %1875 = vmatprep.subr.bf16.mxu0 0
        %1876 = vmatpush1.bf16.msra.mxu0 %v1806
        %1877 = vmatprep.subr.bf16.mxu0 0
        %1878 = vmatpush1.bf16.msra.mxu0 %v1805
        %1879 = vmatprep.subr.bf16.mxu0 0
        %1880 = vmatpush1.bf16.msra.mxu0 %v1804
        %1881 = vmatprep.subr.bf16.mxu0 0
        %1882 = vmatpush2.bf16.msra.mxu0 %v1819
        %1883 = vmatprep.subr.bf16.mxu0 0
        %1884 = vmatpush2.bf16.msra.mxu0 %v1818
        %1885 = vmatprep.subr.bf16.mxu0 0
        %1886 = vmatpush2.bf16.msra.mxu0 %v1817
        %1887 = vmatprep.subr.bf16.mxu0 0
        %1888 = vmatpush2.bf16.msra.mxu0 %v1816
        %1889 = vmatprep.subr.bf16.mxu0 0
        %1890 = vmatpush2.bf16.msra.mxu0 %v1815
        %1891 = vmatprep.subr.bf16.mxu0 0
        %1892 = vmatpush2.bf16.msra.mxu0 %v1814
        %1893 = vmatprep.subr.bf16.mxu0 0
        %1894 = vmatpush2.bf16.msra.mxu0 %v1813
        %1895 = vmatprep.subr.bf16.mxu0 0
        %1896 = vmatpush2.bf16.msra.mxu0 %v1812
        %1897 = vmatprep.mubr.bf16.mxu0 %v1858
        %1898 = vmatmul.mubr.bf16.gmra.mxu0 %v1857
        %v1899 = vpop.f32.mrf.mxu0
        %v1900 = vadd.f32 0.0, %v1899
        %v1901 = vpop.f32.mrf.mxu0
        %v1902 = vpop.f32.mrf.mxu0
        %v1903 = vadd.f32 0.0, %v1902
        %v1904 = vpop.f32.mrf.mxu0
        %1905 = vmatprep.mubr.bf16.mxu0 %v1860
        %1906 = vmatmul.mubr.bf16.gmra.mxu0 %v1859
        %v1907 = vpop.f32.mrf.mxu0
        %v1908 = vadd.f32 0.0, %v1907
        %v1909 = vpop.f32.mrf.mxu0
        %v1910 = vpop.f32.mrf.mxu0
        %v1911 = vadd.f32 0.0, %v1910
        %v1912 = vpop.f32.mrf.mxu0
        %1913 = vdwg.mxu0
        %v1914 = vadd.f32 %v1861, %v1900
        %v1915 = vadd.f32 %v1862, %v1903
        %v1916 = vadd.f32 %v1863, %v1908
        %v1917 = vadd.f32 %v1864, %v1911
        %1918 = vst [vmem:[#allocation2] sm:$0xff] %v1914
        %1919 = vst [vmem:[#allocation2 + $0x8] sm:$0xff] %v1915
        %1920 = vst [vmem:[#allocation2 + $0x10] sm:$0xff] %v1916
        %1921 = vst [vmem:[#allocation2 + $0x18] sm:$0xff] %v1917
        loop: start=0, step=1, limit=2
        $region109: #{tpu_custom_call.1} parent=103 // loop_pre_header
          _
        $region110: #{tpu_custom_call.1} parent=103 // loop_header
          %s1923 = sphi 0, %s1927
          %p1924 = scmp.ge.s32.totalorder %s1923, 2
        $region111: #{tpu_custom_call.1} parent=103 // loop_header_branch
          %1926 = sbr.rel (%p1924) target = $region115
        $region112: #{tpu_custom_call.1} parent=103 // loop_body
          %s1928 = smul.u32 %s1923, 8
          %v1929 = vstv %s1928
          %vm1930 = vcmp.eq.s32.totalorder %v1772, %v1929
          %vm1931 = vcmp.eq.s32.totalorder %v1773, %v1929
          %vm1932 = vcmp.eq.s32.totalorder %v1774, %v1929
          %vm1933 = vcmp.eq.s32.totalorder %v1775, %v1929
          %vm1934 = vcmp.eq.s32.totalorder %v1776, %v1929
          %vm1935 = vcmp.eq.s32.totalorder %v1777, %v1929
          %vm1936 = vcmp.eq.s32.totalorder %v1778, %v1929
          %vm1937 = vcmp.eq.s32.totalorder %v1779, %v1929
          %vm1938 = vcmp.eq.s32.totalorder %v1780, %v1929
          %vm1939 = vcmp.eq.s32.totalorder %v1781, %v1929
          %vm1940 = vcmp.eq.s32.totalorder %v1782, %v1929
          %vm1941 = vcmp.eq.s32.totalorder %v1783, %v1929
          %vm1942 = vcmp.eq.s32.totalorder %v1784, %v1929
          %vm1943 = vcmp.eq.s32.totalorder %v1785, %v1929
          %vm1944 = vcmp.eq.s32.totalorder %v1786, %v1929
          %vm1945 = vcmp.eq.s32.totalorder %v1787, %v1929
          %v1946 = vsel %vm1930, 1, 0
          %v1947 = vsel %vm1931, 1, 0
          %v1948 = vsel %vm1932, 1, 0
          %v1949 = vsel %vm1933, 1, 0
          %v1950 = vsel %vm1934, 1, 0
          %v1951 = vsel %vm1935, 1, 0
          %v1952 = vsel %vm1936, 1, 0
          %v1953 = vsel %vm1937, 1, 0
          %v1954 = vsel %vm1938, 1, 0
          %v1955 = vsel %vm1939, 1, 0
          %v1956 = vsel %vm1940, 1, 0
          %v1957 = vsel %vm1941, 1, 0
          %v1958 = vsel %vm1942, 1, 0
          %v1959 = vsel %vm1943, 1, 0
          %v1960 = vsel %vm1944, 1, 0
          %v1961 = vsel %vm1945, 1, 0
          %v1962 = vcvt.s32.f32 %v1946
          %v1963 = vcvt.s32.f32 %v1947
          %v1964 = vcvt.s32.f32 %v1948
          %v1965 = vcvt.s32.f32 %v1949
          %v1966 = vcvt.s32.f32 %v1950
          %v1967 = vcvt.s32.f32 %v1951
          %v1968 = vcvt.s32.f32 %v1952
          %v1969 = vcvt.s32.f32 %v1953
          %v1970 = vcvt.s32.f32 %v1954
          %v1971 = vcvt.s32.f32 %v1955
          %v1972 = vcvt.s32.f32 %v1956
          %v1973 = vcvt.s32.f32 %v1957
          %v1974 = vcvt.s32.f32 %v1958
          %v1975 = vcvt.s32.f32 %v1959
          %v1976 = vcvt.s32.f32 %v1960
          %v1977 = vcvt.s32.f32 %v1961
          %v1978 = vsub.f32 %v1962, 1.0
          %v1979 = vsub.f32 %v1963, 1.0
          %v1980 = vsub.f32 %v1964, 1.0
          %v1981 = vsub.f32 %v1965, 1.0
          %v1982 = vsub.f32 %v1966, 1.0
          %v1983 = vsub.f32 %v1967, 1.0
          %v1984 = vsub.f32 %v1968, 1.0
          %v1985 = vsub.f32 %v1969, 1.0
          %v1986 = vsub.f32 %v1970, 1.0
          %v1987 = vsub.f32 %v1971, 1.0
          %v1988 = vsub.f32 %v1972, 1.0
          %v1989 = vsub.f32 %v1973, 1.0
          %v1990 = vsub.f32 %v1974, 1.0
          %v1991 = vsub.f32 %v1975, 1.0
          %v1992 = vsub.f32 %v1976, 1.0
          %v1993 = vsub.f32 %v1977, 1.0
          %v1994 = vmul.f32 %v1978, 1e+30
          %v1995 = vmul.f32 %v1979, 1e+30
          %v1996 = vmul.f32 %v1980, 1e+30
          %v1997 = vmul.f32 %v1981, 1e+30
          %v1998 = vmul.f32 %v1982, 1e+30
          %v1999 = vmul.f32 %v1983, 1e+30
          %v2000 = vmul.f32 %v1984, 1e+30
          %v2001 = vmul.f32 %v1985, 1e+30
          %v2002 = vmul.f32 %v1986, 1e+30
          %v2003 = vmul.f32 %v1987, 1e+30
          %v2004 = vmul.f32 %v1988, 1e+30
          %v2005 = vmul.f32 %v1989, 1e+30
          %v2006 = vmul.f32 %v1990, 1e+30
          %v2007 = vmul.f32 %v1991, 1e+30
          %v2008 = vmul.f32 %v1992, 1e+30
          %v2009 = vmul.f32 %v1993, 1e+30
          %2011 = vset.pattern.permute.xlu0 0
          %2012 = vperm.xlu0 %2011, %v1994
          %v2013 = vpop.permute.xlu0 %2012
          %2016 = vset.pattern.permute.xlu0 0
          %2017 = vperm.xlu0 %2016, %v1995
          %v2018 = vpop.permute.xlu0 %2017
          %2021 = vset.pattern.permute.xlu0 0
          %2022 = vperm.xlu0 %2021, %v1996
          %v2023 = vpop.permute.xlu0 %2022
          %2026 = vset.pattern.permute.xlu0 0
          %2027 = vperm.xlu0 %2026, %v1997
          %v2028 = vpop.permute.xlu0 %2027
          %2031 = vset.pattern.permute.xlu0 0
          %2032 = vperm.xlu0 %2031, %v1998
          %v2033 = vpop.permute.xlu0 %2032
          %2036 = vset.pattern.permute.xlu0 0
          %2037 = vperm.xlu0 %2036, %v1999
          %v2038 = vpop.permute.xlu0 %2037
          %2041 = vset.pattern.permute.xlu0 0
          %2042 = vperm.xlu0 %2041, %v2000
          %v2043 = vpop.permute.xlu0 %2042
          %2046 = vset.pattern.permute.xlu0 0
          %2047 = vperm.xlu0 %2046, %v2001
          %v2048 = vpop.permute.xlu0 %2047
          %2051 = vset.pattern.permute.xlu0 0
          %2052 = vperm.xlu0 %2051, %v2002
          %v2053 = vpop.permute.xlu0 %2052
          %2056 = vset.pattern.permute.xlu0 0
          %2057 = vperm.xlu0 %2056, %v2003
          %v2058 = vpop.permute.xlu0 %2057
          %2061 = vset.pattern.permute.xlu0 0
          %2062 = vperm.xlu0 %2061, %v2004
          %v2063 = vpop.permute.xlu0 %2062
          %2066 = vset.pattern.permute.xlu0 0
          %2067 = vperm.xlu0 %2066, %v2005
          %v2068 = vpop.permute.xlu0 %2067
          %2071 = vset.pattern.permute.xlu0 0
          %2072 = vperm.xlu0 %2071, %v2006
          %v2073 = vpop.permute.xlu0 %2072
          %2076 = vset.pattern.permute.xlu0 0
          %2077 = vperm.xlu0 %2076, %v2007
          %v2078 = vpop.permute.xlu0 %2077
          %2081 = vset.pattern.permute.xlu0 0
          %2082 = vperm.xlu0 %2081, %v2008
          %v2083 = vpop.permute.xlu0 %2082
          %2086 = vset.pattern.permute.xlu0 0
          %2087 = vperm.xlu0 %2086, %v2009
          %v2088 = vpop.permute.xlu0 %2087
          %v2090 = vadd.f32 %v1221, %v2013
          %v2091 = vadd.f32 %v1222, %v2018
          %v2092 = vadd.f32 %v1223, %v2023
          %v2093 = vadd.f32 %v1224, %v2028
          %v2094 = vadd.f32 %v1225, %v2033
          %v2095 = vadd.f32 %v1226, %v2038
          %v2096 = vadd.f32 %v1227, %v2043
          %v2097 = vadd.f32 %v1228, %v2048
          %v2098 = vadd.f32 %v1229, %v2053
          %v2099 = vadd.f32 %v1230, %v2058
          %v2100 = vadd.f32 %v1231, %v2063
          %v2101 = vadd.f32 %v1232, %v2068
          %v2102 = vadd.f32 %v1233, %v2073
          %v2103 = vadd.f32 %v1234, %v2078
          %v2104 = vadd.f32 %v1235, %v2083
          %v2105 = vadd.f32 %v1236, %v2088
          %v2106 = vmax.f32 %v2090, %v2094
          %v2107 = vmax.f32 %v2091, %v2095
          %v2108 = vmax.f32 %v2092, %v2096
          %v2109 = vmax.f32 %v2093, %v2097
          %v2110 = vmax.f32 %v2106, %v2098
          %v2111 = vmax.f32 %v2107, %v2099
          %v2112 = vmax.f32 %v2108, %v2100
          %v2113 = vmax.f32 %v2109, %v2101
          %v2114 = vmax.f32 %v2110, %v2102
          %v2115 = vmax.f32 %v2111, %v2103
          %v2116 = vmax.f32 %v2112, %v2104
          %v2117 = vmax.f32 %v2113, %v2105
          %v2118 = vmax.f32 %v2114, %v2115
          %v2119 = vmax.f32 %v2116, %v2117
          %v2120 = vmax.f32 %v2118, %v2119
          %v2121 = vrot.slane %v2120, 4
          %v2122 = vmax.f32 %v2120, %v2121
          %v2123 = vrot.slane %v2122, 2
          %v2124 = vmax.f32 %v2122, %v2123
          %v2125 = vrot.slane %v2124, 1
          %v2126 = vmax.f32 %v2124, %v2125
          %s2127 = sadd.s32 %s1928, 1
          %v2128 = vstv %s2127
          %vm2129 = vcmp.eq.s32.totalorder %v1772, %v2128
          %vm2130 = vcmp.eq.s32.totalorder %v1773, %v2128
          %vm2131 = vcmp.eq.s32.totalorder %v1774, %v2128
          %vm2132 = vcmp.eq.s32.totalorder %v1775, %v2128
          %vm2133 = vcmp.eq.s32.totalorder %v1776, %v2128
          %vm2134 = vcmp.eq.s32.totalorder %v1777, %v2128
          %vm2135 = vcmp.eq.s32.totalorder %v1778, %v2128
          %vm2136 = vcmp.eq.s32.totalorder %v1779, %v2128
          %vm2137 = vcmp.eq.s32.totalorder %v1780, %v2128
          %vm2138 = vcmp.eq.s32.totalorder %v1781, %v2128
          %vm2139 = vcmp.eq.s32.totalorder %v1782, %v2128
          %vm2140 = vcmp.eq.s32.totalorder %v1783, %v2128
          %vm2141 = vcmp.eq.s32.totalorder %v1784, %v2128
          %vm2142 = vcmp.eq.s32.totalorder %v1785, %v2128
          %vm2143 = vcmp.eq.s32.totalorder %v1786, %v2128
          %vm2144 = vcmp.eq.s32.totalorder %v1787, %v2128
          %v2145 = vsel %vm2129, 1, 0
          %v2146 = vsel %vm2130, 1, 0
          %v2147 = vsel %vm2131, 1, 0
          %v2148 = vsel %vm2132, 1, 0
          %v2149 = vsel %vm2133, 1, 0
          %v2150 = vsel %vm2134, 1, 0
          %v2151 = vsel %vm2135, 1, 0
          %v2152 = vsel %vm2136, 1, 0
          %v2153 = vsel %vm2137, 1, 0
          %v2154 = vsel %vm2138, 1, 0
          %v2155 = vsel %vm2139, 1, 0
          %v2156 = vsel %vm2140, 1, 0
          %v2157 = vsel %vm2141, 1, 0
          %v2158 = vsel %vm2142, 1, 0
          %v2159 = vsel %vm2143, 1, 0
          %v2160 = vsel %vm2144, 1, 0
          %v2161 = vcvt.s32.f32 %v2145
          %v2162 = vcvt.s32.f32 %v2146
          %v2163 = vcvt.s32.f32 %v2147
          %v2164 = vcvt.s32.f32 %v2148
          %v2165 = vcvt.s32.f32 %v2149
          %v2166 = vcvt.s32.f32 %v2150
          %v2167 = vcvt.s32.f32 %v2151
          %v2168 = vcvt.s32.f32 %v2152
          %v2169 = vcvt.s32.f32 %v2153
          %v2170 = vcvt.s32.f32 %v2154
          %v2171 = vcvt.s32.f32 %v2155
          %v2172 = vcvt.s32.f32 %v2156
          %v2173 = vcvt.s32.f32 %v2157
          %v2174 = vcvt.s32.f32 %v2158
          %v2175 = vcvt.s32.f32 %v2159
          %v2176 = vcvt.s32.f32 %v2160
          %v2177 = vsub.f32 %v2161, 1.0
          %v2178 = vsub.f32 %v2162, 1.0
          %v2179 = vsub.f32 %v2163, 1.0
          %v2180 = vsub.f32 %v2164, 1.0
          %v2181 = vsub.f32 %v2165, 1.0
          %v2182 = vsub.f32 %v2166, 1.0
          %v2183 = vsub.f32 %v2167, 1.0
          %v2184 = vsub.f32 %v2168, 1.0
          %v2185 = vsub.f32 %v2169, 1.0
          %v2186 = vsub.f32 %v2170, 1.0
          %v2187 = vsub.f32 %v2171, 1.0
          %v2188 = vsub.f32 %v2172, 1.0
          %v2189 = vsub.f32 %v2173, 1.0
          %v2190 = vsub.f32 %v2174, 1.0
          %v2191 = vsub.f32 %v2175, 1.0
          %v2192 = vsub.f32 %v2176, 1.0
          %v2193 = vmul.f32 %v2177, 1e+30
          %v2194 = vmul.f32 %v2178, 1e+30
          %v2195 = vmul.f32 %v2179, 1e+30
          %v2196 = vmul.f32 %v2180, 1e+30
          %v2197 = vmul.f32 %v2181, 1e+30
          %v2198 = vmul.f32 %v2182, 1e+30
          %v2199 = vmul.f32 %v2183, 1e+30
          %v2200 = vmul.f32 %v2184, 1e+30
          %v2201 = vmul.f32 %v2185, 1e+30
          %v2202 = vmul.f32 %v2186, 1e+30
          %v2203 = vmul.f32 %v2187, 1e+30
          %v2204 = vmul.f32 %v2188, 1e+30
          %v2205 = vmul.f32 %v2189, 1e+30
          %v2206 = vmul.f32 %v2190, 1e+30
          %v2207 = vmul.f32 %v2191, 1e+30
          %v2208 = vmul.f32 %v2192, 1e+30
          %2210 = vset.pattern.permute.xlu0 0
          %2211 = vperm.xlu0 %2210, %v2193
          %v2212 = vpop.permute.xlu0 %2211
          %2215 = vset.pattern.permute.xlu0 0
          %2216 = vperm.xlu0 %2215, %v2194
          %v2217 = vpop.permute.xlu0 %2216
          %2220 = vset.pattern.permute.xlu0 0
          %2221 = vperm.xlu0 %2220, %v2195
          %v2222 = vpop.permute.xlu0 %2221
          %2225 = vset.pattern.permute.xlu0 0
          %2226 = vperm.xlu0 %2225, %v2196
          %v2227 = vpop.permute.xlu0 %2226
          %2230 = vset.pattern.permute.xlu0 0
          %2231 = vperm.xlu0 %2230, %v2197
          %v2232 = vpop.permute.xlu0 %2231
          %2235 = vset.pattern.permute.xlu0 0
          %2236 = vperm.xlu0 %2235, %v2198
          %v2237 = vpop.permute.xlu0 %2236
          %2240 = vset.pattern.permute.xlu0 0
          %2241 = vperm.xlu0 %2240, %v2199
          %v2242 = vpop.permute.xlu0 %2241
          %2245 = vset.pattern.permute.xlu0 0
          %2246 = vperm.xlu0 %2245, %v2200
          %v2247 = vpop.permute.xlu0 %2246
          %2250 = vset.pattern.permute.xlu0 0
          %2251 = vperm.xlu0 %2250, %v2201
          %v2252 = vpop.permute.xlu0 %2251
          %2255 = vset.pattern.permute.xlu0 0
          %2256 = vperm.xlu0 %2255, %v2202
          %v2257 = vpop.permute.xlu0 %2256
          %2260 = vset.pattern.permute.xlu0 0
          %2261 = vperm.xlu0 %2260, %v2203
          %v2262 = vpop.permute.xlu0 %2261
          %2265 = vset.pattern.permute.xlu0 0
          %2266 = vperm.xlu0 %2265, %v2204
          %v2267 = vpop.permute.xlu0 %2266
          %2270 = vset.pattern.permute.xlu0 0
          %2271 = vperm.xlu0 %2270, %v2205
          %v2272 = vpop.permute.xlu0 %2271
          %2275 = vset.pattern.permute.xlu0 0
          %2276 = vperm.xlu0 %2275, %v2206
          %v2277 = vpop.permute.xlu0 %2276
          %2280 = vset.pattern.permute.xlu0 0
          %2281 = vperm.xlu0 %2280, %v2207
          %v2282 = vpop.permute.xlu0 %2281
          %2285 = vset.pattern.permute.xlu0 0
          %2286 = vperm.xlu0 %2285, %v2208
          %v2287 = vpop.permute.xlu0 %2286
          %v2289 = vadd.f32 %v1221, %v2212
          %v2290 = vadd.f32 %v1222, %v2217
          %v2291 = vadd.f32 %v1223, %v2222
          %v2292 = vadd.f32 %v1224, %v2227
          %v2293 = vadd.f32 %v1225, %v2232
          %v2294 = vadd.f32 %v1226, %v2237
          %v2295 = vadd.f32 %v1227, %v2242
          %v2296 = vadd.f32 %v1228, %v2247
          %v2297 = vadd.f32 %v1229, %v2252
          %v2298 = vadd.f32 %v1230, %v2257
          %v2299 = vadd.f32 %v1231, %v2262
          %v2300 = vadd.f32 %v1232, %v2267
          %v2301 = vadd.f32 %v1233, %v2272
          %v2302 = vadd.f32 %v1234, %v2277
          %v2303 = vadd.f32 %v1235, %v2282
          %v2304 = vadd.f32 %v1236, %v2287
          %v2305 = vmax.f32 %v2289, %v2293
          %v2306 = vmax.f32 %v2290, %v2294
          %v2307 = vmax.f32 %v2291, %v2295
          %v2308 = vmax.f32 %v2292, %v2296
          %v2309 = vmax.f32 %v2305, %v2297
          %v2310 = vmax.f32 %v2306, %v2298
          %v2311 = vmax.f32 %v2307, %v2299
          %v2312 = vmax.f32 %v2308, %v2300
          %v2313 = vmax.f32 %v2309, %v2301
          %v2314 = vmax.f32 %v2310, %v2302
          %v2315 = vmax.f32 %v2311, %v2303
          %v2316 = vmax.f32 %v2312, %v2304
          %v2317 = vmax.f32 %v2313, %v2314
          %v2318 = vmax.f32 %v2315, %v2316
          %v2319 = vmax.f32 %v2317, %v2318
          %v2320 = vrot.slane %v2319, 4
          %v2321 = vmax.f32 %v2319, %v2320
          %v2322 = vrot.slane %v2321, 2
          %v2323 = vmax.f32 %v2321, %v2322
          %v2324 = vrot.slane %v2323, 1
          %v2325 = vmax.f32 %v2323, %v2324
          %s2326 = sadd.s32 %s1928, 2
          %v2327 = vstv %s2326
          %vm2328 = vcmp.eq.s32.totalorder %v1772, %v2327
          %vm2329 = vcmp.eq.s32.totalorder %v1773, %v2327
          %vm2330 = vcmp.eq.s32.totalorder %v1774, %v2327
          %vm2331 = vcmp.eq.s32.totalorder %v1775, %v2327
          %vm2332 = vcmp.eq.s32.totalorder %v1776, %v2327
          %vm2333 = vcmp.eq.s32.totalorder %v1777, %v2327
          %vm2334 = vcmp.eq.s32.totalorder %v1778, %v2327
          %vm2335 = vcmp.eq.s32.totalorder %v1779, %v2327
          %vm2336 = vcmp.eq.s32.totalorder %v1780, %v2327
          %vm2337 = vcmp.eq.s32.totalorder %v1781, %v2327
          %vm2338 = vcmp.eq.s32.totalorder %v1782, %v2327
          %vm2339 = vcmp.eq.s32.totalorder %v1783, %v2327
          %vm2340 = vcmp.eq.s32.totalorder %v1784, %v2327
          %vm2341 = vcmp.eq.s32.totalorder %v1785, %v2327
          %vm2342 = vcmp.eq.s32.totalorder %v1786, %v2327
          %vm2343 = vcmp.eq.s32.totalorder %v1787, %v2327
          %v2344 = vsel %vm2328, 1, 0
          %v2345 = vsel %vm2329, 1, 0
          %v2346 = vsel %vm2330, 1, 0
          %v2347 = vsel %vm2331, 1, 0
          %v2348 = vsel %vm2332, 1, 0
          %v2349 = vsel %vm2333, 1, 0
          %v2350 = vsel %vm2334, 1, 0
          %v2351 = vsel %vm2335, 1, 0
          %v2352 = vsel %vm2336, 1, 0
          %v2353 = vsel %vm2337, 1, 0
          %v2354 = vsel %vm2338, 1, 0
          %v2355 = vsel %vm2339, 1, 0
          %v2356 = vsel %vm2340, 1, 0
          %v2357 = vsel %vm2341, 1, 0
          %v2358 = vsel %vm2342, 1, 0
          %v2359 = vsel %vm2343, 1, 0
          %v2360 = vcvt.s32.f32 %v2344
          %v2361 = vcvt.s32.f32 %v2345
          %v2362 = vcvt.s32.f32 %v2346
          %v2363 = vcvt.s32.f32 %v2347
          %v2364 = vcvt.s32.f32 %v2348
          %v2365 = vcvt.s32.f32 %v2349
          %v2366 = vcvt.s32.f32 %v2350
          %v2367 = vcvt.s32.f32 %v2351
          %v2368 = vcvt.s32.f32 %v2352
          %v2369 = vcvt.s32.f32 %v2353
          %v2370 = vcvt.s32.f32 %v2354
          %v2371 = vcvt.s32.f32 %v2355
          %v2372 = vcvt.s32.f32 %v2356
          %v2373 = vcvt.s32.f32 %v2357
          %v2374 = vcvt.s32.f32 %v2358
          %v2375 = vcvt.s32.f32 %v2359
          %v2376 = vsub.f32 %v2360, 1.0
          %v2377 = vsub.f32 %v2361, 1.0
          %v2378 = vsub.f32 %v2362, 1.0
          %v2379 = vsub.f32 %v2363, 1.0
          %v2380 = vsub.f32 %v2364, 1.0
          %v2381 = vsub.f32 %v2365, 1.0
          %v2382 = vsub.f32 %v2366, 1.0
          %v2383 = vsub.f32 %v2367, 1.0
          %v2384 = vsub.f32 %v2368, 1.0
          %v2385 = vsub.f32 %v2369, 1.0
          %v2386 = vsub.f32 %v2370, 1.0
          %v2387 = vsub.f32 %v2371, 1.0
          %v2388 = vsub.f32 %v2372, 1.0
          %v2389 = vsub.f32 %v2373, 1.0
          %v2390 = vsub.f32 %v2374, 1.0
          %v2391 = vsub.f32 %v2375, 1.0
          %v2392 = vmul.f32 %v2376, 1e+30
          %v2393 = vmul.f32 %v2377, 1e+30
          %v2394 = vmul.f32 %v2378, 1e+30
          %v2395 = vmul.f32 %v2379, 1e+30
          %v2396 = vmul.f32 %v2380, 1e+30
          %v2397 = vmul.f32 %v2381, 1e+30
          %v2398 = vmul.f32 %v2382, 1e+30
          %v2399 = vmul.f32 %v2383, 1e+30
          %v2400 = vmul.f32 %v2384, 1e+30
          %v2401 = vmul.f32 %v2385, 1e+30
          %v2402 = vmul.f32 %v2386, 1e+30
          %v2403 = vmul.f32 %v2387, 1e+30
          %v2404 = vmul.f32 %v2388, 1e+30
          %v2405 = vmul.f32 %v2389, 1e+30
          %v2406 = vmul.f32 %v2390, 1e+30
          %v2407 = vmul.f32 %v2391, 1e+30
          %2409 = vset.pattern.permute.xlu0 0
          %2410 = vperm.xlu0 %2409, %v2392
          %v2411 = vpop.permute.xlu0 %2410
          %2414 = vset.pattern.permute.xlu0 0
          %2415 = vperm.xlu0 %2414, %v2393
          %v2416 = vpop.permute.xlu0 %2415
          %2419 = vset.pattern.permute.xlu0 0
          %2420 = vperm.xlu0 %2419, %v2394
          %v2421 = vpop.permute.xlu0 %2420
          %2424 = vset.pattern.permute.xlu0 0
          %2425 = vperm.xlu0 %2424, %v2395
          %v2426 = vpop.permute.xlu0 %2425
          %2429 = vset.pattern.permute.xlu0 0
          %2430 = vperm.xlu0 %2429, %v2396
          %v2431 = vpop.permute.xlu0 %2430
          %2434 = vset.pattern.permute.xlu0 0
          %2435 = vperm.xlu0 %2434, %v2397
          %v2436 = vpop.permute.xlu0 %2435
          %2439 = vset.pattern.permute.xlu0 0
          %2440 = vperm.xlu0 %2439, %v2398
          %v2441 = vpop.permute.xlu0 %2440
          %2444 = vset.pattern.permute.xlu0 0
          %2445 = vperm.xlu0 %2444, %v2399
          %v2446 = vpop.permute.xlu0 %2445
          %2449 = vset.pattern.permute.xlu0 0
          %2450 = vperm.xlu0 %2449, %v2400
          %v2451 = vpop.permute.xlu0 %2450
          %2454 = vset.pattern.permute.xlu0 0
          %2455 = vperm.xlu0 %2454, %v2401
          %v2456 = vpop.permute.xlu0 %2455
          %2459 = vset.pattern.permute.xlu0 0
          %2460 = vperm.xlu0 %2459, %v2402
          %v2461 = vpop.permute.xlu0 %2460
          %2464 = vset.pattern.permute.xlu0 0
          %2465 = vperm.xlu0 %2464, %v2403
          %v2466 = vpop.permute.xlu0 %2465
          %2469 = vset.pattern.permute.xlu0 0
          %2470 = vperm.xlu0 %2469, %v2404
          %v2471 = vpop.permute.xlu0 %2470
          %2474 = vset.pattern.permute.xlu0 0
          %2475 = vperm.xlu0 %2474, %v2405
          %v2476 = vpop.permute.xlu0 %2475
          %2479 = vset.pattern.permute.xlu0 0
          %2480 = vperm.xlu0 %2479, %v2406
          %v2481 = vpop.permute.xlu0 %2480
          %2484 = vset.pattern.permute.xlu0 0
          %2485 = vperm.xlu0 %2484, %v2407
          %v2486 = vpop.permute.xlu0 %2485
          %v2488 = vadd.f32 %v1221, %v2411
          %v2489 = vadd.f32 %v1222, %v2416
          %v2490 = vadd.f32 %v1223, %v2421
          %v2491 = vadd.f32 %v1224, %v2426
          %v2492 = vadd.f32 %v1225, %v2431
          %v2493 = vadd.f32 %v1226, %v2436
          %v2494 = vadd.f32 %v1227, %v2441
          %v2495 = vadd.f32 %v1228, %v2446
          %v2496 = vadd.f32 %v1229, %v2451
          %v2497 = vadd.f32 %v1230, %v2456
          %v2498 = vadd.f32 %v1231, %v2461
          %v2499 = vadd.f32 %v1232, %v2466
          %v2500 = vadd.f32 %v1233, %v2471
          %v2501 = vadd.f32 %v1234, %v2476
          %v2502 = vadd.f32 %v1235, %v2481
          %v2503 = vadd.f32 %v1236, %v2486
          %v2504 = vmax.f32 %v2488, %v2492
          %v2505 = vmax.f32 %v2489, %v2493
          %v2506 = vmax.f32 %v2490, %v2494
          %v2507 = vmax.f32 %v2491, %v2495
          %v2508 = vmax.f32 %v2504, %v2496
          %v2509 = vmax.f32 %v2505, %v2497
          %v2510 = vmax.f32 %v2506, %v2498
          %v2511 = vmax.f32 %v2507, %v2499
          %v2512 = vmax.f32 %v2508, %v2500
          %v2513 = vmax.f32 %v2509, %v2501
          %v2514 = vmax.f32 %v2510, %v2502
          %v2515 = vmax.f32 %v2511, %v2503
          %v2516 = vmax.f32 %v2512, %v2513
          %v2517 = vmax.f32 %v2514, %v2515
          %v2518 = vmax.f32 %v2516, %v2517
          %v2519 = vrot.slane %v2518, 4
          %v2520 = vmax.f32 %v2518, %v2519
          %v2521 = vrot.slane %v2520, 2
          %v2522 = vmax.f32 %v2520, %v2521
          %v2523 = vrot.slane %v2522, 1
          %v2524 = vmax.f32 %v2522, %v2523
          %s2525 = sadd.s32 %s1928, 3
          %v2526 = vstv %s2525
          %vm2527 = vcmp.eq.s32.totalorder %v1772, %v2526
          %vm2528 = vcmp.eq.s32.totalorder %v1773, %v2526
          %vm2529 = vcmp.eq.s32.totalorder %v1774, %v2526
          %vm2530 = vcmp.eq.s32.totalorder %v1775, %v2526
          %vm2531 = vcmp.eq.s32.totalorder %v1776, %v2526
          %vm2532 = vcmp.eq.s32.totalorder %v1777, %v2526
          %vm2533 = vcmp.eq.s32.totalorder %v1778, %v2526
          %vm2534 = vcmp.eq.s32.totalorder %v1779, %v2526
          %vm2535 = vcmp.eq.s32.totalorder %v1780, %v2526
          %vm2536 = vcmp.eq.s32.totalorder %v1781, %v2526
          %vm2537 = vcmp.eq.s32.totalorder %v1782, %v2526
          %vm2538 = vcmp.eq.s32.totalorder %v1783, %v2526
          %vm2539 = vcmp.eq.s32.totalorder %v1784, %v2526
          %vm2540 = vcmp.eq.s32.totalorder %v1785, %v2526
          %vm2541 = vcmp.eq.s32.totalorder %v1786, %v2526
          %vm2542 = vcmp.eq.s32.totalorder %v1787, %v2526
          %v2543 = vsel %vm2527, 1, 0
          %v2544 = vsel %vm2528, 1, 0
          %v2545 = vsel %vm2529, 1, 0
          %v2546 = vsel %vm2530, 1, 0
          %v2547 = vsel %vm2531, 1, 0
          %v2548 = vsel %vm2532, 1, 0
          %v2549 = vsel %vm2533, 1, 0
          %v2550 = vsel %vm2534, 1, 0
          %v2551 = vsel %vm2535, 1, 0
          %v2552 = vsel %vm2536, 1, 0
          %v2553 = vsel %vm2537, 1, 0
          %v2554 = vsel %vm2538, 1, 0
          %v2555 = vsel %vm2539, 1, 0
          %v2556 = vsel %vm2540, 1, 0
          %v2557 = vsel %vm2541, 1, 0
          %v2558 = vsel %vm2542, 1, 0
          %v2559 = vcvt.s32.f32 %v2543
          %v2560 = vcvt.s32.f32 %v2544
          %v2561 = vcvt.s32.f32 %v2545
          %v2562 = vcvt.s32.f32 %v2546
          %v2563 = vcvt.s32.f32 %v2547
          %v2564 = vcvt.s32.f32 %v2548
          %v2565 = vcvt.s32.f32 %v2549
          %v2566 = vcvt.s32.f32 %v2550
          %v2567 = vcvt.s32.f32 %v2551
          %v2568 = vcvt.s32.f32 %v2552
          %v2569 = vcvt.s32.f32 %v2553
          %v2570 = vcvt.s32.f32 %v2554
          %v2571 = vcvt.s32.f32 %v2555
          %v2572 = vcvt.s32.f32 %v2556
          %v2573 = vcvt.s32.f32 %v2557
          %v2574 = vcvt.s32.f32 %v2558
          %v2575 = vsub.f32 %v2559, 1.0
          %v2576 = vsub.f32 %v2560, 1.0
          %v2577 = vsub.f32 %v2561, 1.0
          %v2578 = vsub.f32 %v2562, 1.0
          %v2579 = vsub.f32 %v2563, 1.0
          %v2580 = vsub.f32 %v2564, 1.0
          %v2581 = vsub.f32 %v2565, 1.0
          %v2582 = vsub.f32 %v2566, 1.0
          %v2583 = vsub.f32 %v2567, 1.0
          %v2584 = vsub.f32 %v2568, 1.0
          %v2585 = vsub.f32 %v2569, 1.0
          %v2586 = vsub.f32 %v2570, 1.0
          %v2587 = vsub.f32 %v2571, 1.0
          %v2588 = vsub.f32 %v2572, 1.0
          %v2589 = vsub.f32 %v2573, 1.0
          %v2590 = vsub.f32 %v2574, 1.0
          %v2591 = vmul.f32 %v2575, 1e+30
          %v2592 = vmul.f32 %v2576, 1e+30
          %v2593 = vmul.f32 %v2577, 1e+30
          %v2594 = vmul.f32 %v2578, 1e+30
          %v2595 = vmul.f32 %v2579, 1e+30
          %v2596 = vmul.f32 %v2580, 1e+30
          %v2597 = vmul.f32 %v2581, 1e+30
          %v2598 = vmul.f32 %v2582, 1e+30
          %v2599 = vmul.f32 %v2583, 1e+30
          %v2600 = vmul.f32 %v2584, 1e+30
          %v2601 = vmul.f32 %v2585, 1e+30
          %v2602 = vmul.f32 %v2586, 1e+30
          %v2603 = vmul.f32 %v2587, 1e+30
          %v2604 = vmul.f32 %v2588, 1e+30
          %v2605 = vmul.f32 %v2589, 1e+30
          %v2606 = vmul.f32 %v2590, 1e+30
          %2608 = vset.pattern.permute.xlu0 0
          %2609 = vperm.xlu0 %2608, %v2591
          %v2610 = vpop.permute.xlu0 %2609
          %2613 = vset.pattern.permute.xlu0 0
          %2614 = vperm.xlu0 %2613, %v2592
          %v2615 = vpop.permute.xlu0 %2614
          %2618 = vset.pattern.permute.xlu0 0
          %2619 = vperm.xlu0 %2618, %v2593
          %v2620 = vpop.permute.xlu0 %2619
          %2623 = vset.pattern.permute.xlu0 0
          %2624 = vperm.xlu0 %2623, %v2594
          %v2625 = vpop.permute.xlu0 %2624
          %2628 = vset.pattern.permute.xlu0 0
          %2629 = vperm.xlu0 %2628, %v2595
          %v2630 = vpop.permute.xlu0 %2629
          %2633 = vset.pattern.permute.xlu0 0
          %2634 = vperm.xlu0 %2633, %v2596
          %v2635 = vpop.permute.xlu0 %2634
          %2638 = vset.pattern.permute.xlu0 0
          %2639 = vperm.xlu0 %2638, %v2597
          %v2640 = vpop.permute.xlu0 %2639
          %2643 = vset.pattern.permute.xlu0 0
          %2644 = vperm.xlu0 %2643, %v2598
          %v2645 = vpop.permute.xlu0 %2644
          %2648 = vset.pattern.permute.xlu0 0
          %2649 = vperm.xlu0 %2648, %v2599
          %v2650 = vpop.permute.xlu0 %2649
          %2653 = vset.pattern.permute.xlu0 0
          %2654 = vperm.xlu0 %2653, %v2600
          %v2655 = vpop.permute.xlu0 %2654
          %2658 = vset.pattern.permute.xlu0 0
          %2659 = vperm.xlu0 %2658, %v2601
          %v2660 = vpop.permute.xlu0 %2659
          %2663 = vset.pattern.permute.xlu0 0
          %2664 = vperm.xlu0 %2663, %v2602
          %v2665 = vpop.permute.xlu0 %2664
          %2668 = vset.pattern.permute.xlu0 0
          %2669 = vperm.xlu0 %2668, %v2603
          %v2670 = vpop.permute.xlu0 %2669
          %2673 = vset.pattern.permute.xlu0 0
          %2674 = vperm.xlu0 %2673, %v2604
          %v2675 = vpop.permute.xlu0 %2674
          %2678 = vset.pattern.permute.xlu0 0
          %2679 = vperm.xlu0 %2678, %v2605
          %v2680 = vpop.permute.xlu0 %2679
          %2683 = vset.pattern.permute.xlu0 0
          %2684 = vperm.xlu0 %2683, %v2606
          %v2685 = vpop.permute.xlu0 %2684
          %v2687 = vadd.f32 %v1221, %v2610
          %v2688 = vadd.f32 %v1222, %v2615
          %v2689 = vadd.f32 %v1223, %v2620
          %v2690 = vadd.f32 %v1224, %v2625
          %v2691 = vadd.f32 %v1225, %v2630
          %v2692 = vadd.f32 %v1226, %v2635
          %v2693 = vadd.f32 %v1227, %v2640
          %v2694 = vadd.f32 %v1228, %v2645
          %v2695 = vadd.f32 %v1229, %v2650
          %v2696 = vadd.f32 %v1230, %v2655
          %v2697 = vadd.f32 %v1231, %v2660
          %v2698 = vadd.f32 %v1232, %v2665
          %v2699 = vadd.f32 %v1233, %v2670
          %v2700 = vadd.f32 %v1234, %v2675
          %v2701 = vadd.f32 %v1235, %v2680
          %v2702 = vadd.f32 %v1236, %v2685
          %v2703 = vmax.f32 %v2687, %v2691
          %v2704 = vmax.f32 %v2688, %v2692
          %v2705 = vmax.f32 %v2689, %v2693
          %v2706 = vmax.f32 %v2690, %v2694
          %v2707 = vmax.f32 %v2703, %v2695
          %v2708 = vmax.f32 %v2704, %v2696
          %v2709 = vmax.f32 %v2705, %v2697
          %v2710 = vmax.f32 %v2706, %v2698
          %v2711 = vmax.f32 %v2707, %v2699
          %v2712 = vmax.f32 %v2708, %v2700
          %v2713 = vmax.f32 %v2709, %v2701
          %v2714 = vmax.f32 %v2710, %v2702
          %v2715 = vmax.f32 %v2711, %v2712
          %v2716 = vmax.f32 %v2713, %v2714
          %v2717 = vmax.f32 %v2715, %v2716
          %v2718 = vrot.slane %v2717, 4
          %v2719 = vmax.f32 %v2717, %v2718
          %v2720 = vrot.slane %v2719, 2
          %v2721 = vmax.f32 %v2719, %v2720
          %v2722 = vrot.slane %v2721, 1
          %v2723 = vmax.f32 %v2721, %v2722
          %s2724 = sadd.s32 %s1928, 4
          %v2725 = vstv %s2724
          %vm2726 = vcmp.eq.s32.totalorder %v1772, %v2725
          %vm2727 = vcmp.eq.s32.totalorder %v1773, %v2725
          %vm2728 = vcmp.eq.s32.totalorder %v1774, %v2725
          %vm2729 = vcmp.eq.s32.totalorder %v1775, %v2725
          %vm2730 = vcmp.eq.s32.totalorder %v1776, %v2725
          %vm2731 = vcmp.eq.s32.totalorder %v1777, %v2725
          %vm2732 = vcmp.eq.s32.totalorder %v1778, %v2725
          %vm2733 = vcmp.eq.s32.totalorder %v1779, %v2725
          %vm2734 = vcmp.eq.s32.totalorder %v1780, %v2725
          %vm2735 = vcmp.eq.s32.totalorder %v1781, %v2725
          %vm2736 = vcmp.eq.s32.totalorder %v1782, %v2725
          %vm2737 = vcmp.eq.s32.totalorder %v1783, %v2725
          %vm2738 = vcmp.eq.s32.totalorder %v1784, %v2725
          %vm2739 = vcmp.eq.s32.totalorder %v1785, %v2725
          %vm2740 = vcmp.eq.s32.totalorder %v1786, %v2725
          %vm2741 = vcmp.eq.s32.totalorder %v1787, %v2725
          %v2742 = vsel %vm2726, 1, 0
          %v2743 = vsel %vm2727, 1, 0
          %v2744 = vsel %vm2728, 1, 0
          %v2745 = vsel %vm2729, 1, 0
          %v2746 = vsel %vm2730, 1, 0
          %v2747 = vsel %vm2731, 1, 0
          %v2748 = vsel %vm2732, 1, 0
          %v2749 = vsel %vm2733, 1, 0
          %v2750 = vsel %vm2734, 1, 0
          %v2751 = vsel %vm2735, 1, 0
          %v2752 = vsel %vm2736, 1, 0
          %v2753 = vsel %vm2737, 1, 0
          %v2754 = vsel %vm2738, 1, 0
          %v2755 = vsel %vm2739, 1, 0
          %v2756 = vsel %vm2740, 1, 0
          %v2757 = vsel %vm2741, 1, 0
          %v2758 = vcvt.s32.f32 %v2742
          %v2759 = vcvt.s32.f32 %v2743
          %v2760 = vcvt.s32.f32 %v2744
          %v2761 = vcvt.s32.f32 %v2745
          %v2762 = vcvt.s32.f32 %v2746
          %v2763 = vcvt.s32.f32 %v2747
          %v2764 = vcvt.s32.f32 %v2748
          %v2765 = vcvt.s32.f32 %v2749
          %v2766 = vcvt.s32.f32 %v2750
          %v2767 = vcvt.s32.f32 %v2751
          %v2768 = vcvt.s32.f32 %v2752
          %v2769 = vcvt.s32.f32 %v2753
          %v2770 = vcvt.s32.f32 %v2754
          %v2771 = vcvt.s32.f32 %v2755
          %v2772 = vcvt.s32.f32 %v2756
          %v2773 = vcvt.s32.f32 %v2757
          %v2774 = vsub.f32 %v2758, 1.0
          %v2775 = vsub.f32 %v2759, 1.0
          %v2776 = vsub.f32 %v2760, 1.0
          %v2777 = vsub.f32 %v2761, 1.0
          %v2778 = vsub.f32 %v2762, 1.0
          %v2779 = vsub.f32 %v2763, 1.0
          %v2780 = vsub.f32 %v2764, 1.0
          %v2781 = vsub.f32 %v2765, 1.0
          %v2782 = vsub.f32 %v2766, 1.0
          %v2783 = vsub.f32 %v2767, 1.0
          %v2784 = vsub.f32 %v2768, 1.0
          %v2785 = vsub.f32 %v2769, 1.0
          %v2786 = vsub.f32 %v2770, 1.0
          %v2787 = vsub.f32 %v2771, 1.0
          %v2788 = vsub.f32 %v2772, 1.0
          %v2789 = vsub.f32 %v2773, 1.0
          %v2790 = vmul.f32 %v2774, 1e+30
          %v2791 = vmul.f32 %v2775, 1e+30
          %v2792 = vmul.f32 %v2776, 1e+30
          %v2793 = vmul.f32 %v2777, 1e+30
          %v2794 = vmul.f32 %v2778, 1e+30
          %v2795 = vmul.f32 %v2779, 1e+30
          %v2796 = vmul.f32 %v2780, 1e+30
          %v2797 = vmul.f32 %v2781, 1e+30
          %v2798 = vmul.f32 %v2782, 1e+30
          %v2799 = vmul.f32 %v2783, 1e+30
          %v2800 = vmul.f32 %v2784, 1e+30
          %v2801 = vmul.f32 %v2785, 1e+30
          %v2802 = vmul.f32 %v2786, 1e+30
          %v2803 = vmul.f32 %v2787, 1e+30
          %v2804 = vmul.f32 %v2788, 1e+30
          %v2805 = vmul.f32 %v2789, 1e+30
          %2807 = vset.pattern.permute.xlu0 0
          %2808 = vperm.xlu0 %2807, %v2790
          %v2809 = vpop.permute.xlu0 %2808
          %2812 = vset.pattern.permute.xlu0 0
          %2813 = vperm.xlu0 %2812, %v2791
          %v2814 = vpop.permute.xlu0 %2813
          %2817 = vset.pattern.permute.xlu0 0
          %2818 = vperm.xlu0 %2817, %v2792
          %v2819 = vpop.permute.xlu0 %2818
          %2822 = vset.pattern.permute.xlu0 0
          %2823 = vperm.xlu0 %2822, %v2793
          %v2824 = vpop.permute.xlu0 %2823
          %2827 = vset.pattern.permute.xlu0 0
          %2828 = vperm.xlu0 %2827, %v2794
          %v2829 = vpop.permute.xlu0 %2828
          %2832 = vset.pattern.permute.xlu0 0
          %2833 = vperm.xlu0 %2832, %v2795
          %v2834 = vpop.permute.xlu0 %2833
          %2837 = vset.pattern.permute.xlu0 0
          %2838 = vperm.xlu0 %2837, %v2796
          %v2839 = vpop.permute.xlu0 %2838
          %2842 = vset.pattern.permute.xlu0 0
          %2843 = vperm.xlu0 %2842, %v2797
          %v2844 = vpop.permute.xlu0 %2843
          %2847 = vset.pattern.permute.xlu0 0
          %2848 = vperm.xlu0 %2847, %v2798
          %v2849 = vpop.permute.xlu0 %2848
          %2852 = vset.pattern.permute.xlu0 0
          %2853 = vperm.xlu0 %2852, %v2799
          %v2854 = vpop.permute.xlu0 %2853
          %2857 = vset.pattern.permute.xlu0 0
          %2858 = vperm.xlu0 %2857, %v2800
          %v2859 = vpop.permute.xlu0 %2858
          %2862 = vset.pattern.permute.xlu0 0
          %2863 = vperm.xlu0 %2862, %v2801
          %v2864 = vpop.permute.xlu0 %2863
          %2867 = vset.pattern.permute.xlu0 0
          %2868 = vperm.xlu0 %2867, %v2802
          %v2869 = vpop.permute.xlu0 %2868
          %2872 = vset.pattern.permute.xlu0 0
          %2873 = vperm.xlu0 %2872, %v2803
          %v2874 = vpop.permute.xlu0 %2873
          %2877 = vset.pattern.permute.xlu0 0
          %2878 = vperm.xlu0 %2877, %v2804
          %v2879 = vpop.permute.xlu0 %2878
          %2882 = vset.pattern.permute.xlu0 0
          %2883 = vperm.xlu0 %2882, %v2805
          %v2884 = vpop.permute.xlu0 %2883
          %v2886 = vadd.f32 %v1221, %v2809
          %v2887 = vadd.f32 %v1222, %v2814
          %v2888 = vadd.f32 %v1223, %v2819
          %v2889 = vadd.f32 %v1224, %v2824
          %v2890 = vadd.f32 %v1225, %v2829
          %v2891 = vadd.f32 %v1226, %v2834
          %v2892 = vadd.f32 %v1227, %v2839
          %v2893 = vadd.f32 %v1228, %v2844
          %v2894 = vadd.f32 %v1229, %v2849
          %v2895 = vadd.f32 %v1230, %v2854
          %v2896 = vadd.f32 %v1231, %v2859
          %v2897 = vadd.f32 %v1232, %v2864
          %v2898 = vadd.f32 %v1233, %v2869
          %v2899 = vadd.f32 %v1234, %v2874
          %v2900 = vadd.f32 %v1235, %v2879
          %v2901 = vadd.f32 %v1236, %v2884
          %v2902 = vmax.f32 %v2886, %v2890
          %v2903 = vmax.f32 %v2887, %v2891
          %v2904 = vmax.f32 %v2888, %v2892
          %v2905 = vmax.f32 %v2889, %v2893
          %v2906 = vmax.f32 %v2902, %v2894
          %v2907 = vmax.f32 %v2903, %v2895
          %v2908 = vmax.f32 %v2904, %v2896
          %v2909 = vmax.f32 %v2905, %v2897
          %v2910 = vmax.f32 %v2906, %v2898
          %v2911 = vmax.f32 %v2907, %v2899
          %v2912 = vmax.f32 %v2908, %v2900
          %v2913 = vmax.f32 %v2909, %v2901
          %v2914 = vmax.f32 %v2910, %v2911
          %v2915 = vmax.f32 %v2912, %v2913
          %v2916 = vmax.f32 %v2914, %v2915
          %v2917 = vrot.slane %v2916, 4
          %v2918 = vmax.f32 %v2916, %v2917
          %v2919 = vrot.slane %v2918, 2
          %v2920 = vmax.f32 %v2918, %v2919
          %v2921 = vrot.slane %v2920, 1
          %v2922 = vmax.f32 %v2920, %v2921
          %s2923 = sadd.s32 %s1928, 5
          %v2924 = vstv %s2923
          %vm2925 = vcmp.eq.s32.totalorder %v1772, %v2924
          %vm2926 = vcmp.eq.s32.totalorder %v1773, %v2924
          %vm2927 = vcmp.eq.s32.totalorder %v1774, %v2924
          %vm2928 = vcmp.eq.s32.totalorder %v1775, %v2924
          %vm2929 = vcmp.eq.s32.totalorder %v1776, %v2924
          %vm2930 = vcmp.eq.s32.totalorder %v1777, %v2924
          %vm2931 = vcmp.eq.s32.totalorder %v1778, %v2924
          %vm2932 = vcmp.eq.s32.totalorder %v1779, %v2924
          %vm2933 = vcmp.eq.s32.totalorder %v1780, %v2924
          %vm2934 = vcmp.eq.s32.totalorder %v1781, %v2924
          %vm2935 = vcmp.eq.s32.totalorder %v1782, %v2924
          %vm2936 = vcmp.eq.s32.totalorder %v1783, %v2924
          %vm2937 = vcmp.eq.s32.totalorder %v1784, %v2924
          %vm2938 = vcmp.eq.s32.totalorder %v1785, %v2924
          %vm2939 = vcmp.eq.s32.totalorder %v1786, %v2924
          %vm2940 = vcmp.eq.s32.totalorder %v1787, %v2924
          %v2941 = vsel %vm2925, 1, 0
          %v2942 = vsel %vm2926, 1, 0
          %v2943 = vsel %vm2927, 1, 0
          %v2944 = vsel %vm2928, 1, 0
          %v2945 = vsel %vm2929, 1, 0
          %v2946 = vsel %vm2930, 1, 0
          %v2947 = vsel %vm2931, 1, 0
          %v2948 = vsel %vm2932, 1, 0
          %v2949 = vsel %vm2933, 1, 0
          %v2950 = vsel %vm2934, 1, 0
          %v2951 = vsel %vm2935, 1, 0
          %v2952 = vsel %vm2936, 1, 0
          %v2953 = vsel %vm2937, 1, 0
          %v2954 = vsel %vm2938, 1, 0
          %v2955 = vsel %vm2939, 1, 0
          %v2956 = vsel %vm2940, 1, 0
          %v2957 = vcvt.s32.f32 %v2941
          %v2958 = vcvt.s32.f32 %v2942
          %v2959 = vcvt.s32.f32 %v2943
          %v2960 = vcvt.s32.f32 %v2944
          %v2961 = vcvt.s32.f32 %v2945
          %v2962 = vcvt.s32.f32 %v2946
          %v2963 = vcvt.s32.f32 %v2947
          %v2964 = vcvt.s32.f32 %v2948
          %v2965 = vcvt.s32.f32 %v2949
          %v2966 = vcvt.s32.f32 %v2950
          %v2967 = vcvt.s32.f32 %v2951
          %v2968 = vcvt.s32.f32 %v2952
          %v2969 = vcvt.s32.f32 %v2953
          %v2970 = vcvt.s32.f32 %v2954
          %v2971 = vcvt.s32.f32 %v2955
          %v2972 = vcvt.s32.f32 %v2956
          %v2973 = vsub.f32 %v2957, 1.0
          %v2974 = vsub.f32 %v2958, 1.0
          %v2975 = vsub.f32 %v2959, 1.0
          %v2976 = vsub.f32 %v2960, 1.0
          %v2977 = vsub.f32 %v2961, 1.0
          %v2978 = vsub.f32 %v2962, 1.0
          %v2979 = vsub.f32 %v2963, 1.0
          %v2980 = vsub.f32 %v2964, 1.0
          %v2981 = vsub.f32 %v2965, 1.0
          %v2982 = vsub.f32 %v2966, 1.0
          %v2983 = vsub.f32 %v2967, 1.0
          %v2984 = vsub.f32 %v2968, 1.0
          %v2985 = vsub.f32 %v2969, 1.0
          %v2986 = vsub.f32 %v2970, 1.0
          %v2987 = vsub.f32 %v2971, 1.0
          %v2988 = vsub.f32 %v2972, 1.0
          %v2989 = vmul.f32 %v2973, 1e+30
          %v2990 = vmul.f32 %v2974, 1e+30
          %v2991 = vmul.f32 %v2975, 1e+30
          %v2992 = vmul.f32 %v2976, 1e+30
          %v2993 = vmul.f32 %v2977, 1e+30
          %v2994 = vmul.f32 %v2978, 1e+30
          %v2995 = vmul.f32 %v2979, 1e+30
          %v2996 = vmul.f32 %v2980, 1e+30
          %v2997 = vmul.f32 %v2981, 1e+30
          %v2998 = vmul.f32 %v2982, 1e+30
          %v2999 = vmul.f32 %v2983, 1e+30
          %v3000 = vmul.f32 %v2984, 1e+30
          %v3001 = vmul.f32 %v2985, 1e+30
          %v3002 = vmul.f32 %v2986, 1e+30
          %v3003 = vmul.f32 %v2987, 1e+30
          %v3004 = vmul.f32 %v2988, 1e+30
          %3006 = vset.pattern.permute.xlu0 0
          %3007 = vperm.xlu0 %3006, %v2989
          %v3008 = vpop.permute.xlu0 %3007
          %3011 = vset.pattern.permute.xlu0 0
          %3012 = vperm.xlu0 %3011, %v2990
          %v3013 = vpop.permute.xlu0 %3012
          %3016 = vset.pattern.permute.xlu0 0
          %3017 = vperm.xlu0 %3016, %v2991
          %v3018 = vpop.permute.xlu0 %3017
          %3021 = vset.pattern.permute.xlu0 0
          %3022 = vperm.xlu0 %3021, %v2992
          %v3023 = vpop.permute.xlu0 %3022
          %3026 = vset.pattern.permute.xlu0 0
          %3027 = vperm.xlu0 %3026, %v2993
          %v3028 = vpop.permute.xlu0 %3027
          %3031 = vset.pattern.permute.xlu0 0
          %3032 = vperm.xlu0 %3031, %v2994
          %v3033 = vpop.permute.xlu0 %3032
          %3036 = vset.pattern.permute.xlu0 0
          %3037 = vperm.xlu0 %3036, %v2995
          %v3038 = vpop.permute.xlu0 %3037
          %3041 = vset.pattern.permute.xlu0 0
          %3042 = vperm.xlu0 %3041, %v2996
          %v3043 = vpop.permute.xlu0 %3042
          %3046 = vset.pattern.permute.xlu0 0
          %3047 = vperm.xlu0 %3046, %v2997
          %v3048 = vpop.permute.xlu0 %3047
          %3051 = vset.pattern.permute.xlu0 0
          %3052 = vperm.xlu0 %3051, %v2998
          %v3053 = vpop.permute.xlu0 %3052
          %3056 = vset.pattern.permute.xlu0 0
          %3057 = vperm.xlu0 %3056, %v2999
          %v3058 = vpop.permute.xlu0 %3057
          %3061 = vset.pattern.permute.xlu0 0
          %3062 = vperm.xlu0 %3061, %v3000
          %v3063 = vpop.permute.xlu0 %3062
          %3066 = vset.pattern.permute.xlu0 0
          %3067 = vperm.xlu0 %3066, %v3001
          %v3068 = vpop.permute.xlu0 %3067
          %3071 = vset.pattern.permute.xlu0 0
          %3072 = vperm.xlu0 %3071, %v3002
          %v3073 = vpop.permute.xlu0 %3072
          %3076 = vset.pattern.permute.xlu0 0
          %3077 = vperm.xlu0 %3076, %v3003
          %v3078 = vpop.permute.xlu0 %3077
          %3081 = vset.pattern.permute.xlu0 0
          %3082 = vperm.xlu0 %3081, %v3004
          %v3083 = vpop.permute.xlu0 %3082
          %v3085 = vadd.f32 %v1221, %v3008
          %v3086 = vadd.f32 %v1222, %v3013
          %v3087 = vadd.f32 %v1223, %v3018
          %v3088 = vadd.f32 %v1224, %v3023
          %v3089 = vadd.f32 %v1225, %v3028
          %v3090 = vadd.f32 %v1226, %v3033
          %v3091 = vadd.f32 %v1227, %v3038
          %v3092 = vadd.f32 %v1228, %v3043
          %v3093 = vadd.f32 %v1229, %v3048
          %v3094 = vadd.f32 %v1230, %v3053
          %v3095 = vadd.f32 %v1231, %v3058
          %v3096 = vadd.f32 %v1232, %v3063
          %v3097 = vadd.f32 %v1233, %v3068
          %v3098 = vadd.f32 %v1234, %v3073
          %v3099 = vadd.f32 %v1235, %v3078
          %v3100 = vadd.f32 %v1236, %v3083
          %v3101 = vmax.f32 %v3085, %v3089
          %v3102 = vmax.f32 %v3086, %v3090
          %v3103 = vmax.f32 %v3087, %v3091
          %v3104 = vmax.f32 %v3088, %v3092
          %v3105 = vmax.f32 %v3101, %v3093
          %v3106 = vmax.f32 %v3102, %v3094
          %v3107 = vmax.f32 %v3103, %v3095
          %v3108 = vmax.f32 %v3104, %v3096
          %v3109 = vmax.f32 %v3105, %v3097
          %v3110 = vmax.f32 %v3106, %v3098
          %v3111 = vmax.f32 %v3107, %v3099
          %v3112 = vmax.f32 %v3108, %v3100
          %v3113 = vmax.f32 %v3109, %v3110
          %v3114 = vmax.f32 %v3111, %v3112
          %v3115 = vmax.f32 %v3113, %v3114
          %v3116 = vrot.slane %v3115, 4
          %v3117 = vmax.f32 %v3115, %v3116
          %v3118 = vrot.slane %v3117, 2
          %v3119 = vmax.f32 %v3117, %v3118
          %v3120 = vrot.slane %v3119, 1
          %v3121 = vmax.f32 %v3119, %v3120
          %s3122 = sadd.s32 %s1928, 6
          %v3123 = vstv %s3122
          %vm3124 = vcmp.eq.s32.totalorder %v1772, %v3123
          %vm3125 = vcmp.eq.s32.totalorder %v1773, %v3123
          %vm3126 = vcmp.eq.s32.totalorder %v1774, %v3123
          %vm3127 = vcmp.eq.s32.totalorder %v1775, %v3123
          %vm3128 = vcmp.eq.s32.totalorder %v1776, %v3123
          %vm3129 = vcmp.eq.s32.totalorder %v1777, %v3123
          %vm3130 = vcmp.eq.s32.totalorder %v1778, %v3123
          %vm3131 = vcmp.eq.s32.totalorder %v1779, %v3123
          %vm3132 = vcmp.eq.s32.totalorder %v1780, %v3123
          %vm3133 = vcmp.eq.s32.totalorder %v1781, %v3123
          %vm3134 = vcmp.eq.s32.totalorder %v1782, %v3123
          %vm3135 = vcmp.eq.s32.totalorder %v1783, %v3123
          %vm3136 = vcmp.eq.s32.totalorder %v1784, %v3123
          %vm3137 = vcmp.eq.s32.totalorder %v1785, %v3123
          %vm3138 = vcmp.eq.s32.totalorder %v1786, %v3123
          %vm3139 = vcmp.eq.s32.totalorder %v1787, %v3123
          %v3140 = vsel %vm3124, 1, 0
          %v3141 = vsel %vm3125, 1, 0
          %v3142 = vsel %vm3126, 1, 0
          %v3143 = vsel %vm3127, 1, 0
          %v3144 = vsel %vm3128, 1, 0
          %v3145 = vsel %vm3129, 1, 0
          %v3146 = vsel %vm3130, 1, 0
          %v3147 = vsel %vm3131, 1, 0
          %v3148 = vsel %vm3132, 1, 0
          %v3149 = vsel %vm3133, 1, 0
          %v3150 = vsel %vm3134, 1, 0
          %v3151 = vsel %vm3135, 1, 0
          %v3152 = vsel %vm3136, 1, 0
          %v3153 = vsel %vm3137, 1, 0
          %v3154 = vsel %vm3138, 1, 0
          %v3155 = vsel %vm3139, 1, 0
          %v3156 = vcvt.s32.f32 %v3140
          %v3157 = vcvt.s32.f32 %v3141
          %v3158 = vcvt.s32.f32 %v3142
          %v3159 = vcvt.s32.f32 %v3143
          %v3160 = vcvt.s32.f32 %v3144
          %v3161 = vcvt.s32.f32 %v3145
          %v3162 = vcvt.s32.f32 %v3146
          %v3163 = vcvt.s32.f32 %v3147
          %v3164 = vcvt.s32.f32 %v3148
          %v3165 = vcvt.s32.f32 %v3149
          %v3166 = vcvt.s32.f32 %v3150
          %v3167 = vcvt.s32.f32 %v3151
          %v3168 = vcvt.s32.f32 %v3152
          %v3169 = vcvt.s32.f32 %v3153
          %v3170 = vcvt.s32.f32 %v3154
          %v3171 = vcvt.s32.f32 %v3155
          %v3172 = vsub.f32 %v3156, 1.0
          %v3173 = vsub.f32 %v3157, 1.0
          %v3174 = vsub.f32 %v3158, 1.0
          %v3175 = vsub.f32 %v3159, 1.0
          %v3176 = vsub.f32 %v3160, 1.0
          %v3177 = vsub.f32 %v3161, 1.0
          %v3178 = vsub.f32 %v3162, 1.0
          %v3179 = vsub.f32 %v3163, 1.0
          %v3180 = vsub.f32 %v3164, 1.0
          %v3181 = vsub.f32 %v3165, 1.0
          %v3182 = vsub.f32 %v3166, 1.0
          %v3183 = vsub.f32 %v3167, 1.0
          %v3184 = vsub.f32 %v3168, 1.0
          %v3185 = vsub.f32 %v3169, 1.0
          %v3186 = vsub.f32 %v3170, 1.0
          %v3187 = vsub.f32 %v3171, 1.0
          %v3188 = vmul.f32 %v3172, 1e+30
          %v3189 = vmul.f32 %v3173, 1e+30
          %v3190 = vmul.f32 %v3174, 1e+30
          %v3191 = vmul.f32 %v3175, 1e+30
          %v3192 = vmul.f32 %v3176, 1e+30
          %v3193 = vmul.f32 %v3177, 1e+30
          %v3194 = vmul.f32 %v3178, 1e+30
          %v3195 = vmul.f32 %v3179, 1e+30
          %v3196 = vmul.f32 %v3180, 1e+30
          %v3197 = vmul.f32 %v3181, 1e+30
          %v3198 = vmul.f32 %v3182, 1e+30
          %v3199 = vmul.f32 %v3183, 1e+30
          %v3200 = vmul.f32 %v3184, 1e+30
          %v3201 = vmul.f32 %v3185, 1e+30
          %v3202 = vmul.f32 %v3186, 1e+30
          %v3203 = vmul.f32 %v3187, 1e+30
          %3205 = vset.pattern.permute.xlu0 0
          %3206 = vperm.xlu0 %3205, %v3188
          %v3207 = vpop.permute.xlu0 %3206
          %3210 = vset.pattern.permute.xlu0 0
          %3211 = vperm.xlu0 %3210, %v3189
          %v3212 = vpop.permute.xlu0 %3211
          %3215 = vset.pattern.permute.xlu0 0
          %3216 = vperm.xlu0 %3215, %v3190
          %v3217 = vpop.permute.xlu0 %3216
          %3220 = vset.pattern.permute.xlu0 0
          %3221 = vperm.xlu0 %3220, %v3191
          %v3222 = vpop.permute.xlu0 %3221
          %3225 = vset.pattern.permute.xlu0 0
          %3226 = vperm.xlu0 %3225, %v3192
          %v3227 = vpop.permute.xlu0 %3226
          %3230 = vset.pattern.permute.xlu0 0
          %3231 = vperm.xlu0 %3230, %v3193
          %v3232 = vpop.permute.xlu0 %3231
          %3235 = vset.pattern.permute.xlu0 0
          %3236 = vperm.xlu0 %3235, %v3194
          %v3237 = vpop.permute.xlu0 %3236
          %3240 = vset.pattern.permute.xlu0 0
          %3241 = vperm.xlu0 %3240, %v3195
          %v3242 = vpop.permute.xlu0 %3241
          %3245 = vset.pattern.permute.xlu0 0
          %3246 = vperm.xlu0 %3245, %v3196
          %v3247 = vpop.permute.xlu0 %3246
          %3250 = vset.pattern.permute.xlu0 0
          %3251 = vperm.xlu0 %3250, %v3197
          %v3252 = vpop.permute.xlu0 %3251
          %3255 = vset.pattern.permute.xlu0 0
          %3256 = vperm.xlu0 %3255, %v3198
          %v3257 = vpop.permute.xlu0 %3256
          %3260 = vset.pattern.permute.xlu0 0
          %3261 = vperm.xlu0 %3260, %v3199
          %v3262 = vpop.permute.xlu0 %3261
          %3265 = vset.pattern.permute.xlu0 0
          %3266 = vperm.xlu0 %3265, %v3200
          %v3267 = vpop.permute.xlu0 %3266
          %3270 = vset.pattern.permute.xlu0 0
          %3271 = vperm.xlu0 %3270, %v3201
          %v3272 = vpop.permute.xlu0 %3271
          %3275 = vset.pattern.permute.xlu0 0
          %3276 = vperm.xlu0 %3275, %v3202
          %v3277 = vpop.permute.xlu0 %3276
          %3280 = vset.pattern.permute.xlu0 0
          %3281 = vperm.xlu0 %3280, %v3203
          %v3282 = vpop.permute.xlu0 %3281
          %v3284 = vadd.f32 %v1221, %v3207
          %v3285 = vadd.f32 %v1222, %v3212
          %v3286 = vadd.f32 %v1223, %v3217
          %v3287 = vadd.f32 %v1224, %v3222
          %v3288 = vadd.f32 %v1225, %v3227
          %v3289 = vadd.f32 %v1226, %v3232
          %v3290 = vadd.f32 %v1227, %v3237
          %v3291 = vadd.f32 %v1228, %v3242
          %v3292 = vadd.f32 %v1229, %v3247
          %v3293 = vadd.f32 %v1230, %v3252
          %v3294 = vadd.f32 %v1231, %v3257
          %v3295 = vadd.f32 %v1232, %v3262
          %v3296 = vadd.f32 %v1233, %v3267
          %v3297 = vadd.f32 %v1234, %v3272
          %v3298 = vadd.f32 %v1235, %v3277
          %v3299 = vadd.f32 %v1236, %v3282
          %v3300 = vmax.f32 %v3284, %v3288
          %v3301 = vmax.f32 %v3285, %v3289
          %v3302 = vmax.f32 %v3286, %v3290
          %v3303 = vmax.f32 %v3287, %v3291
          %v3304 = vmax.f32 %v3300, %v3292
          %v3305 = vmax.f32 %v3301, %v3293
          %v3306 = vmax.f32 %v3302, %v3294
          %v3307 = vmax.f32 %v3303, %v3295
          %v3308 = vmax.f32 %v3304, %v3296
          %v3309 = vmax.f32 %v3305, %v3297
          %v3310 = vmax.f32 %v3306, %v3298
          %v3311 = vmax.f32 %v3307, %v3299
          %v3312 = vmax.f32 %v3308, %v3309
          %v3313 = vmax.f32 %v3310, %v3311
          %v3314 = vmax.f32 %v3312, %v3313
          %v3315 = vrot.slane %v3314, 4
          %v3316 = vmax.f32 %v3314, %v3315
          %v3317 = vrot.slane %v3316, 2
          %v3318 = vmax.f32 %v3316, %v3317
          %v3319 = vrot.slane %v3318, 1
          %v3320 = vmax.f32 %v3318, %v3319
          %s3321 = sadd.s32 %s1928, 7
          %v3322 = vstv %s3321
          %vm3323 = vcmp.eq.s32.totalorder %v1772, %v3322
          %vm3324 = vcmp.eq.s32.totalorder %v1773, %v3322
          %vm3325 = vcmp.eq.s32.totalorder %v1774, %v3322
          %vm3326 = vcmp.eq.s32.totalorder %v1775, %v3322
          %vm3327 = vcmp.eq.s32.totalorder %v1776, %v3322
          %vm3328 = vcmp.eq.s32.totalorder %v1777, %v3322
          %vm3329 = vcmp.eq.s32.totalorder %v1778, %v3322
          %vm3330 = vcmp.eq.s32.totalorder %v1779, %v3322
          %vm3331 = vcmp.eq.s32.totalorder %v1780, %v3322
          %vm3332 = vcmp.eq.s32.totalorder %v1781, %v3322
          %vm3333 = vcmp.eq.s32.totalorder %v1782, %v3322
          %vm3334 = vcmp.eq.s32.totalorder %v1783, %v3322
          %vm3335 = vcmp.eq.s32.totalorder %v1784, %v3322
          %vm3336 = vcmp.eq.s32.totalorder %v1785, %v3322
          %vm3337 = vcmp.eq.s32.totalorder %v1786, %v3322
          %vm3338 = vcmp.eq.s32.totalorder %v1787, %v3322
          %v3339 = vsel %vm3323, 1, 0
          %v3340 = vsel %vm3324, 1, 0
          %v3341 = vsel %vm3325, 1, 0
          %v3342 = vsel %vm3326, 1, 0
          %v3343 = vsel %vm3327, 1, 0
          %v3344 = vsel %vm3328, 1, 0
          %v3345 = vsel %vm3329, 1, 0
          %v3346 = vsel %vm3330, 1, 0
          %v3347 = vsel %vm3331, 1, 0
          %v3348 = vsel %vm3332, 1, 0
          %v3349 = vsel %vm3333, 1, 0
          %v3350 = vsel %vm3334, 1, 0
          %v3351 = vsel %vm3335, 1, 0
          %v3352 = vsel %vm3336, 1, 0
          %v3353 = vsel %vm3337, 1, 0
          %v3354 = vsel %vm3338, 1, 0
          %v3355 = vcvt.s32.f32 %v3339
          %v3356 = vcvt.s32.f32 %v3340
          %v3357 = vcvt.s32.f32 %v3341
          %v3358 = vcvt.s32.f32 %v3342
          %v3359 = vcvt.s32.f32 %v3343
          %v3360 = vcvt.s32.f32 %v3344
          %v3361 = vcvt.s32.f32 %v3345
          %v3362 = vcvt.s32.f32 %v3346
          %v3363 = vcvt.s32.f32 %v3347
          %v3364 = vcvt.s32.f32 %v3348
          %v3365 = vcvt.s32.f32 %v3349
          %v3366 = vcvt.s32.f32 %v3350
          %v3367 = vcvt.s32.f32 %v3351
          %v3368 = vcvt.s32.f32 %v3352
          %v3369 = vcvt.s32.f32 %v3353
          %v3370 = vcvt.s32.f32 %v3354
          %v3371 = vsub.f32 %v3355, 1.0
          %v3372 = vsub.f32 %v3356, 1.0
          %v3373 = vsub.f32 %v3357, 1.0
          %v3374 = vsub.f32 %v3358, 1.0
          %v3375 = vsub.f32 %v3359, 1.0
          %v3376 = vsub.f32 %v3360, 1.0
          %v3377 = vsub.f32 %v3361, 1.0
          %v3378 = vsub.f32 %v3362, 1.0
          %v3379 = vsub.f32 %v3363, 1.0
          %v3380 = vsub.f32 %v3364, 1.0
          %v3381 = vsub.f32 %v3365, 1.0
          %v3382 = vsub.f32 %v3366, 1.0
          %v3383 = vsub.f32 %v3367, 1.0
          %v3384 = vsub.f32 %v3368, 1.0
          %v3385 = vsub.f32 %v3369, 1.0
          %v3386 = vsub.f32 %v3370, 1.0
          %v3387 = vmul.f32 %v3371, 1e+30
          %v3388 = vmul.f32 %v3372, 1e+30
          %v3389 = vmul.f32 %v3373, 1e+30
          %v3390 = vmul.f32 %v3374, 1e+30
          %v3391 = vmul.f32 %v3375, 1e+30
          %v3392 = vmul.f32 %v3376, 1e+30
          %v3393 = vmul.f32 %v3377, 1e+30
          %v3394 = vmul.f32 %v3378, 1e+30
          %v3395 = vmul.f32 %v3379, 1e+30
          %v3396 = vmul.f32 %v3380, 1e+30
          %v3397 = vmul.f32 %v3381, 1e+30
          %v3398 = vmul.f32 %v3382, 1e+30
          %v3399 = vmul.f32 %v3383, 1e+30
          %v3400 = vmul.f32 %v3384, 1e+30
          %v3401 = vmul.f32 %v3385, 1e+30
          %v3402 = vmul.f32 %v3386, 1e+30
          %3404 = vset.pattern.permute.xlu0 0
          %3405 = vperm.xlu0 %3404, %v3387
          %v3406 = vpop.permute.xlu0 %3405
          %3409 = vset.pattern.permute.xlu0 0
          %3410 = vperm.xlu0 %3409, %v3388
          %v3411 = vpop.permute.xlu0 %3410
          %3414 = vset.pattern.permute.xlu0 0
          %3415 = vperm.xlu0 %3414, %v3389
          %v3416 = vpop.permute.xlu0 %3415
          %3419 = vset.pattern.permute.xlu0 0
          %3420 = vperm.xlu0 %3419, %v3390
          %v3421 = vpop.permute.xlu0 %3420
          %3424 = vset.pattern.permute.xlu0 0
          %3425 = vperm.xlu0 %3424, %v3391
          %v3426 = vpop.permute.xlu0 %3425
          %3429 = vset.pattern.permute.xlu0 0
          %3430 = vperm.xlu0 %3429, %v3392
          %v3431 = vpop.permute.xlu0 %3430
          %3434 = vset.pattern.permute.xlu0 0
          %3435 = vperm.xlu0 %3434, %v3393
          %v3436 = vpop.permute.xlu0 %3435
          %3439 = vset.pattern.permute.xlu0 0
          %3440 = vperm.xlu0 %3439, %v3394
          %v3441 = vpop.permute.xlu0 %3440
          %3444 = vset.pattern.permute.xlu0 0
          %3445 = vperm.xlu0 %3444, %v3395
          %v3446 = vpop.permute.xlu0 %3445
          %3449 = vset.pattern.permute.xlu0 0
          %3450 = vperm.xlu0 %3449, %v3396
          %v3451 = vpop.permute.xlu0 %3450
          %3454 = vset.pattern.permute.xlu0 0
          %3455 = vperm.xlu0 %3454, %v3397
          %v3456 = vpop.permute.xlu0 %3455
          %3459 = vset.pattern.permute.xlu0 0
          %3460 = vperm.xlu0 %3459, %v3398
          %v3461 = vpop.permute.xlu0 %3460
          %3464 = vset.pattern.permute.xlu0 0
          %3465 = vperm.xlu0 %3464, %v3399
          %v3466 = vpop.permute.xlu0 %3465
          %3469 = vset.pattern.permute.xlu0 0
          %3470 = vperm.xlu0 %3469, %v3400
          %v3471 = vpop.permute.xlu0 %3470
          %3474 = vset.pattern.permute.xlu0 0
          %3475 = vperm.xlu0 %3474, %v3401
          %v3476 = vpop.permute.xlu0 %3475
          %3479 = vset.pattern.permute.xlu0 0
          %3480 = vperm.xlu0 %3479, %v3402
          %v3481 = vpop.permute.xlu0 %3480
          %v3483 = vadd.f32 %v1221, %v3406
          %v3484 = vadd.f32 %v1222, %v3411
          %v3485 = vadd.f32 %v1223, %v3416
          %v3486 = vadd.f32 %v1224, %v3421
          %v3487 = vadd.f32 %v1225, %v3426
          %v3488 = vadd.f32 %v1226, %v3431
          %v3489 = vadd.f32 %v1227, %v3436
          %v3490 = vadd.f32 %v1228, %v3441
          %v3491 = vadd.f32 %v1229, %v3446
          %v3492 = vadd.f32 %v1230, %v3451
          %v3493 = vadd.f32 %v1231, %v3456
          %v3494 = vadd.f32 %v1232, %v3461
          %v3495 = vadd.f32 %v1233, %v3466
          %v3496 = vadd.f32 %v1234, %v3471
          %v3497 = vadd.f32 %v1235, %v3476
          %v3498 = vadd.f32 %v1236, %v3481
          %v3499 = vmax.f32 %v3483, %v3487
          %v3500 = vmax.f32 %v3484, %v3488
          %v3501 = vmax.f32 %v3485, %v3489
          %v3502 = vmax.f32 %v3486, %v3490
          %v3503 = vmax.f32 %v3499, %v3491
          %v3504 = vmax.f32 %v3500, %v3492
          %v3505 = vmax.f32 %v3501, %v3493
          %v3506 = vmax.f32 %v3502, %v3494
          %v3507 = vmax.f32 %v3503, %v3495
          %v3508 = vmax.f32 %v3504, %v3496
          %v3509 = vmax.f32 %v3505, %v3497
          %v3510 = vmax.f32 %v3506, %v3498
          %v3511 = vmax.f32 %v3507, %v3508
          %v3512 = vmax.f32 %v3509, %v3510
          %v3513 = vmax.f32 %v3511, %v3512
          %v3514 = vrot.slane %v3513, 4
          %v3515 = vmax.f32 %v3513, %v3514
          %v3516 = vrot.slane %v3515, 2
          %v3517 = vmax.f32 %v3515, %v3516
          %v3518 = vrot.slane %v3517, 1
          %v3519 = vmax.f32 %v3517, %v3518
          %vm3520 = vcmask 1040384
          %v3521 = vsel %vm3520, %v2126, %v2325
          %vm3522 = vcmask 1041408
          %v3523 = vsel %vm3522, %v3521, %v2524
          %vm3524 = vcmask 1042432
          %v3525 = vsel %vm3524, %v3523, %v2723
          %vm3526 = vcmask 1043456
          %v3527 = vsel %vm3526, %v3525, %v2922
          %vm3528 = vcmask 1044480
          %v3529 = vsel %vm3528, %v3527, %v3121
          %vm3530 = vcmask 1045504
          %v3531 = vsel %vm3530, %v3529, %v3320
          %vm3532 = vcmask 1046528
          %v3533 = vsel %vm3532, %v3531, %v3519
          %s3534 = scalar_lea.vmem [#allocation3], %s1928
          %v3535 = vld [vmem:[%s3534] sm:$0xff]
          %v3536 = vmax.f32 %v3535, %v3533
          %3537 = vst [vmem:[%s3534] sm:$0xff] %v3536
        $region113: #{tpu_custom_call.1} parent=103 // loop_footer
          %s1927 = sadd.s32 1, %s1923
        $region114: #{tpu_custom_call.1} parent=103 // loop_footer_branch
          %1922 = sbr.rel target = $region110
        $region115: #{tpu_custom_call.1} parent=103 // loop_exit
          _
        loop: start=0, step=1, limit=2
        $region116: #{tpu_custom_call.1} parent=103 // loop_pre_header
          _
        $region117: #{tpu_custom_call.1} parent=103 // loop_header
          %s3539 = sphi 0, %s3543
          %p3540 = scmp.ge.s32.totalorder %s3539, 2
        $region118: #{tpu_custom_call.1} parent=103 // loop_header_branch
          %3542 = sbr.rel (%p3540) target = $region122
        $region119: #{tpu_custom_call.1} parent=103 // loop_body
          %s3544 = smul.u32 %s3539, 8
          %s3545 = sadd.s32 %s3544, 16
          %v3546 = vstv %s3545
          %vm3547 = vcmp.eq.s32.totalorder %v1788, %v3546
          %vm3548 = vcmp.eq.s32.totalorder %v1789, %v3546
          %vm3549 = vcmp.eq.s32.totalorder %v1790, %v3546
          %vm3550 = vcmp.eq.s32.totalorder %v1791, %v3546
          %vm3551 = vcmp.eq.s32.totalorder %v1792, %v3546
          %vm3552 = vcmp.eq.s32.totalorder %v1793, %v3546
          %vm3553 = vcmp.eq.s32.totalorder %v1794, %v3546
          %vm3554 = vcmp.eq.s32.totalorder %v1795, %v3546
          %vm3555 = vcmp.eq.s32.totalorder %v1796, %v3546
          %vm3556 = vcmp.eq.s32.totalorder %v1797, %v3546
          %vm3557 = vcmp.eq.s32.totalorder %v1798, %v3546
          %vm3558 = vcmp.eq.s32.totalorder %v1799, %v3546
          %vm3559 = vcmp.eq.s32.totalorder %v1800, %v3546
          %vm3560 = vcmp.eq.s32.totalorder %v1801, %v3546
          %vm3561 = vcmp.eq.s32.totalorder %v1802, %v3546
          %vm3562 = vcmp.eq.s32.totalorder %v1803, %v3546
          %v3563 = vsel %vm3547, 1, 0
          %v3564 = vsel %vm3548, 1, 0
          %v3565 = vsel %vm3549, 1, 0
          %v3566 = vsel %vm3550, 1, 0
          %v3567 = vsel %vm3551, 1, 0
          %v3568 = vsel %vm3552, 1, 0
          %v3569 = vsel %vm3553, 1, 0
          %v3570 = vsel %vm3554, 1, 0
          %v3571 = vsel %vm3555, 1, 0
          %v3572 = vsel %vm3556, 1, 0
          %v3573 = vsel %vm3557, 1, 0
          %v3574 = vsel %vm3558, 1, 0
          %v3575 = vsel %vm3559, 1, 0
          %v3576 = vsel %vm3560, 1, 0
          %v3577 = vsel %vm3561, 1, 0
          %v3578 = vsel %vm3562, 1, 0
          %v3579 = vcvt.s32.f32 %v3563
          %v3580 = vcvt.s32.f32 %v3564
          %v3581 = vcvt.s32.f32 %v3565
          %v3582 = vcvt.s32.f32 %v3566
          %v3583 = vcvt.s32.f32 %v3567
          %v3584 = vcvt.s32.f32 %v3568
          %v3585 = vcvt.s32.f32 %v3569
          %v3586 = vcvt.s32.f32 %v3570
          %v3587 = vcvt.s32.f32 %v3571
          %v3588 = vcvt.s32.f32 %v3572
          %v3589 = vcvt.s32.f32 %v3573
          %v3590 = vcvt.s32.f32 %v3574
          %v3591 = vcvt.s32.f32 %v3575
          %v3592 = vcvt.s32.f32 %v3576
          %v3593 = vcvt.s32.f32 %v3577
          %v3594 = vcvt.s32.f32 %v3578
          %v3595 = vsub.f32 %v3579, 1.0
          %v3596 = vsub.f32 %v3580, 1.0
          %v3597 = vsub.f32 %v3581, 1.0
          %v3598 = vsub.f32 %v3582, 1.0
          %v3599 = vsub.f32 %v3583, 1.0
          %v3600 = vsub.f32 %v3584, 1.0
          %v3601 = vsub.f32 %v3585, 1.0
          %v3602 = vsub.f32 %v3586, 1.0
          %v3603 = vsub.f32 %v3587, 1.0
          %v3604 = vsub.f32 %v3588, 1.0
          %v3605 = vsub.f32 %v3589, 1.0
          %v3606 = vsub.f32 %v3590, 1.0
          %v3607 = vsub.f32 %v3591, 1.0
          %v3608 = vsub.f32 %v3592, 1.0
          %v3609 = vsub.f32 %v3593, 1.0
          %v3610 = vsub.f32 %v3594, 1.0
          %v3611 = vmul.f32 %v3595, 1e+30
          %v3612 = vmul.f32 %v3596, 1e+30
          %v3613 = vmul.f32 %v3597, 1e+30
          %v3614 = vmul.f32 %v3598, 1e+30
          %v3615 = vmul.f32 %v3599, 1e+30
          %v3616 = vmul.f32 %v3600, 1e+30
          %v3617 = vmul.f32 %v3601, 1e+30
          %v3618 = vmul.f32 %v3602, 1e+30
          %v3619 = vmul.f32 %v3603, 1e+30
          %v3620 = vmul.f32 %v3604, 1e+30
          %v3621 = vmul.f32 %v3605, 1e+30
          %v3622 = vmul.f32 %v3606, 1e+30
          %v3623 = vmul.f32 %v3607, 1e+30
          %v3624 = vmul.f32 %v3608, 1e+30
          %v3625 = vmul.f32 %v3609, 1e+30
          %v3626 = vmul.f32 %v3610, 1e+30
          %3628 = vset.pattern.permute.xlu0 0
          %3629 = vperm.xlu0 %3628, %v3611
          %v3630 = vpop.permute.xlu0 %3629
          %3633 = vset.pattern.permute.xlu0 0
          %3634 = vperm.xlu0 %3633, %v3612
          %v3635 = vpop.permute.xlu0 %3634
          %3638 = vset.pattern.permute.xlu0 0
          %3639 = vperm.xlu0 %3638, %v3613
          %v3640 = vpop.permute.xlu0 %3639
          %3643 = vset.pattern.permute.xlu0 0
          %3644 = vperm.xlu0 %3643, %v3614
          %v3645 = vpop.permute.xlu0 %3644
          %3648 = vset.pattern.permute.xlu0 0
          %3649 = vperm.xlu0 %3648, %v3615
          %v3650 = vpop.permute.xlu0 %3649
          %3653 = vset.pattern.permute.xlu0 0
          %3654 = vperm.xlu0 %3653, %v3616
          %v3655 = vpop.permute.xlu0 %3654
          %3658 = vset.pattern.permute.xlu0 0
          %3659 = vperm.xlu0 %3658, %v3617
          %v3660 = vpop.permute.xlu0 %3659
          %3663 = vset.pattern.permute.xlu0 0
          %3664 = vperm.xlu0 %3663, %v3618
          %v3665 = vpop.permute.xlu0 %3664
          %3668 = vset.pattern.permute.xlu0 0
          %3669 = vperm.xlu0 %3668, %v3619
          %v3670 = vpop.permute.xlu0 %3669
          %3673 = vset.pattern.permute.xlu0 0
          %3674 = vperm.xlu0 %3673, %v3620
          %v3675 = vpop.permute.xlu0 %3674
          %3678 = vset.pattern.permute.xlu0 0
          %3679 = vperm.xlu0 %3678, %v3621
          %v3680 = vpop.permute.xlu0 %3679
          %3683 = vset.pattern.permute.xlu0 0
          %3684 = vperm.xlu0 %3683, %v3622
          %v3685 = vpop.permute.xlu0 %3684
          %3688 = vset.pattern.permute.xlu0 0
          %3689 = vperm.xlu0 %3688, %v3623
          %v3690 = vpop.permute.xlu0 %3689
          %3693 = vset.pattern.permute.xlu0 0
          %3694 = vperm.xlu0 %3693, %v3624
          %v3695 = vpop.permute.xlu0 %3694
          %3698 = vset.pattern.permute.xlu0 0
          %3699 = vperm.xlu0 %3698, %v3625
          %v3700 = vpop.permute.xlu0 %3699
          %3703 = vset.pattern.permute.xlu0 0
          %3704 = vperm.xlu0 %3703, %v3626
          %v3705 = vpop.permute.xlu0 %3704
          %v3707 = vadd.f32 %v1755, %v3630
          %v3708 = vadd.f32 %v1756, %v3635
          %v3709 = vadd.f32 %v1757, %v3640
          %v3710 = vadd.f32 %v1758, %v3645
          %v3711 = vadd.f32 %v1759, %v3650
          %v3712 = vadd.f32 %v1760, %v3655
          %v3713 = vadd.f32 %v1761, %v3660
          %v3714 = vadd.f32 %v1762, %v3665
          %v3715 = vadd.f32 %v1763, %v3670
          %v3716 = vadd.f32 %v1764, %v3675
          %v3717 = vadd.f32 %v1765, %v3680
          %v3718 = vadd.f32 %v1766, %v3685
          %v3719 = vadd.f32 %v1767, %v3690
          %v3720 = vadd.f32 %v1768, %v3695
          %v3721 = vadd.f32 %v1769, %v3700
          %v3722 = vadd.f32 %v1770, %v3705
          %v3723 = vmax.f32 %v3707, %v3711
          %v3724 = vmax.f32 %v3708, %v3712
          %v3725 = vmax.f32 %v3709, %v3713
          %v3726 = vmax.f32 %v3710, %v3714
          %v3727 = vmax.f32 %v3723, %v3715
          %v3728 = vmax.f32 %v3724, %v3716
          %v3729 = vmax.f32 %v3725, %v3717
          %v3730 = vmax.f32 %v3726, %v3718
          %v3731 = vmax.f32 %v3727, %v3719
          %v3732 = vmax.f32 %v3728, %v3720
          %v3733 = vmax.f32 %v3729, %v3721
          %v3734 = vmax.f32 %v3730, %v3722
          %v3735 = vmax.f32 %v3731, %v3732
          %v3736 = vmax.f32 %v3733, %v3734
          %v3737 = vmax.f32 %v3735, %v3736
          %v3738 = vrot.slane %v3737, 4
          %v3739 = vmax.f32 %v3737, %v3738
          %v3740 = vrot.slane %v3739, 2
          %v3741 = vmax.f32 %v3739, %v3740
          %v3742 = vrot.slane %v3741, 1
          %v3743 = vmax.f32 %v3741, %v3742
          %s3744 = sadd.s32 %s3545, 1
          %v3745 = vstv %s3744
          %vm3746 = vcmp.eq.s32.totalorder %v1788, %v3745
          %vm3747 = vcmp.eq.s32.totalorder %v1789, %v3745
          %vm3748 = vcmp.eq.s32.totalorder %v1790, %v3745
          %vm3749 = vcmp.eq.s32.totalorder %v1791, %v3745
          %vm3750 = vcmp.eq.s32.totalorder %v1792, %v3745
          %vm3751 = vcmp.eq.s32.totalorder %v1793, %v3745
          %vm3752 = vcmp.eq.s32.totalorder %v1794, %v3745
          %vm3753 = vcmp.eq.s32.totalorder %v1795, %v3745
          %vm3754 = vcmp.eq.s32.totalorder %v1796, %v3745
          %vm3755 = vcmp.eq.s32.totalorder %v1797, %v3745
          %vm3756 = vcmp.eq.s32.totalorder %v1798, %v3745
          %vm3757 = vcmp.eq.s32.totalorder %v1799, %v3745
          %vm3758 = vcmp.eq.s32.totalorder %v1800, %v3745
          %vm3759 = vcmp.eq.s32.totalorder %v1801, %v3745
          %vm3760 = vcmp.eq.s32.totalorder %v1802, %v3745
          %vm3761 = vcmp.eq.s32.totalorder %v1803, %v3745
          %v3762 = vsel %vm3746, 1, 0
          %v3763 = vsel %vm3747, 1, 0
          %v3764 = vsel %vm3748, 1, 0
          %v3765 = vsel %vm3749, 1, 0
          %v3766 = vsel %vm3750, 1, 0
          %v3767 = vsel %vm3751, 1, 0
          %v3768 = vsel %vm3752, 1, 0
          %v3769 = vsel %vm3753, 1, 0
          %v3770 = vsel %vm3754, 1, 0
          %v3771 = vsel %vm3755, 1, 0
          %v3772 = vsel %vm3756, 1, 0
          %v3773 = vsel %vm3757, 1, 0
          %v3774 = vsel %vm3758, 1, 0
          %v3775 = vsel %vm3759, 1, 0
          %v3776 = vsel %vm3760, 1, 0
          %v3777 = vsel %vm3761, 1, 0
          %v3778 = vcvt.s32.f32 %v3762
          %v3779 = vcvt.s32.f32 %v3763
          %v3780 = vcvt.s32.f32 %v3764
          %v3781 = vcvt.s32.f32 %v3765
          %v3782 = vcvt.s32.f32 %v3766
          %v3783 = vcvt.s32.f32 %v3767
          %v3784 = vcvt.s32.f32 %v3768
          %v3785 = vcvt.s32.f32 %v3769
          %v3786 = vcvt.s32.f32 %v3770
          %v3787 = vcvt.s32.f32 %v3771
          %v3788 = vcvt.s32.f32 %v3772
          %v3789 = vcvt.s32.f32 %v3773
          %v3790 = vcvt.s32.f32 %v3774
          %v3791 = vcvt.s32.f32 %v3775
          %v3792 = vcvt.s32.f32 %v3776
          %v3793 = vcvt.s32.f32 %v3777
          %v3794 = vsub.f32 %v3778, 1.0
          %v3795 = vsub.f32 %v3779, 1.0
          %v3796 = vsub.f32 %v3780, 1.0
          %v3797 = vsub.f32 %v3781, 1.0
          %v3798 = vsub.f32 %v3782, 1.0
          %v3799 = vsub.f32 %v3783, 1.0
          %v3800 = vsub.f32 %v3784, 1.0
          %v3801 = vsub.f32 %v3785, 1.0
          %v3802 = vsub.f32 %v3786, 1.0
          %v3803 = vsub.f32 %v3787, 1.0
          %v3804 = vsub.f32 %v3788, 1.0
          %v3805 = vsub.f32 %v3789, 1.0
          %v3806 = vsub.f32 %v3790, 1.0
          %v3807 = vsub.f32 %v3791, 1.0
          %v3808 = vsub.f32 %v3792, 1.0
          %v3809 = vsub.f32 %v3793, 1.0
          %v3810 = vmul.f32 %v3794, 1e+30
          %v3811 = vmul.f32 %v3795, 1e+30
          %v3812 = vmul.f32 %v3796, 1e+30
          %v3813 = vmul.f32 %v3797, 1e+30
          %v3814 = vmul.f32 %v3798, 1e+30
          %v3815 = vmul.f32 %v3799, 1e+30
          %v3816 = vmul.f32 %v3800, 1e+30
          %v3817 = vmul.f32 %v3801, 1e+30
          %v3818 = vmul.f32 %v3802, 1e+30
          %v3819 = vmul.f32 %v3803, 1e+30
          %v3820 = vmul.f32 %v3804, 1e+30
          %v3821 = vmul.f32 %v3805, 1e+30
          %v3822 = vmul.f32 %v3806, 1e+30
          %v3823 = vmul.f32 %v3807, 1e+30
          %v3824 = vmul.f32 %v3808, 1e+30
          %v3825 = vmul.f32 %v3809, 1e+30
          %3827 = vset.pattern.permute.xlu0 0
          %3828 = vperm.xlu0 %3827, %v3810
          %v3829 = vpop.permute.xlu0 %3828
          %3832 = vset.pattern.permute.xlu0 0
          %3833 = vperm.xlu0 %3832, %v3811
          %v3834 = vpop.permute.xlu0 %3833
          %3837 = vset.pattern.permute.xlu0 0
          %3838 = vperm.xlu0 %3837, %v3812
          %v3839 = vpop.permute.xlu0 %3838
          %3842 = vset.pattern.permute.xlu0 0
          %3843 = vperm.xlu0 %3842, %v3813
          %v3844 = vpop.permute.xlu0 %3843
          %3847 = vset.pattern.permute.xlu0 0
          %3848 = vperm.xlu0 %3847, %v3814
          %v3849 = vpop.permute.xlu0 %3848
          %3852 = vset.pattern.permute.xlu0 0
          %3853 = vperm.xlu0 %3852, %v3815
          %v3854 = vpop.permute.xlu0 %3853
          %3857 = vset.pattern.permute.xlu0 0
          %3858 = vperm.xlu0 %3857, %v3816
          %v3859 = vpop.permute.xlu0 %3858
          %3862 = vset.pattern.permute.xlu0 0
          %3863 = vperm.xlu0 %3862, %v3817
          %v3864 = vpop.permute.xlu0 %3863
          %3867 = vset.pattern.permute.xlu0 0
          %3868 = vperm.xlu0 %3867, %v3818
          %v3869 = vpop.permute.xlu0 %3868
          %3872 = vset.pattern.permute.xlu0 0
          %3873 = vperm.xlu0 %3872, %v3819
          %v3874 = vpop.permute.xlu0 %3873
          %3877 = vset.pattern.permute.xlu0 0
          %3878 = vperm.xlu0 %3877, %v3820
          %v3879 = vpop.permute.xlu0 %3878
          %3882 = vset.pattern.permute.xlu0 0
          %3883 = vperm.xlu0 %3882, %v3821
          %v3884 = vpop.permute.xlu0 %3883
          %3887 = vset.pattern.permute.xlu0 0
          %3888 = vperm.xlu0 %3887, %v3822
          %v3889 = vpop.permute.xlu0 %3888
          %3892 = vset.pattern.permute.xlu0 0
          %3893 = vperm.xlu0 %3892, %v3823
          %v3894 = vpop.permute.xlu0 %3893
          %3897 = vset.pattern.permute.xlu0 0
          %3898 = vperm.xlu0 %3897, %v3824
          %v3899 = vpop.permute.xlu0 %3898
          %3902 = vset.pattern.permute.xlu0 0
          %3903 = vperm.xlu0 %3902, %v3825
          %v3904 = vpop.permute.xlu0 %3903
          %v3906 = vadd.f32 %v1755, %v3829
          %v3907 = vadd.f32 %v1756, %v3834
          %v3908 = vadd.f32 %v1757, %v3839
          %v3909 = vadd.f32 %v1758, %v3844
          %v3910 = vadd.f32 %v1759, %v3849
          %v3911 = vadd.f32 %v1760, %v3854
          %v3912 = vadd.f32 %v1761, %v3859
          %v3913 = vadd.f32 %v1762, %v3864
          %v3914 = vadd.f32 %v1763, %v3869
          %v3915 = vadd.f32 %v1764, %v3874
          %v3916 = vadd.f32 %v1765, %v3879
          %v3917 = vadd.f32 %v1766, %v3884
          %v3918 = vadd.f32 %v1767, %v3889
          %v3919 = vadd.f32 %v1768, %v3894
          %v3920 = vadd.f32 %v1769, %v3899
          %v3921 = vadd.f32 %v1770, %v3904
          %v3922 = vmax.f32 %v3906, %v3910
          %v3923 = vmax.f32 %v3907, %v3911
          %v3924 = vmax.f32 %v3908, %v3912
          %v3925 = vmax.f32 %v3909, %v3913
          %v3926 = vmax.f32 %v3922, %v3914
          %v3927 = vmax.f32 %v3923, %v3915
          %v3928 = vmax.f32 %v3924, %v3916
          %v3929 = vmax.f32 %v3925, %v3917
          %v3930 = vmax.f32 %v3926, %v3918
          %v3931 = vmax.f32 %v3927, %v3919
          %v3932 = vmax.f32 %v3928, %v3920
          %v3933 = vmax.f32 %v3929, %v3921
          %v3934 = vmax.f32 %v3930, %v3931
          %v3935 = vmax.f32 %v3932, %v3933
          %v3936 = vmax.f32 %v3934, %v3935
          %v3937 = vrot.slane %v3936, 4
          %v3938 = vmax.f32 %v3936, %v3937
          %v3939 = vrot.slane %v3938, 2
          %v3940 = vmax.f32 %v3938, %v3939
          %v3941 = vrot.slane %v3940, 1
          %v3942 = vmax.f32 %v3940, %v3941
          %s3943 = sadd.s32 %s3545, 2
          %v3944 = vstv %s3943
          %vm3945 = vcmp.eq.s32.totalorder %v1788, %v3944
          %vm3946 = vcmp.eq.s32.totalorder %v1789, %v3944
          %vm3947 = vcmp.eq.s32.totalorder %v1790, %v3944
          %vm3948 = vcmp.eq.s32.totalorder %v1791, %v3944
          %vm3949 = vcmp.eq.s32.totalorder %v1792, %v3944
          %vm3950 = vcmp.eq.s32.totalorder %v1793, %v3944
          %vm3951 = vcmp.eq.s32.totalorder %v1794, %v3944
          %vm3952 = vcmp.eq.s32.totalorder %v1795, %v3944
          %vm3953 = vcmp.eq.s32.totalorder %v1796, %v3944
          %vm3954 = vcmp.eq.s32.totalorder %v1797, %v3944
          %vm3955 = vcmp.eq.s32.totalorder %v1798, %v3944
          %vm3956 = vcmp.eq.s32.totalorder %v1799, %v3944
          %vm3957 = vcmp.eq.s32.totalorder %v1800, %v3944
          %vm3958 = vcmp.eq.s32.totalorder %v1801, %v3944
          %vm3959 = vcmp.eq.s32.totalorder %v1802, %v3944
          %vm3960 = vcmp.eq.s32.totalorder %v1803, %v3944
          %v3961 = vsel %vm3945, 1, 0
          %v3962 = vsel %vm3946, 1, 0
          %v3963 = vsel %vm3947, 1, 0
          %v3964 = vsel %vm3948, 1, 0
          %v3965 = vsel %vm3949, 1, 0
          %v3966 = vsel %vm3950, 1, 0
          %v3967 = vsel %vm3951, 1, 0
          %v3968 = vsel %vm3952, 1, 0
          %v3969 = vsel %vm3953, 1, 0
          %v3970 = vsel %vm3954, 1, 0
          %v3971 = vsel %vm3955, 1, 0
          %v3972 = vsel %vm3956, 1, 0
          %v3973 = vsel %vm3957, 1, 0
          %v3974 = vsel %vm3958, 1, 0
          %v3975 = vsel %vm3959, 1, 0
          %v3976 = vsel %vm3960, 1, 0
          %v3977 = vcvt.s32.f32 %v3961
          %v3978 = vcvt.s32.f32 %v3962
          %v3979 = vcvt.s32.f32 %v3963
          %v3980 = vcvt.s32.f32 %v3964
          %v3981 = vcvt.s32.f32 %v3965
          %v3982 = vcvt.s32.f32 %v3966
          %v3983 = vcvt.s32.f32 %v3967
          %v3984 = vcvt.s32.f32 %v3968
          %v3985 = vcvt.s32.f32 %v3969
          %v3986 = vcvt.s32.f32 %v3970
          %v3987 = vcvt.s32.f32 %v3971
          %v3988 = vcvt.s32.f32 %v3972
          %v3989 = vcvt.s32.f32 %v3973
          %v3990 = vcvt.s32.f32 %v3974
          %v3991 = vcvt.s32.f32 %v3975
          %v3992 = vcvt.s32.f32 %v3976
          %v3993 = vsub.f32 %v3977, 1.0
          %v3994 = vsub.f32 %v3978, 1.0
          %v3995 = vsub.f32 %v3979, 1.0
          %v3996 = vsub.f32 %v3980, 1.0
          %v3997 = vsub.f32 %v3981, 1.0
          %v3998 = vsub.f32 %v3982, 1.0
          %v3999 = vsub.f32 %v3983, 1.0
          %v4000 = vsub.f32 %v3984, 1.0
          %v4001 = vsub.f32 %v3985, 1.0
          %v4002 = vsub.f32 %v3986, 1.0
          %v4003 = vsub.f32 %v3987, 1.0
          %v4004 = vsub.f32 %v3988, 1.0
          %v4005 = vsub.f32 %v3989, 1.0
          %v4006 = vsub.f32 %v3990, 1.0
          %v4007 = vsub.f32 %v3991, 1.0
          %v4008 = vsub.f32 %v3992, 1.0
          %v4009 = vmul.f32 %v3993, 1e+30
          %v4010 = vmul.f32 %v3994, 1e+30
          %v4011 = vmul.f32 %v3995, 1e+30
          %v4012 = vmul.f32 %v3996, 1e+30
          %v4013 = vmul.f32 %v3997, 1e+30
          %v4014 = vmul.f32 %v3998, 1e+30
          %v4015 = vmul.f32 %v3999, 1e+30
          %v4016 = vmul.f32 %v4000, 1e+30
          %v4017 = vmul.f32 %v4001, 1e+30
          %v4018 = vmul.f32 %v4002, 1e+30
          %v4019 = vmul.f32 %v4003, 1e+30
          %v4020 = vmul.f32 %v4004, 1e+30
          %v4021 = vmul.f32 %v4005, 1e+30
          %v4022 = vmul.f32 %v4006, 1e+30
          %v4023 = vmul.f32 %v4007, 1e+30
          %v4024 = vmul.f32 %v4008, 1e+30
          %4026 = vset.pattern.permute.xlu0 0
          %4027 = vperm.xlu0 %4026, %v4009
          %v4028 = vpop.permute.xlu0 %4027
          %4031 = vset.pattern.permute.xlu0 0
          %4032 = vperm.xlu0 %4031, %v4010
          %v4033 = vpop.permute.xlu0 %4032
          %4036 = vset.pattern.permute.xlu0 0
          %4037 = vperm.xlu0 %4036, %v4011
          %v4038 = vpop.permute.xlu0 %4037
          %4041 = vset.pattern.permute.xlu0 0
          %4042 = vperm.xlu0 %4041, %v4012
          %v4043 = vpop.permute.xlu0 %4042
          %4046 = vset.pattern.permute.xlu0 0
          %4047 = vperm.xlu0 %4046, %v4013
          %v4048 = vpop.permute.xlu0 %4047
          %4051 = vset.pattern.permute.xlu0 0
          %4052 = vperm.xlu0 %4051, %v4014
          %v4053 = vpop.permute.xlu0 %4052
          %4056 = vset.pattern.permute.xlu0 0
          %4057 = vperm.xlu0 %4056, %v4015
          %v4058 = vpop.permute.xlu0 %4057
          %4061 = vset.pattern.permute.xlu0 0
          %4062 = vperm.xlu0 %4061, %v4016
          %v4063 = vpop.permute.xlu0 %4062
          %4066 = vset.pattern.permute.xlu0 0
          %4067 = vperm.xlu0 %4066, %v4017
          %v4068 = vpop.permute.xlu0 %4067
          %4071 = vset.pattern.permute.xlu0 0
          %4072 = vperm.xlu0 %4071, %v4018
          %v4073 = vpop.permute.xlu0 %4072
          %4076 = vset.pattern.permute.xlu0 0
          %4077 = vperm.xlu0 %4076, %v4019
          %v4078 = vpop.permute.xlu0 %4077
          %4081 = vset.pattern.permute.xlu0 0
          %4082 = vperm.xlu0 %4081, %v4020
          %v4083 = vpop.permute.xlu0 %4082
          %4086 = vset.pattern.permute.xlu0 0
          %4087 = vperm.xlu0 %4086, %v4021
          %v4088 = vpop.permute.xlu0 %4087
          %4091 = vset.pattern.permute.xlu0 0
          %4092 = vperm.xlu0 %4091, %v4022
          %v4093 = vpop.permute.xlu0 %4092
          %4096 = vset.pattern.permute.xlu0 0
          %4097 = vperm.xlu0 %4096, %v4023
          %v4098 = vpop.permute.xlu0 %4097
          %4101 = vset.pattern.permute.xlu0 0
          %4102 = vperm.xlu0 %4101, %v4024
          %v4103 = vpop.permute.xlu0 %4102
          %v4105 = vadd.f32 %v1755, %v4028
          %v4106 = vadd.f32 %v1756, %v4033
          %v4107 = vadd.f32 %v1757, %v4038
          %v4108 = vadd.f32 %v1758, %v4043
          %v4109 = vadd.f32 %v1759, %v4048
          %v4110 = vadd.f32 %v1760, %v4053
          %v4111 = vadd.f32 %v1761, %v4058
          %v4112 = vadd.f32 %v1762, %v4063
          %v4113 = vadd.f32 %v1763, %v4068
          %v4114 = vadd.f32 %v1764, %v4073
          %v4115 = vadd.f32 %v1765, %v4078
          %v4116 = vadd.f32 %v1766, %v4083
          %v4117 = vadd.f32 %v1767, %v4088
          %v4118 = vadd.f32 %v1768, %v4093
          %v4119 = vadd.f32 %v1769, %v4098
          %v4120 = vadd.f32 %v1770, %v4103
          %v4121 = vmax.f32 %v4105, %v4109
          %v4122 = vmax.f32 %v4106, %v4110
          %v4123 = vmax.f32 %v4107, %v4111
          %v4124 = vmax.f32 %v4108, %v4112
          %v4125 = vmax.f32 %v4121, %v4113
          %v4126 = vmax.f32 %v4122, %v4114
          %v4127 = vmax.f32 %v4123, %v4115
          %v4128 = vmax.f32 %v4124, %v4116
          %v4129 = vmax.f32 %v4125, %v4117
          %v4130 = vmax.f32 %v4126, %v4118
          %v4131 = vmax.f32 %v4127, %v4119
          %v4132 = vmax.f32 %v4128, %v4120
          %v4133 = vmax.f32 %v4129, %v4130
          %v4134 = vmax.f32 %v4131, %v4132
          %v4135 = vmax.f32 %v4133, %v4134
          %v4136 = vrot.slane %v4135, 4
          %v4137 = vmax.f32 %v4135, %v4136
          %v4138 = vrot.slane %v4137, 2
          %v4139 = vmax.f32 %v4137, %v4138
          %v4140 = vrot.slane %v4139, 1
          %v4141 = vmax.f32 %v4139, %v4140
          %s4142 = sadd.s32 %s3545, 3
          %v4143 = vstv %s4142
          %vm4144 = vcmp.eq.s32.totalorder %v1788, %v4143
          %vm4145 = vcmp.eq.s32.totalorder %v1789, %v4143
          %vm4146 = vcmp.eq.s32.totalorder %v1790, %v4143
          %vm4147 = vcmp.eq.s32.totalorder %v1791, %v4143
          %vm4148 = vcmp.eq.s32.totalorder %v1792, %v4143
          %vm4149 = vcmp.eq.s32.totalorder %v1793, %v4143
          %vm4150 = vcmp.eq.s32.totalorder %v1794, %v4143
          %vm4151 = vcmp.eq.s32.totalorder %v1795, %v4143
          %vm4152 = vcmp.eq.s32.totalorder %v1796, %v4143
          %vm4153 = vcmp.eq.s32.totalorder %v1797, %v4143
          %vm4154 = vcmp.eq.s32.totalorder %v1798, %v4143
          %vm4155 = vcmp.eq.s32.totalorder %v1799, %v4143
          %vm4156 = vcmp.eq.s32.totalorder %v1800, %v4143
          %vm4157 = vcmp.eq.s32.totalorder %v1801, %v4143
          %vm4158 = vcmp.eq.s32.totalorder %v1802, %v4143
          %vm4159 = vcmp.eq.s32.totalorder %v1803, %v4143
          %v4160 = vsel %vm4144, 1, 0
          %v4161 = vsel %vm4145, 1, 0
          %v4162 = vsel %vm4146, 1, 0
          %v4163 = vsel %vm4147, 1, 0
          %v4164 = vsel %vm4148, 1, 0
          %v4165 = vsel %vm4149, 1, 0
          %v4166 = vsel %vm4150, 1, 0
          %v4167 = vsel %vm4151, 1, 0
          %v4168 = vsel %vm4152, 1, 0
          %v4169 = vsel %vm4153, 1, 0
          %v4170 = vsel %vm4154, 1, 0
          %v4171 = vsel %vm4155, 1, 0
          %v4172 = vsel %vm4156, 1, 0
          %v4173 = vsel %vm4157, 1, 0
          %v4174 = vsel %vm4158, 1, 0
          %v4175 = vsel %vm4159, 1, 0
          %v4176 = vcvt.s32.f32 %v4160
          %v4177 = vcvt.s32.f32 %v4161
          %v4178 = vcvt.s32.f32 %v4162
          %v4179 = vcvt.s32.f32 %v4163
          %v4180 = vcvt.s32.f32 %v4164
          %v4181 = vcvt.s32.f32 %v4165
          %v4182 = vcvt.s32.f32 %v4166
          %v4183 = vcvt.s32.f32 %v4167
          %v4184 = vcvt.s32.f32 %v4168
          %v4185 = vcvt.s32.f32 %v4169
          %v4186 = vcvt.s32.f32 %v4170
          %v4187 = vcvt.s32.f32 %v4171
          %v4188 = vcvt.s32.f32 %v4172
          %v4189 = vcvt.s32.f32 %v4173
          %v4190 = vcvt.s32.f32 %v4174
          %v4191 = vcvt.s32.f32 %v4175
          %v4192 = vsub.f32 %v4176, 1.0
          %v4193 = vsub.f32 %v4177, 1.0
          %v4194 = vsub.f32 %v4178, 1.0
          %v4195 = vsub.f32 %v4179, 1.0
          %v4196 = vsub.f32 %v4180, 1.0
          %v4197 = vsub.f32 %v4181, 1.0
          %v4198 = vsub.f32 %v4182, 1.0
          %v4199 = vsub.f32 %v4183, 1.0
          %v4200 = vsub.f32 %v4184, 1.0
          %v4201 = vsub.f32 %v4185, 1.0
          %v4202 = vsub.f32 %v4186, 1.0
          %v4203 = vsub.f32 %v4187, 1.0
          %v4204 = vsub.f32 %v4188, 1.0
          %v4205 = vsub.f32 %v4189, 1.0
          %v4206 = vsub.f32 %v4190, 1.0
          %v4207 = vsub.f32 %v4191, 1.0
          %v4208 = vmul.f32 %v4192, 1e+30
          %v4209 = vmul.f32 %v4193, 1e+30
          %v4210 = vmul.f32 %v4194, 1e+30
          %v4211 = vmul.f32 %v4195, 1e+30
          %v4212 = vmul.f32 %v4196, 1e+30
          %v4213 = vmul.f32 %v4197, 1e+30
          %v4214 = vmul.f32 %v4198, 1e+30
          %v4215 = vmul.f32 %v4199, 1e+30
          %v4216 = vmul.f32 %v4200, 1e+30
          %v4217 = vmul.f32 %v4201, 1e+30
          %v4218 = vmul.f32 %v4202, 1e+30
          %v4219 = vmul.f32 %v4203, 1e+30
          %v4220 = vmul.f32 %v4204, 1e+30
          %v4221 = vmul.f32 %v4205, 1e+30
          %v4222 = vmul.f32 %v4206, 1e+30
          %v4223 = vmul.f32 %v4207, 1e+30
          %4225 = vset.pattern.permute.xlu0 0
          %4226 = vperm.xlu0 %4225, %v4208
          %v4227 = vpop.permute.xlu0 %4226
          %4230 = vset.pattern.permute.xlu0 0
          %4231 = vperm.xlu0 %4230, %v4209
          %v4232 = vpop.permute.xlu0 %4231
          %4235 = vset.pattern.permute.xlu0 0
          %4236 = vperm.xlu0 %4235, %v4210
          %v4237 = vpop.permute.xlu0 %4236
          %4240 = vset.pattern.permute.xlu0 0
          %4241 = vperm.xlu0 %4240, %v4211
          %v4242 = vpop.permute.xlu0 %4241
          %4245 = vset.pattern.permute.xlu0 0
          %4246 = vperm.xlu0 %4245, %v4212
          %v4247 = vpop.permute.xlu0 %4246
          %4250 = vset.pattern.permute.xlu0 0
          %4251 = vperm.xlu0 %4250, %v4213
          %v4252 = vpop.permute.xlu0 %4251
          %4255 = vset.pattern.permute.xlu0 0
          %4256 = vperm.xlu0 %4255, %v4214
          %v4257 = vpop.permute.xlu0 %4256
          %4260 = vset.pattern.permute.xlu0 0
          %4261 = vperm.xlu0 %4260, %v4215
          %v4262 = vpop.permute.xlu0 %4261
          %4265 = vset.pattern.permute.xlu0 0
          %4266 = vperm.xlu0 %4265, %v4216
          %v4267 = vpop.permute.xlu0 %4266
          %4270 = vset.pattern.permute.xlu0 0
          %4271 = vperm.xlu0 %4270, %v4217
          %v4272 = vpop.permute.xlu0 %4271
          %4275 = vset.pattern.permute.xlu0 0
          %4276 = vperm.xlu0 %4275, %v4218
          %v4277 = vpop.permute.xlu0 %4276
          %4280 = vset.pattern.permute.xlu0 0
          %4281 = vperm.xlu0 %4280, %v4219
          %v4282 = vpop.permute.xlu0 %4281
          %4285 = vset.pattern.permute.xlu0 0
          %4286 = vperm.xlu0 %4285, %v4220
          %v4287 = vpop.permute.xlu0 %4286
          %4290 = vset.pattern.permute.xlu0 0
          %4291 = vperm.xlu0 %4290, %v4221
          %v4292 = vpop.permute.xlu0 %4291
          %4295 = vset.pattern.permute.xlu0 0
          %4296 = vperm.xlu0 %4295, %v4222
          %v4297 = vpop.permute.xlu0 %4296
          %4300 = vset.pattern.permute.xlu0 0
          %4301 = vperm.xlu0 %4300, %v4223
          %v4302 = vpop.permute.xlu0 %4301
          %v4304 = vadd.f32 %v1755, %v4227
          %v4305 = vadd.f32 %v1756, %v4232
          %v4306 = vadd.f32 %v1757, %v4237
          %v4307 = vadd.f32 %v1758, %v4242
          %v4308 = vadd.f32 %v1759, %v4247
          %v4309 = vadd.f32 %v1760, %v4252
          %v4310 = vadd.f32 %v1761, %v4257
          %v4311 = vadd.f32 %v1762, %v4262
          %v4312 = vadd.f32 %v1763, %v4267
          %v4313 = vadd.f32 %v1764, %v4272
          %v4314 = vadd.f32 %v1765, %v4277
          %v4315 = vadd.f32 %v1766, %v4282
          %v4316 = vadd.f32 %v1767, %v4287
          %v4317 = vadd.f32 %v1768, %v4292
          %v4318 = vadd.f32 %v1769, %v4297
          %v4319 = vadd.f32 %v1770, %v4302
          %v4320 = vmax.f32 %v4304, %v4308
          %v4321 = vmax.f32 %v4305, %v4309
          %v4322 = vmax.f32 %v4306, %v4310
          %v4323 = vmax.f32 %v4307, %v4311
          %v4324 = vmax.f32 %v4320, %v4312
          %v4325 = vmax.f32 %v4321, %v4313
          %v4326 = vmax.f32 %v4322, %v4314
          %v4327 = vmax.f32 %v4323, %v4315
          %v4328 = vmax.f32 %v4324, %v4316
          %v4329 = vmax.f32 %v4325, %v4317
          %v4330 = vmax.f32 %v4326, %v4318
          %v4331 = vmax.f32 %v4327, %v4319
          %v4332 = vmax.f32 %v4328, %v4329
          %v4333 = vmax.f32 %v4330, %v4331
          %v4334 = vmax.f32 %v4332, %v4333
          %v4335 = vrot.slane %v4334, 4
          %v4336 = vmax.f32 %v4334, %v4335
          %v4337 = vrot.slane %v4336, 2
          %v4338 = vmax.f32 %v4336, %v4337
          %v4339 = vrot.slane %v4338, 1
          %v4340 = vmax.f32 %v4338, %v4339
          %s4341 = sadd.s32 %s3545, 4
          %v4342 = vstv %s4341
          %vm4343 = vcmp.eq.s32.totalorder %v1788, %v4342
          %vm4344 = vcmp.eq.s32.totalorder %v1789, %v4342
          %vm4345 = vcmp.eq.s32.totalorder %v1790, %v4342
          %vm4346 = vcmp.eq.s32.totalorder %v1791, %v4342
          %vm4347 = vcmp.eq.s32.totalorder %v1792, %v4342
          %vm4348 = vcmp.eq.s32.totalorder %v1793, %v4342
          %vm4349 = vcmp.eq.s32.totalorder %v1794, %v4342
          %vm4350 = vcmp.eq.s32.totalorder %v1795, %v4342
          %vm4351 = vcmp.eq.s32.totalorder %v1796, %v4342
          %vm4352 = vcmp.eq.s32.totalorder %v1797, %v4342
          %vm4353 = vcmp.eq.s32.totalorder %v1798, %v4342
          %vm4354 = vcmp.eq.s32.totalorder %v1799, %v4342
          %vm4355 = vcmp.eq.s32.totalorder %v1800, %v4342
          %vm4356 = vcmp.eq.s32.totalorder %v1801, %v4342
          %vm4357 = vcmp.eq.s32.totalorder %v1802, %v4342
          %vm4358 = vcmp.eq.s32.totalorder %v1803, %v4342
          %v4359 = vsel %vm4343, 1, 0
          %v4360 = vsel %vm4344, 1, 0
          %v4361 = vsel %vm4345, 1, 0
          %v4362 = vsel %vm4346, 1, 0
          %v4363 = vsel %vm4347, 1, 0
          %v4364 = vsel %vm4348, 1, 0
          %v4365 = vsel %vm4349, 1, 0
          %v4366 = vsel %vm4350, 1, 0
          %v4367 = vsel %vm4351, 1, 0
          %v4368 = vsel %vm4352, 1, 0
          %v4369 = vsel %vm4353, 1, 0
          %v4370 = vsel %vm4354, 1, 0
          %v4371 = vsel %vm4355, 1, 0
          %v4372 = vsel %vm4356, 1, 0
          %v4373 = vsel %vm4357, 1, 0
          %v4374 = vsel %vm4358, 1, 0
          %v4375 = vcvt.s32.f32 %v4359
          %v4376 = vcvt.s32.f32 %v4360
          %v4377 = vcvt.s32.f32 %v4361
          %v4378 = vcvt.s32.f32 %v4362
          %v4379 = vcvt.s32.f32 %v4363
          %v4380 = vcvt.s32.f32 %v4364
          %v4381 = vcvt.s32.f32 %v4365
          %v4382 = vcvt.s32.f32 %v4366
          %v4383 = vcvt.s32.f32 %v4367
          %v4384 = vcvt.s32.f32 %v4368
          %v4385 = vcvt.s32.f32 %v4369
          %v4386 = vcvt.s32.f32 %v4370
          %v4387 = vcvt.s32.f32 %v4371
          %v4388 = vcvt.s32.f32 %v4372
          %v4389 = vcvt.s32.f32 %v4373
          %v4390 = vcvt.s32.f32 %v4374
          %v4391 = vsub.f32 %v4375, 1.0
          %v4392 = vsub.f32 %v4376, 1.0
          %v4393 = vsub.f32 %v4377, 1.0
          %v4394 = vsub.f32 %v4378, 1.0
          %v4395 = vsub.f32 %v4379, 1.0
          %v4396 = vsub.f32 %v4380, 1.0
          %v4397 = vsub.f32 %v4381, 1.0
          %v4398 = vsub.f32 %v4382, 1.0
          %v4399 = vsub.f32 %v4383, 1.0
          %v4400 = vsub.f32 %v4384, 1.0
          %v4401 = vsub.f32 %v4385, 1.0
          %v4402 = vsub.f32 %v4386, 1.0
          %v4403 = vsub.f32 %v4387, 1.0
          %v4404 = vsub.f32 %v4388, 1.0
          %v4405 = vsub.f32 %v4389, 1.0
          %v4406 = vsub.f32 %v4390, 1.0
          %v4407 = vmul.f32 %v4391, 1e+30
          %v4408 = vmul.f32 %v4392, 1e+30
          %v4409 = vmul.f32 %v4393, 1e+30
          %v4410 = vmul.f32 %v4394, 1e+30
          %v4411 = vmul.f32 %v4395, 1e+30
          %v4412 = vmul.f32 %v4396, 1e+30
          %v4413 = vmul.f32 %v4397, 1e+30
          %v4414 = vmul.f32 %v4398, 1e+30
          %v4415 = vmul.f32 %v4399, 1e+30
          %v4416 = vmul.f32 %v4400, 1e+30
          %v4417 = vmul.f32 %v4401, 1e+30
          %v4418 = vmul.f32 %v4402, 1e+30
          %v4419 = vmul.f32 %v4403, 1e+30
          %v4420 = vmul.f32 %v4404, 1e+30
          %v4421 = vmul.f32 %v4405, 1e+30
          %v4422 = vmul.f32 %v4406, 1e+30
          %4424 = vset.pattern.permute.xlu0 0
          %4425 = vperm.xlu0 %4424, %v4407
          %v4426 = vpop.permute.xlu0 %4425
          %4429 = vset.pattern.permute.xlu0 0
          %4430 = vperm.xlu0 %4429, %v4408
          %v4431 = vpop.permute.xlu0 %4430
          %4434 = vset.pattern.permute.xlu0 0
          %4435 = vperm.xlu0 %4434, %v4409
          %v4436 = vpop.permute.xlu0 %4435
          %4439 = vset.pattern.permute.xlu0 0
          %4440 = vperm.xlu0 %4439, %v4410
          %v4441 = vpop.permute.xlu0 %4440
          %4444 = vset.pattern.permute.xlu0 0
          %4445 = vperm.xlu0 %4444, %v4411
          %v4446 = vpop.permute.xlu0 %4445
          %4449 = vset.pattern.permute.xlu0 0
          %4450 = vperm.xlu0 %4449, %v4412
          %v4451 = vpop.permute.xlu0 %4450
          %4454 = vset.pattern.permute.xlu0 0
          %4455 = vperm.xlu0 %4454, %v4413
          %v4456 = vpop.permute.xlu0 %4455
          %4459 = vset.pattern.permute.xlu0 0
          %4460 = vperm.xlu0 %4459, %v4414
          %v4461 = vpop.permute.xlu0 %4460
          %4464 = vset.pattern.permute.xlu0 0
          %4465 = vperm.xlu0 %4464, %v4415
          %v4466 = vpop.permute.xlu0 %4465
          %4469 = vset.pattern.permute.xlu0 0
          %4470 = vperm.xlu0 %4469, %v4416
          %v4471 = vpop.permute.xlu0 %4470
          %4474 = vset.pattern.permute.xlu0 0
          %4475 = vperm.xlu0 %4474, %v4417
          %v4476 = vpop.permute.xlu0 %4475
          %4479 = vset.pattern.permute.xlu0 0
          %4480 = vperm.xlu0 %4479, %v4418
          %v4481 = vpop.permute.xlu0 %4480
          %4484 = vset.pattern.permute.xlu0 0
          %4485 = vperm.xlu0 %4484, %v4419
          %v4486 = vpop.permute.xlu0 %4485
          %4489 = vset.pattern.permute.xlu0 0
          %4490 = vperm.xlu0 %4489, %v4420
          %v4491 = vpop.permute.xlu0 %4490
          %4494 = vset.pattern.permute.xlu0 0
          %4495 = vperm.xlu0 %4494, %v4421
          %v4496 = vpop.permute.xlu0 %4495
          %4499 = vset.pattern.permute.xlu0 0
          %4500 = vperm.xlu0 %4499, %v4422
          %v4501 = vpop.permute.xlu0 %4500
          %v4503 = vadd.f32 %v1755, %v4426
          %v4504 = vadd.f32 %v1756, %v4431
          %v4505 = vadd.f32 %v1757, %v4436
          %v4506 = vadd.f32 %v1758, %v4441
          %v4507 = vadd.f32 %v1759, %v4446
          %v4508 = vadd.f32 %v1760, %v4451
          %v4509 = vadd.f32 %v1761, %v4456
          %v4510 = vadd.f32 %v1762, %v4461
          %v4511 = vadd.f32 %v1763, %v4466
          %v4512 = vadd.f32 %v1764, %v4471
          %v4513 = vadd.f32 %v1765, %v4476
          %v4514 = vadd.f32 %v1766, %v4481
          %v4515 = vadd.f32 %v1767, %v4486
          %v4516 = vadd.f32 %v1768, %v4491
          %v4517 = vadd.f32 %v1769, %v4496
          %v4518 = vadd.f32 %v1770, %v4501
          %v4519 = vmax.f32 %v4503, %v4507
          %v4520 = vmax.f32 %v4504, %v4508
          %v4521 = vmax.f32 %v4505, %v4509
          %v4522 = vmax.f32 %v4506, %v4510
          %v4523 = vmax.f32 %v4519, %v4511
          %v4524 = vmax.f32 %v4520, %v4512
          %v4525 = vmax.f32 %v4521, %v4513
          %v4526 = vmax.f32 %v4522, %v4514
          %v4527 = vmax.f32 %v4523, %v4515
          %v4528 = vmax.f32 %v4524, %v4516
          %v4529 = vmax.f32 %v4525, %v4517
          %v4530 = vmax.f32 %v4526, %v4518
          %v4531 = vmax.f32 %v4527, %v4528
          %v4532 = vmax.f32 %v4529, %v4530
          %v4533 = vmax.f32 %v4531, %v4532
          %v4534 = vrot.slane %v4533, 4
          %v4535 = vmax.f32 %v4533, %v4534
          %v4536 = vrot.slane %v4535, 2
          %v4537 = vmax.f32 %v4535, %v4536
          %v4538 = vrot.slane %v4537, 1
          %v4539 = vmax.f32 %v4537, %v4538
          %s4540 = sadd.s32 %s3545, 5
          %v4541 = vstv %s4540
          %vm4542 = vcmp.eq.s32.totalorder %v1788, %v4541
          %vm4543 = vcmp.eq.s32.totalorder %v1789, %v4541
          %vm4544 = vcmp.eq.s32.totalorder %v1790, %v4541
          %vm4545 = vcmp.eq.s32.totalorder %v1791, %v4541
          %vm4546 = vcmp.eq.s32.totalorder %v1792, %v4541
          %vm4547 = vcmp.eq.s32.totalorder %v1793, %v4541
          %vm4548 = vcmp.eq.s32.totalorder %v1794, %v4541
          %vm4549 = vcmp.eq.s32.totalorder %v1795, %v4541
          %vm4550 = vcmp.eq.s32.totalorder %v1796, %v4541
          %vm4551 = vcmp.eq.s32.totalorder %v1797, %v4541
          %vm4552 = vcmp.eq.s32.totalorder %v1798, %v4541
          %vm4553 = vcmp.eq.s32.totalorder %v1799, %v4541
          %vm4554 = vcmp.eq.s32.totalorder %v1800, %v4541
          %vm4555 = vcmp.eq.s32.totalorder %v1801, %v4541
          %vm4556 = vcmp.eq.s32.totalorder %v1802, %v4541
          %vm4557 = vcmp.eq.s32.totalorder %v1803, %v4541
          %v4558 = vsel %vm4542, 1, 0
          %v4559 = vsel %vm4543, 1, 0
          %v4560 = vsel %vm4544, 1, 0
          %v4561 = vsel %vm4545, 1, 0
          %v4562 = vsel %vm4546, 1, 0
          %v4563 = vsel %vm4547, 1, 0
          %v4564 = vsel %vm4548, 1, 0
          %v4565 = vsel %vm4549, 1, 0
          %v4566 = vsel %vm4550, 1, 0
          %v4567 = vsel %vm4551, 1, 0
          %v4568 = vsel %vm4552, 1, 0
          %v4569 = vsel %vm4553, 1, 0
          %v4570 = vsel %vm4554, 1, 0
          %v4571 = vsel %vm4555, 1, 0
          %v4572 = vsel %vm4556, 1, 0
          %v4573 = vsel %vm4557, 1, 0
          %v4574 = vcvt.s32.f32 %v4558
          %v4575 = vcvt.s32.f32 %v4559
          %v4576 = vcvt.s32.f32 %v4560
          %v4577 = vcvt.s32.f32 %v4561
          %v4578 = vcvt.s32.f32 %v4562
          %v4579 = vcvt.s32.f32 %v4563
          %v4580 = vcvt.s32.f32 %v4564
          %v4581 = vcvt.s32.f32 %v4565
          %v4582 = vcvt.s32.f32 %v4566
          %v4583 = vcvt.s32.f32 %v4567
          %v4584 = vcvt.s32.f32 %v4568
          %v4585 = vcvt.s32.f32 %v4569
          %v4586 = vcvt.s32.f32 %v4570
          %v4587 = vcvt.s32.f32 %v4571
          %v4588 = vcvt.s32.f32 %v4572
          %v4589 = vcvt.s32.f32 %v4573
          %v4590 = vsub.f32 %v4574, 1.0
          %v4591 = vsub.f32 %v4575, 1.0
          %v4592 = vsub.f32 %v4576, 1.0
          %v4593 = vsub.f32 %v4577, 1.0
          %v4594 = vsub.f32 %v4578, 1.0
          %v4595 = vsub.f32 %v4579, 1.0
          %v4596 = vsub.f32 %v4580, 1.0
          %v4597 = vsub.f32 %v4581, 1.0
          %v4598 = vsub.f32 %v4582, 1.0
          %v4599 = vsub.f32 %v4583, 1.0
          %v4600 = vsub.f32 %v4584, 1.0
          %v4601 = vsub.f32 %v4585, 1.0
          %v4602 = vsub.f32 %v4586, 1.0
          %v4603 = vsub.f32 %v4587, 1.0
          %v4604 = vsub.f32 %v4588, 1.0
          %v4605 = vsub.f32 %v4589, 1.0
          %v4606 = vmul.f32 %v4590, 1e+30
          %v4607 = vmul.f32 %v4591, 1e+30
          %v4608 = vmul.f32 %v4592, 1e+30
          %v4609 = vmul.f32 %v4593, 1e+30
          %v4610 = vmul.f32 %v4594, 1e+30
          %v4611 = vmul.f32 %v4595, 1e+30
          %v4612 = vmul.f32 %v4596, 1e+30
          %v4613 = vmul.f32 %v4597, 1e+30
          %v4614 = vmul.f32 %v4598, 1e+30
          %v4615 = vmul.f32 %v4599, 1e+30
          %v4616 = vmul.f32 %v4600, 1e+30
          %v4617 = vmul.f32 %v4601, 1e+30
          %v4618 = vmul.f32 %v4602, 1e+30
          %v4619 = vmul.f32 %v4603, 1e+30
          %v4620 = vmul.f32 %v4604, 1e+30
          %v4621 = vmul.f32 %v4605, 1e+30
          %4623 = vset.pattern.permute.xlu0 0
          %4624 = vperm.xlu0 %4623, %v4606
          %v4625 = vpop.permute.xlu0 %4624
          %4628 = vset.pattern.permute.xlu0 0
          %4629 = vperm.xlu0 %4628, %v4607
          %v4630 = vpop.permute.xlu0 %4629
          %4633 = vset.pattern.permute.xlu0 0
          %4634 = vperm.xlu0 %4633, %v4608
          %v4635 = vpop.permute.xlu0 %4634
          %4638 = vset.pattern.permute.xlu0 0
          %4639 = vperm.xlu0 %4638, %v4609
          %v4640 = vpop.permute.xlu0 %4639
          %4643 = vset.pattern.permute.xlu0 0
          %4644 = vperm.xlu0 %4643, %v4610
          %v4645 = vpop.permute.xlu0 %4644
          %4648 = vset.pattern.permute.xlu0 0
          %4649 = vperm.xlu0 %4648, %v4611
          %v4650 = vpop.permute.xlu0 %4649
          %4653 = vset.pattern.permute.xlu0 0
          %4654 = vperm.xlu0 %4653, %v4612
          %v4655 = vpop.permute.xlu0 %4654
          %4658 = vset.pattern.permute.xlu0 0
          %4659 = vperm.xlu0 %4658, %v4613
          %v4660 = vpop.permute.xlu0 %4659
          %4663 = vset.pattern.permute.xlu0 0
          %4664 = vperm.xlu0 %4663, %v4614
          %v4665 = vpop.permute.xlu0 %4664
          %4668 = vset.pattern.permute.xlu0 0
          %4669 = vperm.xlu0 %4668, %v4615
          %v4670 = vpop.permute.xlu0 %4669
          %4673 = vset.pattern.permute.xlu0 0
          %4674 = vperm.xlu0 %4673, %v4616
          %v4675 = vpop.permute.xlu0 %4674
          %4678 = vset.pattern.permute.xlu0 0
          %4679 = vperm.xlu0 %4678, %v4617
          %v4680 = vpop.permute.xlu0 %4679
          %4683 = vset.pattern.permute.xlu0 0
          %4684 = vperm.xlu0 %4683, %v4618
          %v4685 = vpop.permute.xlu0 %4684
          %4688 = vset.pattern.permute.xlu0 0
          %4689 = vperm.xlu0 %4688, %v4619
          %v4690 = vpop.permute.xlu0 %4689
          %4693 = vset.pattern.permute.xlu0 0
          %4694 = vperm.xlu0 %4693, %v4620
          %v4695 = vpop.permute.xlu0 %4694
          %4698 = vset.pattern.permute.xlu0 0
          %4699 = vperm.xlu0 %4698, %v4621
          %v4700 = vpop.permute.xlu0 %4699
          %v4702 = vadd.f32 %v1755, %v4625
          %v4703 = vadd.f32 %v1756, %v4630
          %v4704 = vadd.f32 %v1757, %v4635
          %v4705 = vadd.f32 %v1758, %v4640
          %v4706 = vadd.f32 %v1759, %v4645
          %v4707 = vadd.f32 %v1760, %v4650
          %v4708 = vadd.f32 %v1761, %v4655
          %v4709 = vadd.f32 %v1762, %v4660
          %v4710 = vadd.f32 %v1763, %v4665
          %v4711 = vadd.f32 %v1764, %v4670
          %v4712 = vadd.f32 %v1765, %v4675
          %v4713 = vadd.f32 %v1766, %v4680
          %v4714 = vadd.f32 %v1767, %v4685
          %v4715 = vadd.f32 %v1768, %v4690
          %v4716 = vadd.f32 %v1769, %v4695
          %v4717 = vadd.f32 %v1770, %v4700
          %v4718 = vmax.f32 %v4702, %v4706
          %v4719 = vmax.f32 %v4703, %v4707
          %v4720 = vmax.f32 %v4704, %v4708
          %v4721 = vmax.f32 %v4705, %v4709
          %v4722 = vmax.f32 %v4718, %v4710
          %v4723 = vmax.f32 %v4719, %v4711
          %v4724 = vmax.f32 %v4720, %v4712
          %v4725 = vmax.f32 %v4721, %v4713
          %v4726 = vmax.f32 %v4722, %v4714
          %v4727 = vmax.f32 %v4723, %v4715
          %v4728 = vmax.f32 %v4724, %v4716
          %v4729 = vmax.f32 %v4725, %v4717
          %v4730 = vmax.f32 %v4726, %v4727
          %v4731 = vmax.f32 %v4728, %v4729
          %v4732 = vmax.f32 %v4730, %v4731
          %v4733 = vrot.slane %v4732, 4
          %v4734 = vmax.f32 %v4732, %v4733
          %v4735 = vrot.slane %v4734, 2
          %v4736 = vmax.f32 %v4734, %v4735
          %v4737 = vrot.slane %v4736, 1
          %v4738 = vmax.f32 %v4736, %v4737
          %s4739 = sadd.s32 %s3545, 6
          %v4740 = vstv %s4739
          %vm4741 = vcmp.eq.s32.totalorder %v1788, %v4740
          %vm4742 = vcmp.eq.s32.totalorder %v1789, %v4740
          %vm4743 = vcmp.eq.s32.totalorder %v1790, %v4740
          %vm4744 = vcmp.eq.s32.totalorder %v1791, %v4740
          %vm4745 = vcmp.eq.s32.totalorder %v1792, %v4740
          %vm4746 = vcmp.eq.s32.totalorder %v1793, %v4740
          %vm4747 = vcmp.eq.s32.totalorder %v1794, %v4740
          %vm4748 = vcmp.eq.s32.totalorder %v1795, %v4740
          %vm4749 = vcmp.eq.s32.totalorder %v1796, %v4740
          %vm4750 = vcmp.eq.s32.totalorder %v1797, %v4740
          %vm4751 = vcmp.eq.s32.totalorder %v1798, %v4740
          %vm4752 = vcmp.eq.s32.totalorder %v1799, %v4740
          %vm4753 = vcmp.eq.s32.totalorder %v1800, %v4740
          %vm4754 = vcmp.eq.s32.totalorder %v1801, %v4740
          %vm4755 = vcmp.eq.s32.totalorder %v1802, %v4740
          %vm4756 = vcmp.eq.s32.totalorder %v1803, %v4740
          %v4757 = vsel %vm4741, 1, 0
          %v4758 = vsel %vm4742, 1, 0
          %v4759 = vsel %vm4743, 1, 0
          %v4760 = vsel %vm4744, 1, 0
          %v4761 = vsel %vm4745, 1, 0
          %v4762 = vsel %vm4746, 1, 0
          %v4763 = vsel %vm4747, 1, 0
          %v4764 = vsel %vm4748, 1, 0
          %v4765 = vsel %vm4749, 1, 0
          %v4766 = vsel %vm4750, 1, 0
          %v4767 = vsel %vm4751, 1, 0
          %v4768 = vsel %vm4752, 1, 0
          %v4769 = vsel %vm4753, 1, 0
          %v4770 = vsel %vm4754, 1, 0
          %v4771 = vsel %vm4755, 1, 0
          %v4772 = vsel %vm4756, 1, 0
          %v4773 = vcvt.s32.f32 %v4757
          %v4774 = vcvt.s32.f32 %v4758
          %v4775 = vcvt.s32.f32 %v4759
          %v4776 = vcvt.s32.f32 %v4760
          %v4777 = vcvt.s32.f32 %v4761
          %v4778 = vcvt.s32.f32 %v4762
          %v4779 = vcvt.s32.f32 %v4763
          %v4780 = vcvt.s32.f32 %v4764
          %v4781 = vcvt.s32.f32 %v4765
          %v4782 = vcvt.s32.f32 %v4766
          %v4783 = vcvt.s32.f32 %v4767
          %v4784 = vcvt.s32.f32 %v4768
          %v4785 = vcvt.s32.f32 %v4769
          %v4786 = vcvt.s32.f32 %v4770
          %v4787 = vcvt.s32.f32 %v4771
          %v4788 = vcvt.s32.f32 %v4772
          %v4789 = vsub.f32 %v4773, 1.0
          %v4790 = vsub.f32 %v4774, 1.0
          %v4791 = vsub.f32 %v4775, 1.0
          %v4792 = vsub.f32 %v4776, 1.0
          %v4793 = vsub.f32 %v4777, 1.0
          %v4794 = vsub.f32 %v4778, 1.0
          %v4795 = vsub.f32 %v4779, 1.0
          %v4796 = vsub.f32 %v4780, 1.0
          %v4797 = vsub.f32 %v4781, 1.0
          %v4798 = vsub.f32 %v4782, 1.0
          %v4799 = vsub.f32 %v4783, 1.0
          %v4800 = vsub.f32 %v4784, 1.0
          %v4801 = vsub.f32 %v4785, 1.0
          %v4802 = vsub.f32 %v4786, 1.0
          %v4803 = vsub.f32 %v4787, 1.0
          %v4804 = vsub.f32 %v4788, 1.0
          %v4805 = vmul.f32 %v4789, 1e+30
          %v4806 = vmul.f32 %v4790, 1e+30
          %v4807 = vmul.f32 %v4791, 1e+30
          %v4808 = vmul.f32 %v4792, 1e+30
          %v4809 = vmul.f32 %v4793, 1e+30
          %v4810 = vmul.f32 %v4794, 1e+30
          %v4811 = vmul.f32 %v4795, 1e+30
          %v4812 = vmul.f32 %v4796, 1e+30
          %v4813 = vmul.f32 %v4797, 1e+30
          %v4814 = vmul.f32 %v4798, 1e+30
          %v4815 = vmul.f32 %v4799, 1e+30
          %v4816 = vmul.f32 %v4800, 1e+30
          %v4817 = vmul.f32 %v4801, 1e+30
          %v4818 = vmul.f32 %v4802, 1e+30
          %v4819 = vmul.f32 %v4803, 1e+30
          %v4820 = vmul.f32 %v4804, 1e+30
          %4822 = vset.pattern.permute.xlu0 0
          %4823 = vperm.xlu0 %4822, %v4805
          %v4824 = vpop.permute.xlu0 %4823
          %4827 = vset.pattern.permute.xlu0 0
          %4828 = vperm.xlu0 %4827, %v4806
          %v4829 = vpop.permute.xlu0 %4828
          %4832 = vset.pattern.permute.xlu0 0
          %4833 = vperm.xlu0 %4832, %v4807
          %v4834 = vpop.permute.xlu0 %4833
          %4837 = vset.pattern.permute.xlu0 0
          %4838 = vperm.xlu0 %4837, %v4808
          %v4839 = vpop.permute.xlu0 %4838
          %4842 = vset.pattern.permute.xlu0 0
          %4843 = vperm.xlu0 %4842, %v4809
          %v4844 = vpop.permute.xlu0 %4843
          %4847 = vset.pattern.permute.xlu0 0
          %4848 = vperm.xlu0 %4847, %v4810
          %v4849 = vpop.permute.xlu0 %4848
          %4852 = vset.pattern.permute.xlu0 0
          %4853 = vperm.xlu0 %4852, %v4811
          %v4854 = vpop.permute.xlu0 %4853
          %4857 = vset.pattern.permute.xlu0 0
          %4858 = vperm.xlu0 %4857, %v4812
          %v4859 = vpop.permute.xlu0 %4858
          %4862 = vset.pattern.permute.xlu0 0
          %4863 = vperm.xlu0 %4862, %v4813
          %v4864 = vpop.permute.xlu0 %4863
          %4867 = vset.pattern.permute.xlu0 0
          %4868 = vperm.xlu0 %4867, %v4814
          %v4869 = vpop.permute.xlu0 %4868
          %4872 = vset.pattern.permute.xlu0 0
          %4873 = vperm.xlu0 %4872, %v4815
          %v4874 = vpop.permute.xlu0 %4873
          %4877 = vset.pattern.permute.xlu0 0
          %4878 = vperm.xlu0 %4877, %v4816
          %v4879 = vpop.permute.xlu0 %4878
          %4882 = vset.pattern.permute.xlu0 0
          %4883 = vperm.xlu0 %4882, %v4817
          %v4884 = vpop.permute.xlu0 %4883
          %4887 = vset.pattern.permute.xlu0 0
          %4888 = vperm.xlu0 %4887, %v4818
          %v4889 = vpop.permute.xlu0 %4888
          %4892 = vset.pattern.permute.xlu0 0
          %4893 = vperm.xlu0 %4892, %v4819
          %v4894 = vpop.permute.xlu0 %4893
          %4897 = vset.pattern.permute.xlu0 0
          %4898 = vperm.xlu0 %4897, %v4820
          %v4899 = vpop.permute.xlu0 %4898
          %v4901 = vadd.f32 %v1755, %v4824
          %v4902 = vadd.f32 %v1756, %v4829
          %v4903 = vadd.f32 %v1757, %v4834
          %v4904 = vadd.f32 %v1758, %v4839
          %v4905 = vadd.f32 %v1759, %v4844
          %v4906 = vadd.f32 %v1760, %v4849
          %v4907 = vadd.f32 %v1761, %v4854
          %v4908 = vadd.f32 %v1762, %v4859
          %v4909 = vadd.f32 %v1763, %v4864
          %v4910 = vadd.f32 %v1764, %v4869
          %v4911 = vadd.f32 %v1765, %v4874
          %v4912 = vadd.f32 %v1766, %v4879
          %v4913 = vadd.f32 %v1767, %v4884
          %v4914 = vadd.f32 %v1768, %v4889
          %v4915 = vadd.f32 %v1769, %v4894
          %v4916 = vadd.f32 %v1770, %v4899
          %v4917 = vmax.f32 %v4901, %v4905
          %v4918 = vmax.f32 %v4902, %v4906
          %v4919 = vmax.f32 %v4903, %v4907
          %v4920 = vmax.f32 %v4904, %v4908
          %v4921 = vmax.f32 %v4917, %v4909
          %v4922 = vmax.f32 %v4918, %v4910
          %v4923 = vmax.f32 %v4919, %v4911
          %v4924 = vmax.f32 %v4920, %v4912
          %v4925 = vmax.f32 %v4921, %v4913
          %v4926 = vmax.f32 %v4922, %v4914
          %v4927 = vmax.f32 %v4923, %v4915
          %v4928 = vmax.f32 %v4924, %v4916
          %v4929 = vmax.f32 %v4925, %v4926
          %v4930 = vmax.f32 %v4927, %v4928
          %v4931 = vmax.f32 %v4929, %v4930
          %v4932 = vrot.slane %v4931, 4
          %v4933 = vmax.f32 %v4931, %v4932
          %v4934 = vrot.slane %v4933, 2
          %v4935 = vmax.f32 %v4933, %v4934
          %v4936 = vrot.slane %v4935, 1
          %v4937 = vmax.f32 %v4935, %v4936
          %s4938 = sadd.s32 %s3545, 7
          %v4939 = vstv %s4938
          %vm4940 = vcmp.eq.s32.totalorder %v1788, %v4939
          %vm4941 = vcmp.eq.s32.totalorder %v1789, %v4939
          %vm4942 = vcmp.eq.s32.totalorder %v1790, %v4939
          %vm4943 = vcmp.eq.s32.totalorder %v1791, %v4939
          %vm4944 = vcmp.eq.s32.totalorder %v1792, %v4939
          %vm4945 = vcmp.eq.s32.totalorder %v1793, %v4939
          %vm4946 = vcmp.eq.s32.totalorder %v1794, %v4939
          %vm4947 = vcmp.eq.s32.totalorder %v1795, %v4939
          %vm4948 = vcmp.eq.s32.totalorder %v1796, %v4939
          %vm4949 = vcmp.eq.s32.totalorder %v1797, %v4939
          %vm4950 = vcmp.eq.s32.totalorder %v1798, %v4939
          %vm4951 = vcmp.eq.s32.totalorder %v1799, %v4939
          %vm4952 = vcmp.eq.s32.totalorder %v1800, %v4939
          %vm4953 = vcmp.eq.s32.totalorder %v1801, %v4939
          %vm4954 = vcmp.eq.s32.totalorder %v1802, %v4939
          %vm4955 = vcmp.eq.s32.totalorder %v1803, %v4939
          %v4956 = vsel %vm4940, 1, 0
          %v4957 = vsel %vm4941, 1, 0
          %v4958 = vsel %vm4942, 1, 0
          %v4959 = vsel %vm4943, 1, 0
          %v4960 = vsel %vm4944, 1, 0
          %v4961 = vsel %vm4945, 1, 0
          %v4962 = vsel %vm4946, 1, 0
          %v4963 = vsel %vm4947, 1, 0
          %v4964 = vsel %vm4948, 1, 0
          %v4965 = vsel %vm4949, 1, 0
          %v4966 = vsel %vm4950, 1, 0
          %v4967 = vsel %vm4951, 1, 0
          %v4968 = vsel %vm4952, 1, 0
          %v4969 = vsel %vm4953, 1, 0
          %v4970 = vsel %vm4954, 1, 0
          %v4971 = vsel %vm4955, 1, 0
          %v4972 = vcvt.s32.f32 %v4956
          %v4973 = vcvt.s32.f32 %v4957
          %v4974 = vcvt.s32.f32 %v4958
          %v4975 = vcvt.s32.f32 %v4959
          %v4976 = vcvt.s32.f32 %v4960
          %v4977 = vcvt.s32.f32 %v4961
          %v4978 = vcvt.s32.f32 %v4962
          %v4979 = vcvt.s32.f32 %v4963
          %v4980 = vcvt.s32.f32 %v4964
          %v4981 = vcvt.s32.f32 %v4965
          %v4982 = vcvt.s32.f32 %v4966
          %v4983 = vcvt.s32.f32 %v4967
          %v4984 = vcvt.s32.f32 %v4968
          %v4985 = vcvt.s32.f32 %v4969
          %v4986 = vcvt.s32.f32 %v4970
          %v4987 = vcvt.s32.f32 %v4971
          %v4988 = vsub.f32 %v4972, 1.0
          %v4989 = vsub.f32 %v4973, 1.0
          %v4990 = vsub.f32 %v4974, 1.0
          %v4991 = vsub.f32 %v4975, 1.0
          %v4992 = vsub.f32 %v4976, 1.0
          %v4993 = vsub.f32 %v4977, 1.0
          %v4994 = vsub.f32 %v4978, 1.0
          %v4995 = vsub.f32 %v4979, 1.0
          %v4996 = vsub.f32 %v4980, 1.0
          %v4997 = vsub.f32 %v4981, 1.0
          %v4998 = vsub.f32 %v4982, 1.0
          %v4999 = vsub.f32 %v4983, 1.0
          %v5000 = vsub.f32 %v4984, 1.0
          %v5001 = vsub.f32 %v4985, 1.0
          %v5002 = vsub.f32 %v4986, 1.0
          %v5003 = vsub.f32 %v4987, 1.0
          %v5004 = vmul.f32 %v4988, 1e+30
          %v5005 = vmul.f32 %v4989, 1e+30
          %v5006 = vmul.f32 %v4990, 1e+30
          %v5007 = vmul.f32 %v4991, 1e+30
          %v5008 = vmul.f32 %v4992, 1e+30
          %v5009 = vmul.f32 %v4993, 1e+30
          %v5010 = vmul.f32 %v4994, 1e+30
          %v5011 = vmul.f32 %v4995, 1e+30
          %v5012 = vmul.f32 %v4996, 1e+30
          %v5013 = vmul.f32 %v4997, 1e+30
          %v5014 = vmul.f32 %v4998, 1e+30
          %v5015 = vmul.f32 %v4999, 1e+30
          %v5016 = vmul.f32 %v5000, 1e+30
          %v5017 = vmul.f32 %v5001, 1e+30
          %v5018 = vmul.f32 %v5002, 1e+30
          %v5019 = vmul.f32 %v5003, 1e+30
          %5021 = vset.pattern.permute.xlu0 0
          %5022 = vperm.xlu0 %5021, %v5004
          %v5023 = vpop.permute.xlu0 %5022
          %5026 = vset.pattern.permute.xlu0 0
          %5027 = vperm.xlu0 %5026, %v5005
          %v5028 = vpop.permute.xlu0 %5027
          %5031 = vset.pattern.permute.xlu0 0
          %5032 = vperm.xlu0 %5031, %v5006
          %v5033 = vpop.permute.xlu0 %5032
          %5036 = vset.pattern.permute.xlu0 0
          %5037 = vperm.xlu0 %5036, %v5007
          %v5038 = vpop.permute.xlu0 %5037
          %5041 = vset.pattern.permute.xlu0 0
          %5042 = vperm.xlu0 %5041, %v5008
          %v5043 = vpop.permute.xlu0 %5042
          %5046 = vset.pattern.permute.xlu0 0
          %5047 = vperm.xlu0 %5046, %v5009
          %v5048 = vpop.permute.xlu0 %5047
          %5051 = vset.pattern.permute.xlu0 0
          %5052 = vperm.xlu0 %5051, %v5010
          %v5053 = vpop.permute.xlu0 %5052
          %5056 = vset.pattern.permute.xlu0 0
          %5057 = vperm.xlu0 %5056, %v5011
          %v5058 = vpop.permute.xlu0 %5057
          %5061 = vset.pattern.permute.xlu0 0
          %5062 = vperm.xlu0 %5061, %v5012
          %v5063 = vpop.permute.xlu0 %5062
          %5066 = vset.pattern.permute.xlu0 0
          %5067 = vperm.xlu0 %5066, %v5013
          %v5068 = vpop.permute.xlu0 %5067
          %5071 = vset.pattern.permute.xlu0 0
          %5072 = vperm.xlu0 %5071, %v5014
          %v5073 = vpop.permute.xlu0 %5072
          %5076 = vset.pattern.permute.xlu0 0
          %5077 = vperm.xlu0 %5076, %v5015
          %v5078 = vpop.permute.xlu0 %5077
          %5081 = vset.pattern.permute.xlu0 0
          %5082 = vperm.xlu0 %5081, %v5016
          %v5083 = vpop.permute.xlu0 %5082
          %5086 = vset.pattern.permute.xlu0 0
          %5087 = vperm.xlu0 %5086, %v5017
          %v5088 = vpop.permute.xlu0 %5087
          %5091 = vset.pattern.permute.xlu0 0
          %5092 = vperm.xlu0 %5091, %v5018
          %v5093 = vpop.permute.xlu0 %5092
          %5096 = vset.pattern.permute.xlu0 0
          %5097 = vperm.xlu0 %5096, %v5019
          %v5098 = vpop.permute.xlu0 %5097
          %v5100 = vadd.f32 %v1755, %v5023
          %v5101 = vadd.f32 %v1756, %v5028
          %v5102 = vadd.f32 %v1757, %v5033
          %v5103 = vadd.f32 %v1758, %v5038
          %v5104 = vadd.f32 %v1759, %v5043
          %v5105 = vadd.f32 %v1760, %v5048
          %v5106 = vadd.f32 %v1761, %v5053
          %v5107 = vadd.f32 %v1762, %v5058
          %v5108 = vadd.f32 %v1763, %v5063
          %v5109 = vadd.f32 %v1764, %v5068
          %v5110 = vadd.f32 %v1765, %v5073
          %v5111 = vadd.f32 %v1766, %v5078
          %v5112 = vadd.f32 %v1767, %v5083
          %v5113 = vadd.f32 %v1768, %v5088
          %v5114 = vadd.f32 %v1769, %v5093
          %v5115 = vadd.f32 %v1770, %v5098
          %v5116 = vmax.f32 %v5100, %v5104
          %v5117 = vmax.f32 %v5101, %v5105
          %v5118 = vmax.f32 %v5102, %v5106
          %v5119 = vmax.f32 %v5103, %v5107
          %v5120 = vmax.f32 %v5116, %v5108
          %v5121 = vmax.f32 %v5117, %v5109
          %v5122 = vmax.f32 %v5118, %v5110
          %v5123 = vmax.f32 %v5119, %v5111
          %v5124 = vmax.f32 %v5120, %v5112
          %v5125 = vmax.f32 %v5121, %v5113
          %v5126 = vmax.f32 %v5122, %v5114
          %v5127 = vmax.f32 %v5123, %v5115
          %v5128 = vmax.f32 %v5124, %v5125
          %v5129 = vmax.f32 %v5126, %v5127
          %v5130 = vmax.f32 %v5128, %v5129
          %v5131 = vrot.slane %v5130, 4
          %v5132 = vmax.f32 %v5130, %v5131
          %v5133 = vrot.slane %v5132, 2
          %v5134 = vmax.f32 %v5132, %v5133
          %v5135 = vrot.slane %v5134, 1
          %v5136 = vmax.f32 %v5134, %v5135
          %vm5137 = vcmask 1040384
          %v5138 = vsel %vm5137, %v3743, %v3942
          %vm5139 = vcmask 1041408
          %v5140 = vsel %vm5139, %v5138, %v4141
          %vm5141 = vcmask 1042432
          %v5142 = vsel %vm5141, %v5140, %v4340
          %vm5143 = vcmask 1043456
          %v5144 = vsel %vm5143, %v5142, %v4539
          %vm5145 = vcmask 1044480
          %v5146 = vsel %vm5145, %v5144, %v4738
          %vm5147 = vcmask 1045504
          %v5148 = vsel %vm5147, %v5146, %v4937
          %vm5149 = vcmask 1046528
          %v5150 = vsel %vm5149, %v5148, %v5136
          %s5151 = scalar_lea.vmem [#allocation3], %s3545
          %v5152 = vld [vmem:[%s5151] sm:$0xff]
          %v5153 = vmax.f32 %v5152, %v5150
          %5154 = vst [vmem:[%s5151] sm:$0xff] %v5153
        $region120: #{tpu_custom_call.1} parent=103 // loop_footer
          %s3543 = sadd.s32 1, %s3539
        $region121: #{tpu_custom_call.1} parent=103 // loop_footer_branch
          %3538 = sbr.rel target = $region117
        $region122: #{tpu_custom_call.1} parent=103 // loop_exit
          _
        %p5155 = scmp.eq.s32.totalorder %s33, 1
        // Predicated region
        $region123: #{tpu_custom_call.1} parent=103 // pred_check
          %p5156 = pneg %p5155
        $region124: #{tpu_custom_call.1} parent=103 // pred_check_branch
          %5158 = sbr.rel (%p5156) target = $region126
        $region125: #{tpu_custom_call.1} parent=103 // pred_region
          %v5159 = vlaneseq
          %v5160 = vand.u32 %v5159, 127
          %vm5161 = vcmp.ge.s32.totalorder %v5160, 96
          %vm5162 = vcmp.lt.s32.totalorder %v5160, 128
          %vm5163 = vmand %vm5161, %vm5162
          %v5164 = vld [vmem:[%s0] sm:$0xff]
          %v5165 = vld [vmem:[%s0 + $0x8] sm:$0xff]
          %v5166 = vld [vmem:[%s15] sm:$0xff]
          %v5167 = vld [vmem:[%s15 + $0x8] sm:$0xff]
          %v5168 = vld [vmem:[%s15 + $0x10] sm:$0xff]
          %v5169 = vld [vmem:[%s15 + $0x18] sm:$0xff]
          %v5170 = vld [vmem:[%s6] sm:$0xff]
          %v5171 = vld [vmem:[%s6 + $0x8] sm:$0xff]
          %v5172 = vld [vmem:[#allocation2] sm:$0xff]
          %v5173 = vld [vmem:[#allocation2 + $0x8] sm:$0xff]
          %5175 = vset.pattern.permute.xlu0 0
          %5176 = vperm.xlu0 %5175, %v5170
          %v5177 = vpop.permute.xlu0 %5176
          %5180 = vset.pattern.permute.xlu0 0
          %5181 = vperm.xlu0 %5180, %v5171
          %v5182 = vpop.permute.xlu0 %5181
          %v5184 = vsel %vm5163, %v5177, 1.0
          %v5185 = vsel %vm5163, %v5182, 1.0
          %v5186 = vmul.f32 %v5172, %v5184
          %v5187 = vmul.f32 %v5173, %v5185
          %v5188 = vld [vmem:[%s16] sm:$0xff]
          %v5189 = vld [vmem:[%s16 + $0x8] sm:$0xff]
          %v5190 = vld [vmem:[%s16 + $0x10] sm:$0xff]
          %v5191 = vld [vmem:[%s16 + $0x18] sm:$0xff]
          %v5192 = vld [vmem:[%s16 + $0x20] sm:$0xff]
          %v5193 = vld [vmem:[%s16 + $0x28] sm:$0xff]
          %v5194 = vld [vmem:[%s16 + $0x30] sm:$0xff]
          %v5195 = vld [vmem:[%s16 + $0x38] sm:$0xff]
          %v5196 = vld [vmem:[%s16 + $0x40] sm:$0xff]
          %v5197 = vld [vmem:[%s16 + $0x48] sm:$0xff]
          %v5198 = vld [vmem:[%s16 + $0x50] sm:$0xff]
          %v5199 = vld [vmem:[%s16 + $0x58] sm:$0xff]
          %v5200 = vld [vmem:[%s16 + $0x60] sm:$0xff]
          %v5201 = vld [vmem:[%s16 + $0x68] sm:$0xff]
          %v5202 = vld [vmem:[%s16 + $0x70] sm:$0xff]
          %v5203 = vld [vmem:[%s16 + $0x78] sm:$0xff]
          %5204 = vmatprep.subr.mxu0 0.0
          %5205 = vmatpush1.msra.mxu0 %v5203
          %5206 = vmatprep.subr.mxu0 0.0
          %5207 = vmatpush1.msra.mxu0 %v5202
          %5208 = vmatprep.subr.mxu0 0.0
          %5209 = vmatpush1.msra.mxu0 %v5201
          %5210 = vmatprep.subr.mxu0 0.0
          %5211 = vmatpush1.msra.mxu0 %v5200
          %5212 = vmatprep.subr.mxu0 0.0
          %5213 = vmatpush1.msra.mxu0 %v5199
          %5214 = vmatprep.subr.mxu0 0.0
          %5215 = vmatpush1.msra.mxu0 %v5198
          %5216 = vmatprep.subr.mxu0 0.0
          %5217 = vmatpush1.msra.mxu0 %v5197
          %5218 = vmatprep.subr.mxu0 0.0
          %5219 = vmatpush1.msra.mxu0 %v5196
          %5220 = vmatprep.subr.mxu0 0.0
          %5221 = vmatpush1.msra.mxu0 %v5195
          %5222 = vmatprep.subr.mxu0 0.0
          %5223 = vmatpush1.msra.mxu0 %v5194
          %5224 = vmatprep.subr.mxu0 0.0
          %5225 = vmatpush1.msra.mxu0 %v5193
          %5226 = vmatprep.subr.mxu0 0.0
          %5227 = vmatpush1.msra.mxu0 %v5192
          %5228 = vmatprep.subr.mxu0 0.0
          %5229 = vmatpush1.msra.mxu0 %v5191
          %5230 = vmatprep.subr.mxu0 0.0
          %5231 = vmatpush1.msra.mxu0 %v5190
          %5232 = vmatprep.subr.mxu0 0.0
          %5233 = vmatpush1.msra.mxu0 %v5189
          %5234 = vmatprep.subr.mxu0 0.0
          %5235 = vmatpush1.msra.mxu0 %v5188
          %5236 = vmatprep.subr.mxu0 0.0
          %5237 = vmatpush2.msra.mxu0 0.0
          %5238 = vmatprep.subr.mxu0 0.0
          %5239 = vmatpush2.msra.mxu0 0.0
          %5240 = vmatprep.subr.mxu0 0.0
          %5241 = vmatpush2.msra.mxu0 0.0
          %5242 = vmatprep.subr.mxu0 0.0
          %5243 = vmatpush2.msra.mxu0 0.0
          %5244 = vmatprep.subr.mxu0 0.0
          %5245 = vmatpush2.msra.mxu0 0.0
          %5246 = vmatprep.subr.mxu0 0.0
          %5247 = vmatpush2.msra.mxu0 0.0
          %5248 = vmatprep.subr.mxu0 0.0
          %5249 = vmatpush2.msra.mxu0 0.0
          %5250 = vmatprep.subr.mxu0 0.0
          %5251 = vmatpush2.msra.mxu0 0.0
          %5252 = vmatprep.subr.mxu0 0.0
          %5253 = vmatpush2.msra.mxu0 0.0
          %5254 = vmatprep.subr.mxu0 0.0
          %5255 = vmatpush2.msra.mxu0 0.0
          %5256 = vmatprep.subr.mxu0 0.0
          %5257 = vmatpush2.msra.mxu0 0.0
          %5258 = vmatprep.subr.mxu0 0.0
          %5259 = vmatpush2.msra.mxu0 0.0
          %5260 = vmatprep.subr.mxu0 0.0
          %5261 = vmatpush2.msra.mxu0 0.0
          %5262 = vmatprep.subr.mxu0 0.0
          %5263 = vmatpush2.msra.mxu0 0.0
          %5264 = vmatprep.subr.mxu0 0.0
          %5265 = vmatpush2.msra.mxu0 0.0
          %5266 = vmatprep.subr.mxu0 0.0
          %5267 = vmatpush2.msra.mxu0 0.0
          %5268 = vmatprep.mubr.f32.mxu0 0.0
          %5269 = vmatmul.mubr.f32.gmra.mxu0 %v5186
          %v5270 = vpop.f32.mrf.mxu0
          %v5271 = vadd.f32 0.0, %v5270
          %v5272 = vpop.f32.mrf.mxu0
          %5273 = vmatprep.mubr.f32.mxu0 0.0
          %5274 = vmatmul.mubr.f32.gmra.mxu0 %v5187
          %v5275 = vpop.f32.mrf.mxu0
          %v5276 = vadd.f32 0.0, %v5275
          %v5277 = vpop.f32.mrf.mxu0
          %5278 = vdwg.mxu0
          %vm5279 = vcmask 261120
          %v5281 = vsel %vm5279, %v5164, 0
          %v5284 = vsel %vm5279, %v5165, 0
          %5286 = vmatprep.subr.mxu0 0.0
          %5287 = vmatpush1.msra.mxu0 0.0
          %5288 = vmatprep.subr.mxu0 0.0
          %5289 = vmatpush1.msra.mxu0 0.0
          %5290 = vmatprep.subr.mxu0 0.0
          %5291 = vmatpush1.msra.mxu0 0.0
          %5292 = vmatprep.subr.mxu0 0.0
          %5293 = vmatpush1.msra.mxu0 0.0
          %5294 = vmatprep.subr.mxu0 0.0
          %5295 = vmatpush1.msra.mxu0 0.0
          %5296 = vmatprep.subr.mxu0 0.0
          %5297 = vmatpush1.msra.mxu0 0.0
          %5298 = vmatprep.subr.mxu0 0.0
          %5299 = vmatpush1.msra.mxu0 0.0
          %5300 = vmatprep.subr.mxu0 0.0
          %5301 = vmatpush1.msra.mxu0 0.0
          %5302 = vmatprep.subr.mxu0 0.0
          %5303 = vmatpush1.msra.mxu0 0.0
          %5304 = vmatprep.subr.mxu0 0.0
          %5305 = vmatpush1.msra.mxu0 0.0
          %5306 = vmatprep.subr.mxu0 0.0
          %5307 = vmatpush1.msra.mxu0 0.0
          %5308 = vmatprep.subr.mxu0 0.0
          %5309 = vmatpush1.msra.mxu0 0.0
          %5310 = vmatprep.subr.mxu0 0.0
          %5311 = vmatpush1.msra.mxu0 %v5169
          %5312 = vmatprep.subr.mxu0 0.0
          %5313 = vmatpush1.msra.mxu0 %v5168
          %5314 = vmatprep.subr.mxu0 0.0
          %5315 = vmatpush1.msra.mxu0 %v5167
          %5316 = vmatprep.subr.mxu0 0.0
          %5317 = vmatpush1.msra.mxu0 %v5166
          %5318 = vmatprep.subr.mxu0 0.0
          %5319 = vmatpush2.msra.mxu0 0.0
          %5320 = vmatprep.subr.mxu0 0.0
          %5321 = vmatpush2.msra.mxu0 0.0
          %5322 = vmatprep.subr.mxu0 0.0
          %5323 = vmatpush2.msra.mxu0 0.0
          %5324 = vmatprep.subr.mxu0 0.0
          %5325 = vmatpush2.msra.mxu0 0.0
          %5326 = vmatprep.subr.mxu0 0.0
          %5327 = vmatpush2.msra.mxu0 0.0
          %5328 = vmatprep.subr.mxu0 0.0
          %5329 = vmatpush2.msra.mxu0 0.0
          %5330 = vmatprep.subr.mxu0 0.0
          %5331 = vmatpush2.msra.mxu0 0.0
          %5332 = vmatprep.subr.mxu0 0.0
          %5333 = vmatpush2.msra.mxu0 0.0
          %5334 = vmatprep.subr.mxu0 0.0
          %5335 = vmatpush2.msra.mxu0 0.0
          %5336 = vmatprep.subr.mxu0 0.0
          %5337 = vmatpush2.msra.mxu0 0.0
          %5338 = vmatprep.subr.mxu0 0.0
          %5339 = vmatpush2.msra.mxu0 0.0
          %5340 = vmatprep.subr.mxu0 0.0
          %5341 = vmatpush2.msra.mxu0 0.0
          %5342 = vmatprep.subr.mxu0 0.0
          %5343 = vmatpush2.msra.mxu0 0.0
          %5344 = vmatprep.subr.mxu0 0.0
          %5345 = vmatpush2.msra.mxu0 0.0
          %5346 = vmatprep.subr.mxu0 0.0
          %5347 = vmatpush2.msra.mxu0 0.0
          %5348 = vmatprep.subr.mxu0 0.0
          %5349 = vmatpush2.msra.mxu0 0.0
          %5350 = vmatprep.mubr.f32.mxu0 0.0
          %5351 = vmatmul.mubr.f32.gmra.mxu0 %v5281
          %v5352 = vpop.f32.mrf.mxu0
          %v5353 = vadd.f32 %v5271, %v5352
          %v5354 = vpop.f32.mrf.mxu0
          %5355 = vmatprep.mubr.f32.mxu0 0.0
          %5356 = vmatmul.mubr.f32.gmra.mxu0 %v5284
          %v5357 = vpop.f32.mrf.mxu0
          %v5358 = vadd.f32 %v5276, %v5357
          %v5359 = vpop.f32.mrf.mxu0
          %5360 = vdwg.mxu0
          %v5361 = vld [vmem:[%s5] sm:$0xff]
          %v5362 = vld [vmem:[%s5 + $0x8] sm:$0xff]
          %vm5363 = vcmp.gt.f32.partialorder %v5361, 0.5
          %vm5364 = vcmp.gt.f32.partialorder %v5362, 0.5
          %v5365 = vld [vmem:[#allocation3] sm:$0xff]
          %v5366 = vld [vmem:[#allocation3 + $0x8] sm:$0xff]
          %v5367 = vsel %vm5363, 1, 0
          %v5368 = vsel %vm5364, 1, 0
          %5369 = vset.pattern.permute.xlu0 0
          %5370 = vperm.xlu0 %5369, %v5367
          %v5371 = vpop.permute.xlu0 %5370
          %5372 = vset.pattern.permute.xlu0 0
          %5373 = vperm.xlu0 %5372, %v5368
          %v5374 = vpop.permute.xlu0 %5373
          %vm5375 = vcmp.eq.s32.totalorder %v5371, 1
          %vm5376 = vcmp.eq.s32.totalorder %v5374, 1
          %v5377 = vsel %vm5375, %v5365, 0.0
          %v5378 = vsel %vm5376, %v5366, 0.0
          %v5379 = vld [vmem:[%s17] sm:$0xff]
          %v5380 = vld [vmem:[%s17 + $0x8] sm:$0xff]
          %v5381 = vld [vmem:[%s17 + $0x10] sm:$0xff]
          %v5382 = vld [vmem:[%s17 + $0x18] sm:$0xff]
          %v5383 = vld [vmem:[%s17 + $0x20] sm:$0xff]
          %v5384 = vld [vmem:[%s17 + $0x28] sm:$0xff]
          %v5385 = vld [vmem:[%s17 + $0x30] sm:$0xff]
          %v5386 = vld [vmem:[%s17 + $0x38] sm:$0xff]
          %v5387 = vld [vmem:[%s17 + $0x40] sm:$0xff]
          %v5388 = vld [vmem:[%s17 + $0x48] sm:$0xff]
          %v5389 = vld [vmem:[%s17 + $0x50] sm:$0xff]
          %v5390 = vld [vmem:[%s17 + $0x58] sm:$0xff]
          %v5391 = vld [vmem:[%s17 + $0x60] sm:$0xff]
          %v5392 = vld [vmem:[%s17 + $0x68] sm:$0xff]
          %v5393 = vld [vmem:[%s17 + $0x70] sm:$0xff]
          %v5394 = vld [vmem:[%s17 + $0x78] sm:$0xff]
          %5395 = vmatprep.subr.mxu0 0.0
          %5396 = vmatpush1.msra.mxu0 %v5394
          %5397 = vmatprep.subr.mxu0 0.0
          %5398 = vmatpush1.msra.mxu0 %v5393
          %5399 = vmatprep.subr.mxu0 0.0
          %5400 = vmatpush1.msra.mxu0 %v5392
          %5401 = vmatprep.subr.mxu0 0.0
          %5402 = vmatpush1.msra.mxu0 %v5391
          %5403 = vmatprep.subr.mxu0 0.0
          %5404 = vmatpush1.msra.mxu0 %v5390
          %5405 = vmatprep.subr.mxu0 0.0
          %5406 = vmatpush1.msra.mxu0 %v5389
          %5407 = vmatprep.subr.mxu0 0.0
          %5408 = vmatpush1.msra.mxu0 %v5388
          %5409 = vmatprep.subr.mxu0 0.0
          %5410 = vmatpush1.msra.mxu0 %v5387
          %5411 = vmatprep.subr.mxu0 0.0
          %5412 = vmatpush1.msra.mxu0 %v5386
          %5413 = vmatprep.subr.mxu0 0.0
          %5414 = vmatpush1.msra.mxu0 %v5385
          %5415 = vmatprep.subr.mxu0 0.0
          %5416 = vmatpush1.msra.mxu0 %v5384
          %5417 = vmatprep.subr.mxu0 0.0
          %5418 = vmatpush1.msra.mxu0 %v5383
          %5419 = vmatprep.subr.mxu0 0.0
          %5420 = vmatpush1.msra.mxu0 %v5382
          %5421 = vmatprep.subr.mxu0 0.0
          %5422 = vmatpush1.msra.mxu0 %v5381
          %5423 = vmatprep.subr.mxu0 0.0
          %5424 = vmatpush1.msra.mxu0 %v5380
          %5425 = vmatprep.subr.mxu0 0.0
          %5426 = vmatpush1.msra.mxu0 %v5379
          %5427 = vmatprep.subr.mxu0 0.0
          %5428 = vmatpush2.msra.mxu0 0.0
          %5429 = vmatprep.subr.mxu0 0.0
          %5430 = vmatpush2.msra.mxu0 0.0
          %5431 = vmatprep.subr.mxu0 0.0
          %5432 = vmatpush2.msra.mxu0 0.0
          %5433 = vmatprep.subr.mxu0 0.0
          %5434 = vmatpush2.msra.mxu0 0.0
          %5435 = vmatprep.subr.mxu0 0.0
          %5436 = vmatpush2.msra.mxu0 0.0
          %5437 = vmatprep.subr.mxu0 0.0
          %5438 = vmatpush2.msra.mxu0 0.0
          %5439 = vmatprep.subr.mxu0 0.0
          %5440 = vmatpush2.msra.mxu0 0.0
          %5441 = vmatprep.subr.mxu0 0.0
          %5442 = vmatpush2.msra.mxu0 0.0
          %5443 = vmatprep.subr.mxu0 0.0
          %5444 = vmatpush2.msra.mxu0 0.0
          %5445 = vmatprep.subr.mxu0 0.0
          %5446 = vmatpush2.msra.mxu0 0.0
          %5447 = vmatprep.subr.mxu0 0.0
          %5448 = vmatpush2.msra.mxu0 0.0
          %5449 = vmatprep.subr.mxu0 0.0
          %5450 = vmatpush2.msra.mxu0 0.0
          %5451 = vmatprep.subr.mxu0 0.0
          %5452 = vmatpush2.msra.mxu0 0.0
          %5453 = vmatprep.subr.mxu0 0.0
          %5454 = vmatpush2.msra.mxu0 0.0
          %5455 = vmatprep.subr.mxu0 0.0
          %5456 = vmatpush2.msra.mxu0 0.0
          %5457 = vmatprep.subr.mxu0 0.0
          %5458 = vmatpush2.msra.mxu0 0.0
          %5459 = vmatprep.mubr.f32.mxu0 0.0
          %5460 = vmatmul.mubr.f32.gmra.mxu0 %v5377
          %v5461 = vpop.f32.mrf.mxu0
          %v5462 = vadd.f32 0.0, %v5461
          %v5463 = vpop.f32.mrf.mxu0
          %5464 = vmatprep.mubr.f32.mxu0 0.0
          %5465 = vmatmul.mubr.f32.gmra.mxu0 %v5378
          %v5466 = vpop.f32.mrf.mxu0
          %v5467 = vadd.f32 0.0, %v5466
          %v5468 = vpop.f32.mrf.mxu0
          %5469 = vdwg.mxu0
          %v5470 = vadd.f32 %v5353, %v5462
          %v5471 = vadd.f32 %v5358, %v5467
          %v5472 = vld [vmem:[%s6 + $0x10] sm:$0xff]
          %v5473 = vld [vmem:[%s6 + $0x18] sm:$0xff]
          %v5474 = vld [vmem:[#allocation2 + $0x10] sm:$0xff]
          %v5475 = vld [vmem:[#allocation2 + $0x18] sm:$0xff]
          %5477 = vset.pattern.permute.xlu0 0
          %5478 = vperm.xlu0 %5477, %v5472
          %v5479 = vpop.permute.xlu0 %5478
          %5482 = vset.pattern.permute.xlu0 0
          %5483 = vperm.xlu0 %5482, %v5473
          %v5484 = vpop.permute.xlu0 %5483
          %v5486 = vsel %vm5163, %v5479, 1.0
          %v5487 = vsel %vm5163, %v5484, 1.0
          %v5488 = vmul.f32 %v5474, %v5486
          %v5489 = vmul.f32 %v5475, %v5487
          %v5490 = vld [vmem:[%s18] sm:$0xff]
          %v5491 = vld [vmem:[%s18 + $0x8] sm:$0xff]
          %v5492 = vld [vmem:[%s18 + $0x10] sm:$0xff]
          %v5493 = vld [vmem:[%s18 + $0x18] sm:$0xff]
          %v5494 = vld [vmem:[%s18 + $0x20] sm:$0xff]
          %v5495 = vld [vmem:[%s18 + $0x28] sm:$0xff]
          %v5496 = vld [vmem:[%s18 + $0x30] sm:$0xff]
          %v5497 = vld [vmem:[%s18 + $0x38] sm:$0xff]
          %v5498 = vld [vmem:[%s18 + $0x40] sm:$0xff]
          %v5499 = vld [vmem:[%s18 + $0x48] sm:$0xff]
          %v5500 = vld [vmem:[%s18 + $0x50] sm:$0xff]
          %v5501 = vld [vmem:[%s18 + $0x58] sm:$0xff]
          %v5502 = vld [vmem:[%s18 + $0x60] sm:$0xff]
          %v5503 = vld [vmem:[%s18 + $0x68] sm:$0xff]
          %v5504 = vld [vmem:[%s18 + $0x70] sm:$0xff]
          %v5505 = vld [vmem:[%s18 + $0x78] sm:$0xff]
          %5506 = vmatprep.subr.mxu0 0.0
          %5507 = vmatpush1.msra.mxu0 %v5505
          %5508 = vmatprep.subr.mxu0 0.0
          %5509 = vmatpush1.msra.mxu0 %v5504
          %5510 = vmatprep.subr.mxu0 0.0
          %5511 = vmatpush1.msra.mxu0 %v5503
          %5512 = vmatprep.subr.mxu0 0.0
          %5513 = vmatpush1.msra.mxu0 %v5502
          %5514 = vmatprep.subr.mxu0 0.0
          %5515 = vmatpush1.msra.mxu0 %v5501
          %5516 = vmatprep.subr.mxu0 0.0
          %5517 = vmatpush1.msra.mxu0 %v5500
          %5518 = vmatprep.subr.mxu0 0.0
          %5519 = vmatpush1.msra.mxu0 %v5499
          %5520 = vmatprep.subr.mxu0 0.0
          %5521 = vmatpush1.msra.mxu0 %v5498
          %5522 = vmatprep.subr.mxu0 0.0
          %5523 = vmatpush1.msra.mxu0 %v5497
          %5524 = vmatprep.subr.mxu0 0.0
          %5525 = vmatpush1.msra.mxu0 %v5496
          %5526 = vmatprep.subr.mxu0 0.0
          %5527 = vmatpush1.msra.mxu0 %v5495
          %5528 = vmatprep.subr.mxu0 0.0
          %5529 = vmatpush1.msra.mxu0 %v5494
          %5530 = vmatprep.subr.mxu0 0.0
          %5531 = vmatpush1.msra.mxu0 %v5493
          %5532 = vmatprep.subr.mxu0 0.0
          %5533 = vmatpush1.msra.mxu0 %v5492
          %5534 = vmatprep.subr.mxu0 0.0
          %5535 = vmatpush1.msra.mxu0 %v5491
          %5536 = vmatprep.subr.mxu0 0.0
          %5537 = vmatpush1.msra.mxu0 %v5490
          %5538 = vmatprep.subr.mxu0 0.0
          %5539 = vmatpush2.msra.mxu0 0.0
          %5540 = vmatprep.subr.mxu0 0.0
          %5541 = vmatpush2.msra.mxu0 0.0
          %5542 = vmatprep.subr.mxu0 0.0
          %5543 = vmatpush2.msra.mxu0 0.0
          %5544 = vmatprep.subr.mxu0 0.0
          %5545 = vmatpush2.msra.mxu0 0.0
          %5546 = vmatprep.subr.mxu0 0.0
          %5547 = vmatpush2.msra.mxu0 0.0
          %5548 = vmatprep.subr.mxu0 0.0
          %5549 = vmatpush2.msra.mxu0 0.0
          %5550 = vmatprep.subr.mxu0 0.0
          %5551 = vmatpush2.msra.mxu0 0.0
          %5552 = vmatprep.subr.mxu0 0.0
          %5553 = vmatpush2.msra.mxu0 0.0
          %5554 = vmatprep.subr.mxu0 0.0
          %5555 = vmatpush2.msra.mxu0 0.0
          %5556 = vmatprep.subr.mxu0 0.0
          %5557 = vmatpush2.msra.mxu0 0.0
          %5558 = vmatprep.subr.mxu0 0.0
          %5559 = vmatpush2.msra.mxu0 0.0
          %5560 = vmatprep.subr.mxu0 0.0
          %5561 = vmatpush2.msra.mxu0 0.0
          %5562 = vmatprep.subr.mxu0 0.0
          %5563 = vmatpush2.msra.mxu0 0.0
          %5564 = vmatprep.subr.mxu0 0.0
          %5565 = vmatpush2.msra.mxu0 0.0
          %5566 = vmatprep.subr.mxu0 0.0
          %5567 = vmatpush2.msra.mxu0 0.0
          %5568 = vmatprep.subr.mxu0 0.0
          %5569 = vmatpush2.msra.mxu0 0.0
          %5570 = vmatprep.mubr.f32.mxu0 0.0
          %5571 = vmatmul.mubr.f32.gmra.mxu0 %v5488
          %v5572 = vpop.f32.mrf.mxu0
          %v5573 = vadd.f32 0.0, %v5572
          %v5574 = vpop.f32.mrf.mxu0
          %5575 = vmatprep.mubr.f32.mxu0 0.0
          %5576 = vmatmul.mubr.f32.gmra.mxu0 %v5489
          %v5577 = vpop.f32.mrf.mxu0
          %v5578 = vadd.f32 0.0, %v5577
          %v5579 = vpop.f32.mrf.mxu0
          %5580 = vdwg.mxu0
          %v5581 = vadd.f32 %v5470, %v5573
          %v5582 = vadd.f32 %v5471, %v5578
          %v5583 = vld [vmem:[%s5 + $0x10] sm:$0xff]
          %v5584 = vld [vmem:[%s5 + $0x18] sm:$0xff]
          %vm5585 = vcmp.gt.f32.partialorder %v5583, 0.5
          %vm5586 = vcmp.gt.f32.partialorder %v5584, 0.5
          %v5587 = vld [vmem:[#allocation3 + $0x10] sm:$0xff]
          %v5588 = vld [vmem:[#allocation3 + $0x18] sm:$0xff]
          %v5589 = vsel %vm5585, 1, 0
          %v5590 = vsel %vm5586, 1, 0
          %5591 = vset.pattern.permute.xlu0 0
          %5592 = vperm.xlu0 %5591, %v5589
          %v5593 = vpop.permute.xlu0 %5592
          %5594 = vset.pattern.permute.xlu0 0
          %5595 = vperm.xlu0 %5594, %v5590
          %v5596 = vpop.permute.xlu0 %5595
          %vm5597 = vcmp.eq.s32.totalorder %v5593, 1
          %vm5598 = vcmp.eq.s32.totalorder %v5596, 1
          %v5599 = vsel %vm5597, %v5587, 0.0
          %v5600 = vsel %vm5598, %v5588, 0.0
          %v5601 = vld [vmem:[%s19] sm:$0xff]
          %v5602 = vld [vmem:[%s19 + $0x8] sm:$0xff]
          %v5603 = vld [vmem:[%s19 + $0x10] sm:$0xff]
          %v5604 = vld [vmem:[%s19 + $0x18] sm:$0xff]
          %v5605 = vld [vmem:[%s19 + $0x20] sm:$0xff]
          %v5606 = vld [vmem:[%s19 + $0x28] sm:$0xff]
          %v5607 = vld [vmem:[%s19 + $0x30] sm:$0xff]
          %v5608 = vld [vmem:[%s19 + $0x38] sm:$0xff]
          %v5609 = vld [vmem:[%s19 + $0x40] sm:$0xff]
          %v5610 = vld [vmem:[%s19 + $0x48] sm:$0xff]
          %v5611 = vld [vmem:[%s19 + $0x50] sm:$0xff]
          %v5612 = vld [vmem:[%s19 + $0x58] sm:$0xff]
          %v5613 = vld [vmem:[%s19 + $0x60] sm:$0xff]
          %v5614 = vld [vmem:[%s19 + $0x68] sm:$0xff]
          %v5615 = vld [vmem:[%s19 + $0x70] sm:$0xff]
          %v5616 = vld [vmem:[%s19 + $0x78] sm:$0xff]
          %5617 = vmatprep.subr.mxu0 0.0
          %5618 = vmatpush1.msra.mxu0 %v5616
          %5619 = vmatprep.subr.mxu0 0.0
          %5620 = vmatpush1.msra.mxu0 %v5615
          %5621 = vmatprep.subr.mxu0 0.0
          %5622 = vmatpush1.msra.mxu0 %v5614
          %5623 = vmatprep.subr.mxu0 0.0
          %5624 = vmatpush1.msra.mxu0 %v5613
          %5625 = vmatprep.subr.mxu0 0.0
          %5626 = vmatpush1.msra.mxu0 %v5612
          %5627 = vmatprep.subr.mxu0 0.0
          %5628 = vmatpush1.msra.mxu0 %v5611
          %5629 = vmatprep.subr.mxu0 0.0
          %5630 = vmatpush1.msra.mxu0 %v5610
          %5631 = vmatprep.subr.mxu0 0.0
          %5632 = vmatpush1.msra.mxu0 %v5609
          %5633 = vmatprep.subr.mxu0 0.0
          %5634 = vmatpush1.msra.mxu0 %v5608
          %5635 = vmatprep.subr.mxu0 0.0
          %5636 = vmatpush1.msra.mxu0 %v5607
          %5637 = vmatprep.subr.mxu0 0.0
          %5638 = vmatpush1.msra.mxu0 %v5606
          %5639 = vmatprep.subr.mxu0 0.0
          %5640 = vmatpush1.msra.mxu0 %v5605
          %5641 = vmatprep.subr.mxu0 0.0
          %5642 = vmatpush1.msra.mxu0 %v5604
          %5643 = vmatprep.subr.mxu0 0.0
          %5644 = vmatpush1.msra.mxu0 %v5603
          %5645 = vmatprep.subr.mxu0 0.0
          %5646 = vmatpush1.msra.mxu0 %v5602
          %5647 = vmatprep.subr.mxu0 0.0
          %5648 = vmatpush1.msra.mxu0 %v5601
          %5649 = vmatprep.subr.mxu0 0.0
          %5650 = vmatpush2.msra.mxu0 0.0
          %5651 = vmatprep.subr.mxu0 0.0
          %5652 = vmatpush2.msra.mxu0 0.0
          %5653 = vmatprep.subr.mxu0 0.0
          %5654 = vmatpush2.msra.mxu0 0.0
          %5655 = vmatprep.subr.mxu0 0.0
          %5656 = vmatpush2.msra.mxu0 0.0
          %5657 = vmatprep.subr.mxu0 0.0
          %5658 = vmatpush2.msra.mxu0 0.0
          %5659 = vmatprep.subr.mxu0 0.0
          %5660 = vmatpush2.msra.mxu0 0.0
          %5661 = vmatprep.subr.mxu0 0.0
          %5662 = vmatpush2.msra.mxu0 0.0
          %5663 = vmatprep.subr.mxu0 0.0
          %5664 = vmatpush2.msra.mxu0 0.0
          %5665 = vmatprep.subr.mxu0 0.0
          %5666 = vmatpush2.msra.mxu0 0.0
          %5667 = vmatprep.subr.mxu0 0.0
          %5668 = vmatpush2.msra.mxu0 0.0
          %5669 = vmatprep.subr.mxu0 0.0
          %5670 = vmatpush2.msra.mxu0 0.0
          %5671 = vmatprep.subr.mxu0 0.0
          %5672 = vmatpush2.msra.mxu0 0.0
          %5673 = vmatprep.subr.mxu0 0.0
          %5674 = vmatpush2.msra.mxu0 0.0
          %5675 = vmatprep.subr.mxu0 0.0
          %5676 = vmatpush2.msra.mxu0 0.0
          %5677 = vmatprep.subr.mxu0 0.0
          %5678 = vmatpush2.msra.mxu0 0.0
          %5679 = vmatprep.subr.mxu0 0.0
          %5680 = vmatpush2.msra.mxu0 0.0
          %5681 = vmatprep.mubr.f32.mxu0 0.0
          %5682 = vmatmul.mubr.f32.gmra.mxu0 %v5599
          %v5683 = vpop.f32.mrf.mxu0
          %v5684 = vadd.f32 0.0, %v5683
          %v5685 = vpop.f32.mrf.mxu0
          %5686 = vmatprep.mubr.f32.mxu0 0.0
          %5687 = vmatmul.mubr.f32.gmra.mxu0 %v5600
          %v5688 = vpop.f32.mrf.mxu0
          %v5689 = vadd.f32 0.0, %v5688
          %v5690 = vpop.f32.mrf.mxu0
          %5691 = vdwg.mxu0
          %v5692 = vadd.f32 %v5581, %v5684
          %v5693 = vadd.f32 %v5582, %v5689
          %v5694 = vld [vmem:[%s20] sm:$0x1]
          %v5696 = vlaneseq
          %v5697 = vshrl.u32 %v5696, 7
          %v5698 = vsub.s32 0, %v5697
          %v5699 = vrot.slane %v5694, %v5698
          %v5701 = vadd.f32 %v5692, %v5699
          %v5702 = vadd.f32 %v5693, %v5699
          %5703 = vst [vmem:[#allocation4] sm:$0xff] %v5701
          %5704 = vst [vmem:[#allocation4 + $0x8] sm:$0xff] %v5702
        $region126: #{tpu_custom_call.1} parent=103 // pred_fallthru
          _
        // Predicated region
        $region127: #{tpu_custom_call.1} parent=103 // pred_check
          %p5705 = pneg %p507
        $region128: #{tpu_custom_call.1} parent=103 // pred_check_branch
          %5707 = sbr.rel (%p5705) target = $region130
        $region129: #{tpu_custom_call.1} parent=103 // pred_region
          %s5709 = ssub.s32 256, 256
          %5710 = vsyncadd [#allocation5], %s5709
          %s5711 = sshll.u32 [#allocation4], 4
          %s5712 = int_to_ptr.vmem [resolvable:$true] %s5711
          %5717 = dma.vmem_to_hbm [thread:$0]  %s5712, 256, %s21, [#allocation5], 128, 128, 8
        $region130: #{tpu_custom_call.1} parent=103 // pred_fallthru
          _
        // Predicated region
        $region131: #{tpu_custom_call.1} parent=103 // pred_check
          %p5718 = pneg %p507
        $region132: #{tpu_custom_call.1} parent=103 // pred_check_branch
          %5720 = sbr.rel (%p5718) target = $region134
        $region133: #{tpu_custom_call.1} parent=103 // pred_region
          %5721 = dma.done [#allocation5], 256
        $region134: #{tpu_custom_call.1} parent=103 // pred_fallthru
          _
      $region104: #{tpu_custom_call.1} parent=5 // pred_fallthru
        _
      %p5722 = scmp.le.s32.totalorder 2, %s28
      // Predicated region
      $region135: #{tpu_custom_call.1} parent=5 // pred_check
        %p5723 = pneg %p5722
      $region136: #{tpu_custom_call.1} parent=5 // pred_check_branch
        %5725 = sbr.rel (%p5723) target = $region138
      $region137: #{tpu_custom_call.1} parent=5 // pred_region
        %s5726 = ssub.s32 %s28, 2
      $region138: #{tpu_custom_call.1} parent=5 // pred_fallthru
        _
    $region6: #{tpu_custom_call.1} parent=1 // loop_footer
      %s32 = sadd.s32 1, %s28
    $region7: #{tpu_custom_call.1} parent=1 // loop_footer_branch
      %27 = sbr.rel target = $region3
    $region8: #{tpu_custom_call.1} parent=1 // loop_exit
      _
    %5727 = vsyncpa [#allocation5], 1
    %s5728 = scalar_lea.sflag [#allocation5], 1
    %5729 = vsyncpa %s5728, 1

</llo_original>
